<compile_context>
chip_gen: v7x
topology: tpu7x:2x2x1
jax: 0.10.0
libtpu: 0.0.40
codegen_flags: <defaults>
</compile_context>

<pallas_src>
import math

import jax
import jax.numpy as jnp
from jax.experimental import pallas as pl
from jax.experimental.pallas import tpu as pltpu


SIZES = [(784, 520), (520, 320), (320, 240), (240, 120), (120, 10)]
N_CLASSES = 10
IN_FEATURES = 784
LANE = 128
MAX_TILE_B = 1024                     # review: raise tile cap from 512
VMEM_LIMIT_BYTES = 48 * 1024 * 1024   # review: raise scoped VMEM limit


def _round_up(n, m):
    return (n + m - 1) // m * m


def _mlp_kernel(x_ref,
                w1_ref, b1_ref,
                w2_ref, b2_ref,
                w3_ref, b3_ref,
                w4_ref, b4_ref,
                w5_ref, b5_ref,
                o_ref):
    # One batch tile per grid step. x arrives f32; the bf16 cast is done here so the
    # wrapper never materializes a casted copy in HBM (the cast is VPU work hidden
    # under the layer-1 MXU matmul).
    h = x_ref[...].astype(jnp.bfloat16)                       # (tile_b, 784) bf16

    h = jnp.dot(h, w1_ref[...], preferred_element_type=jnp.float32) + b1_ref[...]
    h = jnp.maximum(h, 0.0).astype(jnp.bfloat16)

    h = jnp.dot(h, w2_ref[...], preferred_element_type=jnp.float32) + b2_ref[...]
    h = jnp.maximum(h, 0.0).astype(jnp.bfloat16)

    h = jnp.dot(h, w3_ref[...], preferred_element_type=jnp.float32) + b3_ref[...]
    h = jnp.maximum(h, 0.0).astype(jnp.bfloat16)

    h = jnp.dot(h, w4_ref[...], preferred_element_type=jnp.float32) + b4_ref[...]
    h = jnp.maximum(h, 0.0).astype(jnp.bfloat16)

    out = jnp.dot(h, w5_ref[...], preferred_element_type=jnp.float32) + b5_ref[...]
    o_ref[...] = out.astype(o_ref.dtype)                      # bf16, lane-dense (128)


@jax.jit
def mlp_forward(x, padded_params):
    """x: (..., 784)-reshapeable input (f32). padded_params: list of (W_bf16, b_f32)."""
    x2d = x.reshape(-1, IN_FEATURES)          # free reshape; stays f32, no copy/pad
    batch = x2d.shape[0]

    # Tile selection:
    #  - at least 2 grid steps (when batch allows) so the "parallel" axis can shard
    #    across both TensorCores on v7x,
    #  - tile rows capped at MAX_TILE_B and rounded to a multiple of 16 (bf16 packing),
    #  - grid uses cdiv -> partial last block instead of host-side batch padding.
    n_tiles_target = max(2, pl.cdiv(batch, MAX_TILE_B))
    tile_b = min(MAX_TILE_B, _round_up(pl.cdiv(batch, n_tiles_target), 16))
    grid = (pl.cdiv(batch, tile_b),)

    flat_params = []
    param_specs = []
    for w, b in padded_params:
        flat_params.extend([w, b])
        # Constant index_map -> fetched once, VMEM-resident across all grid steps.
        param_specs.append(pl.BlockSpec(w.shape, lambda i: (0, 0)))
        param_specs.append(pl.BlockSpec(b.shape, lambda i: (0, 0)))

    n_out_pad = padded_params[-1][0].shape[1]  # 128

    flops = 2 * batch * sum(w.shape[0] * w.shape[1] for w, _ in padded_params)
    bytes_accessed = (
        sum(w.size * w.dtype.itemsize + b.size * b.dtype.itemsize
            for w, b in padded_params)
        + batch * (IN_FEATURES * 4 + n_out_pad * 2))

    out = pl.pallas_call(
        _mlp_kernel,
        out_shape=jax.ShapeDtypeStruct((batch, n_out_pad), jnp.bfloat16),
        grid=grid,
        in_specs=[pl.BlockSpec((tile_b, IN_FEATURES), lambda i: (i, 0))] + param_specs,
        out_specs=pl.BlockSpec((tile_b, n_out_pad), lambda i: (i, 0)),
        compiler_params=pltpu.CompilerParams(
            dimension_semantics=("parallel",),
            vmem_limit_bytes=VMEM_LIMIT_BYTES,
        ),
        cost_estimate=pl.CostEstimate(
            flops=flops, transcendentals=0, bytes_accessed=bytes_accessed),
    )(x2d, *flat_params)

    # Slice away the lane padding of the 10-wide logits; upcast to f32 for consumers.
    return out[:, :N_CLASSES].astype(jnp.float32)


def init_params(key):
    """f32 params mirroring torch.nn.Linear default init (uniform +-1/sqrt(fan_in))."""
    params = []
    for fan_in, fan_out in SIZES:
        key, kw, kb = jax.random.split(key, 3)
        bound = 1.0 / math.sqrt(fan_in)
        # Stored as (in, out): transpose of the PyTorch (out, in) weight.
        w = jax.random.uniform(kw, (fan_in, fan_out), jnp.float32, -bound, bound)
        b = jax.random.uniform(kb, (fan_out,), jnp.float32, -bound, bound)
        params.append((w, b))
    return params


def pad_params(params_f32):
    """Zero-pad feature widths to multiples of 128; weights -> bf16, biases stay f32."""
    padded = []
    prev_out_pad = None
    for idx, (w, b) in enumerate(params_f32):
        fan_in, fan_out = w.shape
        in_pad = fan_in if idx == 0 else prev_out_pad   # keep K=784 unpadded (review)
        out_pad = _round_up(fan_out, LANE)
        wp = jnp.zeros((in_pad, out_pad), jnp.float32).at[:fan_in, :fan_out].set(w)
        bp = jnp.zeros((1, out_pad), jnp.float32).at[0, :fan_out].set(b)
        padded.append((wp.astype(jnp.bfloat16), bp))
        prev_out_pad = out_pad
    return padded


def mlp_reference_f32(x, params_f32):
    """Plain-JAX f32 reference matching the PyTorch module exactly."""
    h = x.reshape(-1, IN_FEATURES)
    for i, (w, b) in enumerate(params_f32):
        h = h @ w + b
        if i < len(params_f32) - 1:
            h = jnp.maximum(h, 0.0)
    return h


def mlp_reference_bf16(x, padded_params):
    """Plain-JAX reference with the same bf16/f32-accumulate arithmetic as the kernel."""
    h = x.reshape(-1, IN_FEATURES).astype(jnp.bfloat16)
    for i, (w, b) in enumerate(padded_params):
        h = jnp.dot(h, w, preferred_element_type=jnp.float32) + b
        if i < len(padded_params) - 1:
            h = jnp.maximum(h, 0.0).astype(jnp.bfloat16)
    # Kernel stores bf16 logits; mirror that rounding before comparing.
    return h[:, :N_CLASSES].astype(jnp.bfloat16).astype(jnp.float32)


def _check(x, params_f32, padded_params):
    out = jax.block_until_ready(mlp_forward(x, padded_params))
    batch = x.reshape(-1, IN_FEATURES).shape[0]
    assert out.shape == (batch, N_CLASSES), out.shape
    err_bf16 = float(jnp.max(jnp.abs(out - mlp_reference_bf16(x, padded_params))))
    err_f32 = float(jnp.max(jnp.abs(out - mlp_reference_f32(x, params_f32))))
    assert err_bf16 < 3e-2, f"kernel vs bf16 reference max abs err {err_bf16}"
    assert err_f32 < 2e-1, f"kernel vs f32 reference max abs err {err_f32}"


if __name__ == "__main__":
    key = jax.random.PRNGKey(0)
    kp, kx1, kx2 = jax.random.split(key, 3)
    params_f32 = init_params(kp)
    padded_params = pad_params(params_f32)

    # Small batch of MNIST-shaped inputs (NCHW, like the PyTorch DataLoader gives).
    x = jax.random.normal(kx1, (2, 1, 28, 28), dtype=jnp.float32)
    _check(x, params_f32, padded_params)

    # Secondary check: batch that is not a multiple of the tile -> exercises the
    # multi-step grid and the partial (masked) last block.
    x_big = jax.random.normal(kx2, (37, IN_FEATURES), dtype=jnp.float32)
    _check(x_big, params_f32, padded_params)

    print("KERNEL_OK")
</pallas_src>

<mosaic_0001>
module attributes {stable_mosaic.version = 11 : i64} {
  func.func @_mlp_kernel(%arg0: i32, %arg1: memref<16x784xf32, #tpu.memory_space<vmem>>, %arg2: memref<784x640xbf16, #tpu.memory_space<vmem>>, %arg3: memref<1x640xf32, #tpu.memory_space<vmem>>, %arg4: memref<640x384xbf16, #tpu.memory_space<vmem>>, %arg5: memref<1x384xf32, #tpu.memory_space<vmem>>, %arg6: memref<384x256xbf16, #tpu.memory_space<vmem>>, %arg7: memref<1x256xf32, #tpu.memory_space<vmem>>, %arg8: memref<256x128xbf16, #tpu.memory_space<vmem>>, %arg9: memref<1x128xf32, #tpu.memory_space<vmem>>, %arg10: memref<128x128xbf16, #tpu.memory_space<vmem>>, %arg11: memref<1x128xf32, #tpu.memory_space<vmem>>, %arg12: memref<16x128xbf16, #tpu.memory_space<vmem>>) attributes {dimension_semantics = [#tpu.dimension_semantics<parallel>], iteration_bounds = array<i64: 1>, scalar_prefetch = 0 : i64, scratch_operands = 0 : i64, tpu.core_type = #tpu.core_type<tc>, window_params = [{transform_indices = @transform_0, window_bounds = array<i64: 16, 784>}, {pipeline_mode = #tpu.pipeline_mode<synchronous>, transform_indices = @transform_1, window_bounds = array<i64: 784, 640>}, {pipeline_mode = #tpu.pipeline_mode<synchronous>, transform_indices = @transform_2, window_bounds = array<i64: 1, 640>}, {pipeline_mode = #tpu.pipeline_mode<synchronous>, transform_indices = @transform_3, window_bounds = array<i64: 640, 384>}, {pipeline_mode = #tpu.pipeline_mode<synchronous>, transform_indices = @transform_4, window_bounds = array<i64: 1, 384>}, {pipeline_mode = #tpu.pipeline_mode<synchronous>, transform_indices = @transform_5, window_bounds = array<i64: 384, 256>}, {pipeline_mode = #tpu.pipeline_mode<synchronous>, transform_indices = @transform_6, window_bounds = array<i64: 1, 256>}, {pipeline_mode = #tpu.pipeline_mode<synchronous>, transform_indices = @transform_7, window_bounds = array<i64: 256, 128>}, {pipeline_mode = #tpu.pipeline_mode<synchronous>, transform_indices = @transform_8, window_bounds = array<i64: 1, 128>}, {pipeline_mode = #tpu.pipeline_mode<synchronous>, transform_indices = @transform_9, window_bounds = array<i64: 128, 128>}, {pipeline_mode = #tpu.pipeline_mode<synchronous>, transform_indices = @transform_10, window_bounds = array<i64: 1, 128>}, {transform_indices = @transform_11, window_bounds = array<i64: 16, 128>}]} {
    %c0 = arith.constant 0 : index
    %c0_0 = arith.constant 0 : index
    %0 = vector.load %arg1[%c0, %c0_0] : memref<16x784xf32, #tpu.memory_space<vmem>>, vector<16x784xf32>
    %1 = arith.truncf %0 : vector<16x784xf32> to vector<16x784xbf16>
    %c0_1 = arith.constant 0 : index
    %c0_2 = arith.constant 0 : index
    %2 = vector.load %arg2[%c0_1, %c0_2] : memref<784x640xbf16, #tpu.memory_space<vmem>>, vector<784x640xbf16>
    %cst = arith.constant dense<0.000000e+00> : vector<16x640xf32>
    %3 = tpu.matmul %1, %2, %cst {dimension_numbers = #tpu.dot_dimension_numbers<[1], [0], [0], [1], [0, 0, 1, 1], [], []>} : vector<16x784xbf16>, vector<784x640xbf16>, vector<16x640xf32> -> vector<16x640xf32>
    %c0_3 = arith.constant 0 : index
    %c0_4 = arith.constant 0 : index
    %4 = vector.load %arg3[%c0_3, %c0_4] : memref<1x640xf32, #tpu.memory_space<vmem>>, vector<1x640xf32>
    %5 = vector.broadcast %4 : vector<1x640xf32> to vector<16x640xf32>
    %6 = arith.addf %3, %5 : vector<16x640xf32>
    %cst_5 = arith.constant 0.000000e+00 : f32
    %7 = vector.broadcast %cst_5 : f32 to vector<16x640xf32>
    %8 = arith.maximumf %6, %7 : vector<16x640xf32>
    %9 = arith.truncf %8 : vector<16x640xf32> to vector<16x640xbf16>
    %c0_6 = arith.constant 0 : index
    %c0_7 = arith.constant 0 : index
    %10 = vector.load %arg4[%c0_6, %c0_7] : memref<640x384xbf16, #tpu.memory_space<vmem>>, vector<640x384xbf16>
    %cst_8 = arith.constant dense<0.000000e+00> : vector<16x384xf32>
    %11 = tpu.matmul %9, %10, %cst_8 {dimension_numbers = #tpu.dot_dimension_numbers<[1], [0], [0], [1], [0, 0, 1, 1], [], []>} : vector<16x640xbf16>, vector<640x384xbf16>, vector<16x384xf32> -> vector<16x384xf32>
    %c0_9 = arith.constant 0 : index
    %c0_10 = arith.constant 0 : index
    %12 = vector.load %arg5[%c0_9, %c0_10] : memref<1x384xf32, #tpu.memory_space<vmem>>, vector<1x384xf32>
    %13 = vector.broadcast %12 : vector<1x384xf32> to vector<16x384xf32>
    %14 = arith.addf %11, %13 : vector<16x384xf32>
    %cst_11 = arith.constant 0.000000e+00 : f32
    %15 = vector.broadcast %cst_11 : f32 to vector<16x384xf32>
    %16 = arith.maximumf %14, %15 : vector<16x384xf32>
    %17 = arith.truncf %16 : vector<16x384xf32> to vector<16x384xbf16>
    %c0_12 = arith.constant 0 : index
    %c0_13 = arith.constant 0 : index
    %18 = vector.load %arg6[%c0_12, %c0_13] : memref<384x256xbf16, #tpu.memory_space<vmem>>, vector<384x256xbf16>
    %cst_14 = arith.constant dense<0.000000e+00> : vector<16x256xf32>
    %19 = tpu.matmul %17, %18, %cst_14 {dimension_numbers = #tpu.dot_dimension_numbers<[1], [0], [0], [1], [0, 0, 1, 1], [], []>} : vector<16x384xbf16>, vector<384x256xbf16>, vector<16x256xf32> -> vector<16x256xf32>
    %c0_15 = arith.constant 0 : index
    %c0_16 = arith.constant 0 : index
    %20 = vector.load %arg7[%c0_15, %c0_16] : memref<1x256xf32, #tpu.memory_space<vmem>>, vector<1x256xf32>
    %21 = vector.broadcast %20 : vector<1x256xf32> to vector<16x256xf32>
    %22 = arith.addf %19, %21 : vector<16x256xf32>
    %cst_17 = arith.constant 0.000000e+00 : f32
    %23 = vector.broadcast %cst_17 : f32 to vector<16x256xf32>
    %24 = arith.maximumf %22, %23 : vector<16x256xf32>
    %25 = arith.truncf %24 : vector<16x256xf32> to vector<16x256xbf16>
    %c0_18 = arith.constant 0 : index
    %c0_19 = arith.constant 0 : index
    %26 = vector.load %arg8[%c0_18, %c0_19] : memref<256x128xbf16, #tpu.memory_space<vmem>>, vector<256x128xbf16>
    %cst_20 = arith.constant dense<0.000000e+00> : vector<16x128xf32>
    %27 = tpu.matmul %25, %26, %cst_20 {dimension_numbers = #tpu.dot_dimension_numbers<[1], [0], [0], [1], [0, 0, 1, 1], [], []>} : vector<16x256xbf16>, vector<256x128xbf16>, vector<16x128xf32> -> vector<16x128xf32>
    %c0_21 = arith.constant 0 : index
    %c0_22 = arith.constant 0 : index
    %28 = vector.load %arg9[%c0_21, %c0_22] : memref<1x128xf32, #tpu.memory_space<vmem>>, vector<1x128xf32>
    %29 = vector.broadcast %28 : vector<1x128xf32> to vector<16x128xf32>
    %30 = arith.addf %27, %29 : vector<16x128xf32>
    %cst_23 = arith.constant 0.000000e+00 : f32
    %31 = vector.broadcast %cst_23 : f32 to vector<16x128xf32>
    %32 = arith.maximumf %30, %31 : vector<16x128xf32>
    %33 = arith.truncf %32 : vector<16x128xf32> to vector<16x128xbf16>
    %c0_24 = arith.constant 0 : index
    %c0_25 = arith.constant 0 : index
    %34 = vector.load %arg10[%c0_24, %c0_25] : memref<128x128xbf16, #tpu.memory_space<vmem>>, vector<128x128xbf16>
    %cst_26 = arith.constant dense<0.000000e+00> : vector<16x128xf32>
    %35 = tpu.matmul %33, %34, %cst_26 {dimension_numbers = #tpu.dot_dimension_numbers<[1], [0], [0], [1], [0, 0, 1, 1], [], []>} : vector<16x128xbf16>, vector<128x128xbf16>, vector<16x128xf32> -> vector<16x128xf32>
    %c0_27 = arith.constant 0 : index
    %c0_28 = arith.constant 0 : index
    %36 = vector.load %arg11[%c0_27, %c0_28] : memref<1x128xf32, #tpu.memory_space<vmem>>, vector<1x128xf32>
    %37 = vector.broadcast %36 : vector<1x128xf32> to vector<16x128xf32>
    %38 = arith.addf %35, %37 : vector<16x128xf32>
    %39 = arith.truncf %38 : vector<16x128xf32> to vector<16x128xbf16>
    %c0_29 = arith.constant 0 : index
    %c0_30 = arith.constant 0 : index
    %40 = vector.load %arg12[%c0_29, %c0_30] : memref<16x128xbf16, #tpu.memory_space<vmem>>, vector<16x128xbf16>
    tpu.vector_store %arg12[%c0_29, %c0_30], %39 {strides = array<i32>} : memref<16x128xbf16, #tpu.memory_space<vmem>>, vector<16x128xbf16>,
    return
  }
  func.func @transform_0(%arg0: i32) -> (i32, i32) {
    %c0_i32 = arith.constant 0 : i32
    %c0_i32_0 = arith.constant 0 : i32
    return %arg0, %c0_i32 : i32, i32
  }
  func.func @transform_1(%arg0: i32) -> (i32, i32) {
    %c0_i32 = arith.constant 0 : i32
    %c0_i32_0 = arith.constant 0 : i32
    %c0_i32_1 = arith.constant 0 : i32
    return %c0_i32, %c0_i32_0 : i32, i32
  }
  func.func @transform_2(%arg0: i32) -> (i32, i32) {
    %c0_i32 = arith.constant 0 : i32
    %c0_i32_0 = arith.constant 0 : i32
    %c0_i32_1 = arith.constant 0 : i32
    return %c0_i32, %c0_i32_0 : i32, i32
  }
  func.func @transform_3(%arg0: i32) -> (i32, i32) {
    %c0_i32 = arith.constant 0 : i32
    %c0_i32_0 = arith.constant 0 : i32
    %c0_i32_1 = arith.constant 0 : i32
    return %c0_i32, %c0_i32_0 : i32, i32
  }
  func.func @transform_4(%arg0: i32) -> (i32, i32) {
    %c0_i32 = arith.constant 0 : i32
    %c0_i32_0 = arith.constant 0 : i32
    %c0_i32_1 = arith.constant 0 : i32
    return %c0_i32, %c0_i32_0 : i32, i32
  }
  func.func @transform_5(%arg0: i32) -> (i32, i32) {
    %c0_i32 = arith.constant 0 : i32
    %c0_i32_0 = arith.constant 0 : i32
    %c0_i32_1 = arith.constant 0 : i32
    return %c0_i32, %c0_i32_0 : i32, i32
  }
  func.func @transform_6(%arg0: i32) -> (i32, i32) {
    %c0_i32 = arith.constant 0 : i32
    %c0_i32_0 = arith.constant 0 : i32
    %c0_i32_1 = arith.constant 0 : i32
    return %c0_i32, %c0_i32_0 : i32, i32
  }
  func.func @transform_7(%arg0: i32) -> (i32, i32) {
    %c0_i32 = arith.constant 0 : i32
    %c0_i32_0 = arith.constant 0 : i32
    %c0_i32_1 = arith.constant 0 : i32
    return %c0_i32, %c0_i32_0 : i32, i32
  }
  func.func @transform_8(%arg0: i32) -> (i32, i32) {
    %c0_i32 = arith.constant 0 : i32
    %c0_i32_0 = arith.constant 0 : i32
    %c0_i32_1 = arith.constant 0 : i32
    return %c0_i32, %c0_i32_0 : i32, i32
  }
  func.func @transform_9(%arg0: i32) -> (i32, i32) {
    %c0_i32 = arith.constant 0 : i32
    %c0_i32_0 = arith.constant 0 : i32
    %c0_i32_1 = arith.constant 0 : i32
    return %c0_i32, %c0_i32_0 : i32, i32
  }
  func.func @transform_10(%arg0: i32) -> (i32, i32) {
    %c0_i32 = arith.constant 0 : i32
    %c0_i32_0 = arith.constant 0 : i32
    %c0_i32_1 = arith.constant 0 : i32
    return %c0_i32, %c0_i32_0 : i32, i32
  }
  func.func @transform_11(%arg0: i32) -> (i32, i32) {
    %c0_i32 = arith.constant 0 : i32
    %c0_i32_0 = arith.constant 0 : i32
    return %arg0, %c0_i32 : i32, i32
  }
}

</mosaic_0001>

<llo_original>
// kernel: mlp_forward.1
$region0: #{mlp_forward.1}
  #allocation0 [shape = 'u32[]', space=smem, size = 0x4, offset = 0x4, fixed_abs, tag = 'smem constant byte address 0x4 - core index']
  #allocation1 [shape = 'u32[144,128]{1,0:T(1,128)}', space=vmem, size = 0x12000, scoped, tag = 'internal scratch']
  %s0 = inlined_call_operand.vmem [shape: f32[2,784], index: 0, kind: input, shape index: {}]
  %s1 = inlined_call_operand.hbm [shape: bf16[784,640], index: 1, kind: input, shape index: {}]
  %s2 = inlined_call_operand.vmem [shape: f32[1,640], index: 2, kind: input, shape index: {}]
  %s3 = inlined_call_operand.hbm [shape: bf16[640,384], index: 3, kind: input, shape index: {}]
  %s4 = inlined_call_operand.vmem [shape: f32[1,384], index: 4, kind: input, shape index: {}]
  %s5 = inlined_call_operand.hbm [shape: bf16[384,256], index: 5, kind: input, shape index: {}]
  %s6 = inlined_call_operand.vmem [shape: f32[1,256], index: 6, kind: input, shape index: {}]
  %s7 = inlined_call_operand.vmem [shape: bf16[256,128], index: 7, kind: input, shape index: {}]
  %s8 = inlined_call_operand.vmem [shape: f32[1,128], index: 8, kind: input, shape index: {}]
  %s9 = inlined_call_operand.vmem [shape: bf16[128,128], index: 9, kind: input, shape index: {}]
  %s10 = inlined_call_operand.vmem [shape: f32[1,128], index: 10, kind: input, shape index: {}]
  %s11 = inlined_call_operand.vmem [shape: bf16[2,128], index: 11, kind: output, shape index: {}]
  %s12 = sld [smem:[#allocation0]]
  $region96: #{mlp_forward.1} parent=0
    _
  %s14 = ssub.s32 1, %s12
  %s15 = scalar_select 0, %s14, %s12
  $region1: #{mlp_forward.1} parent=0
    #allocation2 [shape = 'u8[1003520]{0}', space=vmem, size = 0xf5000, scoped, tag = 'input window, operand 1, single buffered']
    #allocation3 [shape = 's32[1]{0}', space=sflag, size = 0x4, scoped, tag = 'scoped memory for mlp_forward.1']
    #allocation4 [shape = 'u8[491520]{0}', space=vmem, size = 0x78000, scoped, tag = 'input window, operand 3, single buffered']
    #allocation5 [shape = 's32[1]{0}', space=sflag, size = 0x4, scoped, tag = 'scoped memory for mlp_forward.1']
    #allocation6 [shape = 'u8[196608]{0}', space=vmem, size = 0x30000, scoped, tag = 'input window, operand 5, single buffered']
    #allocation7 [shape = 'u8[4096]{0}', space=vmem, size = 0x1000, scoped, tag = 'output window, operand 0, single buffered']
    %16 = vsyncpa [#allocation3], 0
    %17 = vsyncpa [#allocation5], 0
    // Predicated region
    $region2: #{mlp_forward.1} parent=1 // pred_check
      _
    $region3: #{mlp_forward.1} parent=1 // pred_check_branch
      %19 = sbr.rel (0) target = $region5
    $region4: #{mlp_forward.1} parent=1 // pred_region
      _
    $region5: #{mlp_forward.1} parent=1 // pred_fallthru
      _
    // Predicated region
    $region6: #{mlp_forward.1} parent=1 // pred_check
      _
    $region7: #{mlp_forward.1} parent=1 // pred_check_branch
      %21 = sbr.rel (0) target = $region9
    $region8: #{mlp_forward.1} parent=1 // pred_region
      %s23 = ssub.s32 31360, 31360
      %24 = vsyncadd [#allocation3], %s23
      %s25 = sshll.u32 [#allocation2], 4
      %s26 = int_to_ptr.vmem [resolvable:$true] %s25
      %31 = dma.hbm_to_vmem [thread:$0]  %s1, 31360, %s26, [#allocation3], 320, 320, 20
    $region9: #{mlp_forward.1} parent=1 // pred_fallthru
      _
    // Predicated region
    $region10: #{mlp_forward.1} parent=1 // pred_check
      _
    $region11: #{mlp_forward.1} parent=1 // pred_check_branch
      %33 = sbr.rel (0) target = $region13
    $region12: #{mlp_forward.1} parent=1 // pred_region
      _
    $region13: #{mlp_forward.1} parent=1 // pred_fallthru
      _
    // Predicated region
    $region14: #{mlp_forward.1} parent=1 // pred_check
      _
    $region15: #{mlp_forward.1} parent=1 // pred_check_branch
      %35 = sbr.rel (0) target = $region17
    $region16: #{mlp_forward.1} parent=1 // pred_region
      %s37 = ssub.s32 15360, 15360
      %38 = vsyncadd [#allocation5], %s37
      %s39 = sshll.u32 [#allocation4], 4
      %s40 = int_to_ptr.vmem [resolvable:$true] %s39
      %45 = dma.hbm_to_vmem [thread:$0]  %s3, 15360, %s40, [#allocation5], 192, 192, 12
    $region17: #{mlp_forward.1} parent=1 // pred_fallthru
      _
    // Predicated region
    $region18: #{mlp_forward.1} parent=1 // pred_check
      _
    $region19: #{mlp_forward.1} parent=1 // pred_check_branch
      %47 = sbr.rel (0) target = $region21
    $region20: #{mlp_forward.1} parent=1 // pred_region
      _
    $region21: #{mlp_forward.1} parent=1 // pred_fallthru
      _
    // Predicated region
    $region22: #{mlp_forward.1} parent=1 // pred_check
      _
    $region23: #{mlp_forward.1} parent=1 // pred_check_branch
      %49 = sbr.rel (0) target = $region25
    $region24: #{mlp_forward.1} parent=1 // pred_region
      %s51 = ssub.s32 6144, 6144
      %52 = vsyncadd [#allocation5], %s51
      %s53 = sshll.u32 [#allocation6], 4
      %s54 = int_to_ptr.vmem [resolvable:$true] %s53
      %59 = dma.hbm_to_vmem [thread:$0]  %s5, 6144, %s54, [#allocation5], 128, 128, 8
    $region25: #{mlp_forward.1} parent=1 // pred_fallthru
      _
    // Predicated region
    $region26: #{mlp_forward.1} parent=1 // pred_check
      _
    $region27: #{mlp_forward.1} parent=1 // pred_check_branch
      %61 = sbr.rel (0) target = $region29
    $region28: #{mlp_forward.1} parent=1 // pred_region
      _
    $region29: #{mlp_forward.1} parent=1 // pred_fallthru
      _
    // Predicated region
    $region30: #{mlp_forward.1} parent=1 // pred_check
      _
    $region31: #{mlp_forward.1} parent=1 // pred_check_branch
      %63 = sbr.rel (0) target = $region33
    $region32: #{mlp_forward.1} parent=1 // pred_region
      _
    $region33: #{mlp_forward.1} parent=1 // pred_fallthru
      _
    // Predicated region
    $region34: #{mlp_forward.1} parent=1 // pred_check
      _
    $region35: #{mlp_forward.1} parent=1 // pred_check_branch
      %65 = sbr.rel (0) target = $region37
    $region36: #{mlp_forward.1} parent=1 // pred_region
      _
    $region37: #{mlp_forward.1} parent=1 // pred_fallthru
      _
    // Predicated region
    $region38: #{mlp_forward.1} parent=1 // pred_check
      _
    $region39: #{mlp_forward.1} parent=1 // pred_check_branch
      %67 = sbr.rel (0) target = $region41
    $region40: #{mlp_forward.1} parent=1 // pred_region
      _
    $region41: #{mlp_forward.1} parent=1 // pred_fallthru
      _
    // Predicated region
    $region42: #{mlp_forward.1} parent=1 // pred_check
      _
    $region43: #{mlp_forward.1} parent=1 // pred_check_branch
      %69 = sbr.rel (0) target = $region45
    $region44: #{mlp_forward.1} parent=1 // pred_region
      _
    $region45: #{mlp_forward.1} parent=1 // pred_fallthru
      _
    // Predicated region
    $region46: #{mlp_forward.1} parent=1 // pred_check
      _
    $region47: #{mlp_forward.1} parent=1 // pred_check_branch
      %71 = sbr.rel (0) target = $region49
    $region48: #{mlp_forward.1} parent=1 // pred_region
      %72 = dma.done [#allocation3], 31360
    $region49: #{mlp_forward.1} parent=1 // pred_fallthru
      _
    // Predicated region
    $region50: #{mlp_forward.1} parent=1 // pred_check
      _
    $region51: #{mlp_forward.1} parent=1 // pred_check_branch
      %74 = sbr.rel (0) target = $region53
    $region52: #{mlp_forward.1} parent=1 // pred_region
      %75 = dma.done [#allocation5], 15360
    $region53: #{mlp_forward.1} parent=1 // pred_fallthru
      _
    // Predicated region
    $region54: #{mlp_forward.1} parent=1 // pred_check
      _
    $region55: #{mlp_forward.1} parent=1 // pred_check_branch
      %77 = sbr.rel (0) target = $region57
    $region56: #{mlp_forward.1} parent=1 // pred_region
      %78 = dma.done [#allocation5], 6144
    $region57: #{mlp_forward.1} parent=1 // pred_fallthru
      _
    %v80 = vld [vmem:[%s0] sm:$0xff]
    %v81 = vld [vmem:[%s0 + $0x8] sm:$0x3f]
    %v82 = vld [vmem:[%s0 + $0xe] sm:$0xff]
    %v83 = vld [vmem:[%s0 + $0x16] sm:$0x3f]
    %v84 = vld [vmem:[%s0 + $0x1c] sm:$0xff]
    %v85 = vld [vmem:[%s0 + $0x24] sm:$0x3f]
    %v86 = vld [vmem:[%s0 + $0x2a] sm:$0xff]
    %v87 = vld [vmem:[%s0 + $0x32] sm:$0x3f]
    %v88 = vld [vmem:[%s0 + $0x38] sm:$0xff]
    %v89 = vld [vmem:[%s0 + $0x40] sm:$0x3f]
    %v90 = vld [vmem:[%s0 + $0x46] sm:$0xff]
    %v91 = vld [vmem:[%s0 + $0x4e] sm:$0x3f]
    %v92 = vld [vmem:[%s0 + $0x54] sm:$0xff]
    %v93 = vld [vmem:[%s0 + $0x5c] sm:$0x3f]
    %v94 = vld [vmem:[%s0 + $0x62] sm:$0xff]
    %v95 = vld [vmem:[%s0 + $0x6a] sm:$0x3f]
    %v112 = vcombine.low %v80, %v82
    %v113 = vcombine.high %v80, %v82
    %v114 = vcombine.low %v84, %v86
    %v115 = vcombine.high %v84, %v86
    %v117 = vunpack.c.l.s4 1983009808
    %v118 = vunpack.c.0.s8 %v117
    %v119 = vlaneseq
    %v120 = vshrl.u32 %v119, 7
    %v121 = vsub.s32 %v118, %v120
    %v122 = vrot.slane %v112, %v121
    %v124 = vunpack.c.l.s4 1983009808
    %v125 = vunpack.c.0.s8 %v124
    %v126 = vlaneseq
    %v127 = vshrl.u32 %v126, 7
    %v128 = vsub.s32 %v125, %v127
    %v129 = vrot.slane %v113, %v128
    %v131 = vunpack.c.l.s4 1983009808
    %v132 = vunpack.c.0.s8 %v131
    %v133 = vlaneseq
    %v134 = vshrl.u32 %v133, 7
    %v135 = vsub.s32 %v132, %v134
    %v136 = vrot.slane %v114, %v135
    %v138 = vunpack.c.l.s4 1983009808
    %v139 = vunpack.c.0.s8 %v138
    %v140 = vlaneseq
    %v141 = vshrl.u32 %v140, 7
    %v142 = vsub.s32 %v139, %v141
    %v143 = vrot.slane %v115, %v142
    %v144 = vcombine.low %v122, %v136
    %v145 = vcombine.high %v122, %v136
    %v146 = vcombine.low %v129, %v143
    %v147 = vcombine.high %v129, %v143
    %v148 = vcombine.low %v81, %v83
    %v149 = vcombine.high %v81, %v83
    %v150 = vcombine.low %v85, %v87
    %v151 = vcombine.high %v85, %v87
    %v153 = vunpack.c.l.s4 1983009808
    %v154 = vunpack.c.0.s8 %v153
    %v155 = vlaneseq
    %v156 = vshrl.u32 %v155, 7
    %v157 = vsub.s32 %v154, %v156
    %v158 = vrot.slane %v148, %v157
    %v160 = vunpack.c.l.s4 1983009808
    %v161 = vunpack.c.0.s8 %v160
    %v162 = vlaneseq
    %v163 = vshrl.u32 %v162, 7
    %v164 = vsub.s32 %v161, %v163
    %v165 = vrot.slane %v149, %v164
    %v167 = vunpack.c.l.s4 1983009808
    %v168 = vunpack.c.0.s8 %v167
    %v169 = vlaneseq
    %v170 = vshrl.u32 %v169, 7
    %v171 = vsub.s32 %v168, %v170
    %v172 = vrot.slane %v150, %v171
    %v174 = vunpack.c.l.s4 1983009808
    %v175 = vunpack.c.0.s8 %v174
    %v176 = vlaneseq
    %v177 = vshrl.u32 %v176, 7
    %v178 = vsub.s32 %v175, %v177
    %v179 = vrot.slane %v151, %v178
    %v180 = vcombine.low %v158, %v172
    %v181 = vcombine.high %v158, %v172
    %v182 = vcombine.low %v165, %v179
    %v183 = vcombine.low %v88, %v90
    %v184 = vcombine.high %v88, %v90
    %v185 = vcombine.low %v92, %v94
    %v186 = vcombine.high %v92, %v94
    %v188 = vunpack.c.l.s4 1983009808
    %v189 = vunpack.c.0.s8 %v188
    %v190 = vlaneseq
    %v191 = vshrl.u32 %v190, 7
    %v192 = vsub.s32 %v189, %v191
    %v193 = vrot.slane %v183, %v192
    %v195 = vunpack.c.l.s4 1983009808
    %v196 = vunpack.c.0.s8 %v195
    %v197 = vlaneseq
    %v198 = vshrl.u32 %v197, 7
    %v199 = vsub.s32 %v196, %v198
    %v200 = vrot.slane %v184, %v199
    %v202 = vunpack.c.l.s4 1983009808
    %v203 = vunpack.c.0.s8 %v202
    %v204 = vlaneseq
    %v205 = vshrl.u32 %v204, 7
    %v206 = vsub.s32 %v203, %v205
    %v207 = vrot.slane %v185, %v206
    %v209 = vunpack.c.l.s4 1983009808
    %v210 = vunpack.c.0.s8 %v209
    %v211 = vlaneseq
    %v212 = vshrl.u32 %v211, 7
    %v213 = vsub.s32 %v210, %v212
    %v214 = vrot.slane %v186, %v213
    %v215 = vcombine.low %v193, %v207
    %v216 = vcombine.high %v193, %v207
    %v217 = vcombine.low %v200, %v214
    %v218 = vcombine.high %v200, %v214
    %v219 = vcombine.low %v89, %v91
    %v220 = vcombine.high %v89, %v91
    %v221 = vcombine.low %v93, %v95
    %v222 = vcombine.high %v93, %v95
    %v224 = vunpack.c.l.s4 1983009808
    %v225 = vunpack.c.0.s8 %v224
    %v226 = vlaneseq
    %v227 = vshrl.u32 %v226, 7
    %v228 = vsub.s32 %v225, %v227
    %v229 = vrot.slane %v219, %v228
    %v231 = vunpack.c.l.s4 1983009808
    %v232 = vunpack.c.0.s8 %v231
    %v233 = vlaneseq
    %v234 = vshrl.u32 %v233, 7
    %v235 = vsub.s32 %v232, %v234
    %v236 = vrot.slane %v220, %v235
    %v238 = vunpack.c.l.s4 1983009808
    %v239 = vunpack.c.0.s8 %v238
    %v240 = vlaneseq
    %v241 = vshrl.u32 %v240, 7
    %v242 = vsub.s32 %v239, %v241
    %v243 = vrot.slane %v221, %v242
    %v245 = vunpack.c.l.s4 1983009808
    %v246 = vunpack.c.0.s8 %v245
    %v247 = vlaneseq
    %v248 = vshrl.u32 %v247, 7
    %v249 = vsub.s32 %v246, %v248
    %v250 = vrot.slane %v222, %v249
    %v251 = vcombine.low %v229, %v243
    %v252 = vcombine.high %v229, %v243
    %v253 = vcombine.low %v236, %v250
    %v268 = vpack.c.bf16 %v215, %v144
    %v269 = vpack.c.bf16 %v216, %v145
    %v270 = vpack.c.bf16 %v217, %v146
    %v271 = vpack.c.bf16 %v218, %v147
    %v272 = vpack.c.bf16 %v251, %v180
    %v273 = vpack.c.bf16 %v252, %v181
    %v274 = vpack.c.bf16 %v253, %v182
    %v275 = vld [vmem:[#allocation2] sm:$0xff]
    %v276 = vld [vmem:[#allocation2 + $0x8] sm:$0xff]
    %v277 = vld [vmem:[#allocation2 + $0x10] sm:$0xf]
    %v278 = vld [vmem:[#allocation2 + $0x14] sm:$0xff]
    %v279 = vld [vmem:[#allocation2 + $0x1c] sm:$0xff]
    %v280 = vld [vmem:[#allocation2 + $0x24] sm:$0xf]
    %v281 = vld [vmem:[#allocation2 + $0x28] sm:$0xff]
    %v282 = vld [vmem:[#allocation2 + $0x30] sm:$0xff]
    %v283 = vld [vmem:[#allocation2 + $0x38] sm:$0xf]
    %v284 = vld [vmem:[#allocation2 + $0x3c] sm:$0xff]
    %v285 = vld [vmem:[#allocation2 + $0x44] sm:$0xff]
    %v286 = vld [vmem:[#allocation2 + $0x4c] sm:$0xf]
    %v287 = vld [vmem:[#allocation2 + $0x50] sm:$0xff]
    %v288 = vld [vmem:[#allocation2 + $0x58] sm:$0xff]
    %v289 = vld [vmem:[#allocation2 + $0x60] sm:$0xf]
    %v290 = vld [vmem:[#allocation2 + $0x64] sm:$0xff]
    %v291 = vld [vmem:[#allocation2 + $0x6c] sm:$0xff]
    %v292 = vld [vmem:[#allocation2 + $0x74] sm:$0xf]
    %v293 = vld [vmem:[#allocation2 + $0x78] sm:$0xff]
    %v294 = vld [vmem:[#allocation2 + $0x80] sm:$0xff]
    %v295 = vld [vmem:[#allocation2 + $0x88] sm:$0xf]
    %v296 = vld [vmem:[#allocation2 + $0x8c] sm:$0xff]
    %v297 = vld [vmem:[#allocation2 + $0x94] sm:$0xff]
    %v298 = vld [vmem:[#allocation2 + $0x9c] sm:$0xf]
    %v299 = vld [vmem:[#allocation2 + $0xa0] sm:$0xff]
    %v300 = vld [vmem:[#allocation2 + $0xa8] sm:$0xff]
    %v301 = vld [vmem:[#allocation2 + $0xb0] sm:$0xf]
    %v302 = vld [vmem:[#allocation2 + $0xb4] sm:$0xff]
    %v303 = vld [vmem:[#allocation2 + $0xbc] sm:$0xff]
    %v304 = vld [vmem:[#allocation2 + $0xc4] sm:$0xf]
    %v305 = vld [vmem:[#allocation2 + $0xc8] sm:$0xff]
    %v306 = vld [vmem:[#allocation2 + $0xd0] sm:$0xff]
    %v307 = vld [vmem:[#allocation2 + $0xd8] sm:$0xf]
    %v308 = vld [vmem:[#allocation2 + $0xdc] sm:$0xff]
    %v309 = vld [vmem:[#allocation2 + $0xe4] sm:$0xff]
    %v310 = vld [vmem:[#allocation2 + $0xec] sm:$0xf]
    %v311 = vld [vmem:[#allocation2 + $0xf0] sm:$0xff]
    %v312 = vld [vmem:[#allocation2 + $0xf8] sm:$0xff]
    %v313 = vld [vmem:[#allocation2 + $0x100] sm:$0xf]
    %v314 = vld [vmem:[#allocation2 + $0x104] sm:$0xff]
    %v315 = vld [vmem:[#allocation2 + $0x10c] sm:$0xff]
    %v316 = vld [vmem:[#allocation2 + $0x114] sm:$0xf]
    %v317 = vld [vmem:[#allocation2 + $0x118] sm:$0xff]
    %v318 = vld [vmem:[#allocation2 + $0x120] sm:$0xff]
    %v319 = vld [vmem:[#allocation2 + $0x128] sm:$0xf]
    %v320 = vld [vmem:[#allocation2 + $0x12c] sm:$0xff]
    %v321 = vld [vmem:[#allocation2 + $0x134] sm:$0xff]
    %v322 = vld [vmem:[#allocation2 + $0x13c] sm:$0xf]
    %v323 = vld [vmem:[#allocation2 + $0x140] sm:$0xff]
    %v324 = vld [vmem:[#allocation2 + $0x148] sm:$0xff]
    %v325 = vld [vmem:[#allocation2 + $0x150] sm:$0xf]
    %v326 = vld [vmem:[#allocation2 + $0x154] sm:$0xff]
    %v327 = vld [vmem:[#allocation2 + $0x15c] sm:$0xff]
    %v328 = vld [vmem:[#allocation2 + $0x164] sm:$0xf]
    %v329 = vld [vmem:[#allocation2 + $0x168] sm:$0xff]
    %v330 = vld [vmem:[#allocation2 + $0x170] sm:$0xff]
    %v331 = vld [vmem:[#allocation2 + $0x178] sm:$0xf]
    %v332 = vld [vmem:[#allocation2 + $0x17c] sm:$0xff]
    %v333 = vld [vmem:[#allocation2 + $0x184] sm:$0xff]
    %v334 = vld [vmem:[#allocation2 + $0x18c] sm:$0xf]
    %v335 = vld [vmem:[#allocation2 + $0x190] sm:$0xff]
    %v336 = vld [vmem:[#allocation2 + $0x198] sm:$0xff]
    %v337 = vld [vmem:[#allocation2 + $0x1a0] sm:$0xf]
    %v338 = vld [vmem:[#allocation2 + $0x1a4] sm:$0xff]
    %v339 = vld [vmem:[#allocation2 + $0x1ac] sm:$0xff]
    %v340 = vld [vmem:[#allocation2 + $0x1b4] sm:$0xf]
    %v341 = vld [vmem:[#allocation2 + $0x1b8] sm:$0xff]
    %v342 = vld [vmem:[#allocation2 + $0x1c0] sm:$0xff]
    %v343 = vld [vmem:[#allocation2 + $0x1c8] sm:$0xf]
    %v344 = vld [vmem:[#allocation2 + $0x1cc] sm:$0xff]
    %v345 = vld [vmem:[#allocation2 + $0x1d4] sm:$0xff]
    %v346 = vld [vmem:[#allocation2 + $0x1dc] sm:$0xf]
    %v347 = vld [vmem:[#allocation2 + $0x1e0] sm:$0xff]
    %v348 = vld [vmem:[#allocation2 + $0x1e8] sm:$0xff]
    %v349 = vld [vmem:[#allocation2 + $0x1f0] sm:$0xf]
    %v350 = vld [vmem:[#allocation2 + $0x1f4] sm:$0xff]
    %v351 = vld [vmem:[#allocation2 + $0x1fc] sm:$0xff]
    %v352 = vld [vmem:[#allocation2 + $0x204] sm:$0xf]
    %v353 = vld [vmem:[#allocation2 + $0x208] sm:$0xff]
    %v354 = vld [vmem:[#allocation2 + $0x210] sm:$0xff]
    %v355 = vld [vmem:[#allocation2 + $0x218] sm:$0xf]
    %v356 = vld [vmem:[#allocation2 + $0x21c] sm:$0xff]
    %v357 = vld [vmem:[#allocation2 + $0x224] sm:$0xff]
    %v358 = vld [vmem:[#allocation2 + $0x22c] sm:$0xf]
    %v359 = vld [vmem:[#allocation2 + $0x230] sm:$0xff]
    %v360 = vld [vmem:[#allocation2 + $0x238] sm:$0xff]
    %v361 = vld [vmem:[#allocation2 + $0x240] sm:$0xf]
    %v362 = vld [vmem:[#allocation2 + $0x244] sm:$0xff]
    %v363 = vld [vmem:[#allocation2 + $0x24c] sm:$0xff]
    %v364 = vld [vmem:[#allocation2 + $0x254] sm:$0xf]
    %v365 = vld [vmem:[#allocation2 + $0x258] sm:$0xff]
    %v366 = vld [vmem:[#allocation2 + $0x260] sm:$0xff]
    %v367 = vld [vmem:[#allocation2 + $0x268] sm:$0xf]
    %v368 = vld [vmem:[#allocation2 + $0x26c] sm:$0xff]
    %v369 = vld [vmem:[#allocation2 + $0x274] sm:$0xff]
    %v370 = vld [vmem:[#allocation2 + $0x27c] sm:$0xf]
    %v371 = vld [vmem:[#allocation2 + $0x280] sm:$0xff]
    %v372 = vld [vmem:[#allocation2 + $0x288] sm:$0xff]
    %v373 = vld [vmem:[#allocation2 + $0x290] sm:$0xf]
    %v374 = vld [vmem:[#allocation2 + $0x294] sm:$0xff]
    %v375 = vld [vmem:[#allocation2 + $0x29c] sm:$0xff]
    %v376 = vld [vmem:[#allocation2 + $0x2a4] sm:$0xf]
    %v377 = vld [vmem:[#allocation2 + $0x2a8] sm:$0xff]
    %v378 = vld [vmem:[#allocation2 + $0x2b0] sm:$0xff]
    %v379 = vld [vmem:[#allocation2 + $0x2b8] sm:$0xf]
    %v380 = vld [vmem:[#allocation2 + $0x2bc] sm:$0xff]
    %v381 = vld [vmem:[#allocation2 + $0x2c4] sm:$0xff]
    %v382 = vld [vmem:[#allocation2 + $0x2cc] sm:$0xf]
    %v383 = vld [vmem:[#allocation2 + $0x2d0] sm:$0xff]
    %v384 = vld [vmem:[#allocation2 + $0x2d8] sm:$0xff]
    %v385 = vld [vmem:[#allocation2 + $0x2e0] sm:$0xf]
    %v386 = vld [vmem:[#allocation2 + $0x2e4] sm:$0xff]
    %v387 = vld [vmem:[#allocation2 + $0x2ec] sm:$0xff]
    %v388 = vld [vmem:[#allocation2 + $0x2f4] sm:$0xf]
    %v389 = vld [vmem:[#allocation2 + $0x2f8] sm:$0xff]
    %v390 = vld [vmem:[#allocation2 + $0x300] sm:$0xff]
    %v391 = vld [vmem:[#allocation2 + $0x308] sm:$0xf]
    %v392 = vld [vmem:[#allocation2 + $0x30c] sm:$0xff]
    %v393 = vld [vmem:[#allocation2 + $0x314] sm:$0xff]
    %v394 = vld [vmem:[#allocation2 + $0x31c] sm:$0xf]
    %v395 = vld [vmem:[#allocation2 + $0x320] sm:$0xff]
    %v396 = vld [vmem:[#allocation2 + $0x328] sm:$0xff]
    %v397 = vld [vmem:[#allocation2 + $0x330] sm:$0xf]
    %v398 = vld [vmem:[#allocation2 + $0x334] sm:$0xff]
    %v399 = vld [vmem:[#allocation2 + $0x33c] sm:$0xff]
    %v400 = vld [vmem:[#allocation2 + $0x344] sm:$0xf]
    %v401 = vld [vmem:[#allocation2 + $0x348] sm:$0xff]
    %v402 = vld [vmem:[#allocation2 + $0x350] sm:$0xff]
    %v403 = vld [vmem:[#allocation2 + $0x358] sm:$0xf]
    %v404 = vld [vmem:[#allocation2 + $0x35c] sm:$0xff]
    %v405 = vld [vmem:[#allocation2 + $0x364] sm:$0xff]
    %v406 = vld [vmem:[#allocation2 + $0x36c] sm:$0xf]
    %v407 = vld [vmem:[#allocation2 + $0x370] sm:$0xff]
    %v408 = vld [vmem:[#allocation2 + $0x378] sm:$0xff]
    %v409 = vld [vmem:[#allocation2 + $0x380] sm:$0xf]
    %v410 = vld [vmem:[#allocation2 + $0x384] sm:$0xff]
    %v411 = vld [vmem:[#allocation2 + $0x38c] sm:$0xff]
    %v412 = vld [vmem:[#allocation2 + $0x394] sm:$0xf]
    %v413 = vld [vmem:[#allocation2 + $0x398] sm:$0xff]
    %v414 = vld [vmem:[#allocation2 + $0x3a0] sm:$0xff]
    %v415 = vld [vmem:[#allocation2 + $0x3a8] sm:$0xf]
    %v416 = vld [vmem:[#allocation2 + $0x3ac] sm:$0xff]
    %v417 = vld [vmem:[#allocation2 + $0x3b4] sm:$0xff]
    %v418 = vld [vmem:[#allocation2 + $0x3bc] sm:$0xf]
    %v419 = vld [vmem:[#allocation2 + $0x3c0] sm:$0xff]
    %v420 = vld [vmem:[#allocation2 + $0x3c8] sm:$0xff]
    %v421 = vld [vmem:[#allocation2 + $0x3d0] sm:$0xf]
    %v422 = vld [vmem:[#allocation2 + $0x3d4] sm:$0xff]
    %v423 = vld [vmem:[#allocation2 + $0x3dc] sm:$0xff]
    %v424 = vld [vmem:[#allocation2 + $0x3e4] sm:$0xf]
    %v425 = vld [vmem:[#allocation2 + $0x3e8] sm:$0xff]
    %v426 = vld [vmem:[#allocation2 + $0x3f0] sm:$0xff]
    %v427 = vld [vmem:[#allocation2 + $0x3f8] sm:$0xf]
    %v428 = vld [vmem:[#allocation2 + $0x3fc] sm:$0xff]
    %v429 = vld [vmem:[#allocation2 + $0x404] sm:$0xff]
    %v430 = vld [vmem:[#allocation2 + $0x40c] sm:$0xf]
    %v431 = vld [vmem:[#allocation2 + $0x410] sm:$0xff]
    %v432 = vld [vmem:[#allocation2 + $0x418] sm:$0xff]
    %v433 = vld [vmem:[#allocation2 + $0x420] sm:$0xf]
    %v434 = vld [vmem:[#allocation2 + $0x424] sm:$0xff]
    %v435 = vld [vmem:[#allocation2 + $0x42c] sm:$0xff]
    %v436 = vld [vmem:[#allocation2 + $0x434] sm:$0xf]
    %v437 = vld [vmem:[#allocation2 + $0x438] sm:$0xff]
    %v438 = vld [vmem:[#allocation2 + $0x440] sm:$0xff]
    %v439 = vld [vmem:[#allocation2 + $0x448] sm:$0xf]
    %v440 = vld [vmem:[#allocation2 + $0x44c] sm:$0xff]
    %v441 = vld [vmem:[#allocation2 + $0x454] sm:$0xff]
    %v442 = vld [vmem:[#allocation2 + $0x45c] sm:$0xf]
    %v443 = vld [vmem:[#allocation2 + $0x460] sm:$0xff]
    %v444 = vld [vmem:[#allocation2 + $0x468] sm:$0xff]
    %v445 = vld [vmem:[#allocation2 + $0x470] sm:$0xf]
    %v446 = vld [vmem:[#allocation2 + $0x474] sm:$0xff]
    %v447 = vld [vmem:[#allocation2 + $0x47c] sm:$0xff]
    %v448 = vld [vmem:[#allocation2 + $0x484] sm:$0xf]
    %v449 = vld [vmem:[#allocation2 + $0x488] sm:$0xff]
    %v450 = vld [vmem:[#allocation2 + $0x490] sm:$0xff]
    %v451 = vld [vmem:[#allocation2 + $0x498] sm:$0xf]
    %v452 = vld [vmem:[#allocation2 + $0x49c] sm:$0xff]
    %v453 = vld [vmem:[#allocation2 + $0x4a4] sm:$0xff]
    %v454 = vld [vmem:[#allocation2 + $0x4ac] sm:$0xf]
    %v455 = vld [vmem:[#allocation2 + $0x4b0] sm:$0xff]
    %v456 = vld [vmem:[#allocation2 + $0x4b8] sm:$0xff]
    %v457 = vld [vmem:[#allocation2 + $0x4c0] sm:$0xf]
    %v458 = vld [vmem:[#allocation2 + $0x4c4] sm:$0xff]
    %v459 = vld [vmem:[#allocation2 + $0x4cc] sm:$0xff]
    %v460 = vld [vmem:[#allocation2 + $0x4d4] sm:$0xf]
    %v461 = vld [vmem:[#allocation2 + $0x4d8] sm:$0xff]
    %v462 = vld [vmem:[#allocation2 + $0x4e0] sm:$0xff]
    %v463 = vld [vmem:[#allocation2 + $0x4e8] sm:$0xf]
    %v464 = vld [vmem:[#allocation2 + $0x4ec] sm:$0xff]
    %v465 = vld [vmem:[#allocation2 + $0x4f4] sm:$0xff]
    %v466 = vld [vmem:[#allocation2 + $0x4fc] sm:$0xf]
    %v467 = vld [vmem:[#allocation2 + $0x500] sm:$0xff]
    %v468 = vld [vmem:[#allocation2 + $0x508] sm:$0xff]
    %v469 = vld [vmem:[#allocation2 + $0x510] sm:$0xf]
    %v470 = vld [vmem:[#allocation2 + $0x514] sm:$0xff]
    %v471 = vld [vmem:[#allocation2 + $0x51c] sm:$0xff]
    %v472 = vld [vmem:[#allocation2 + $0x524] sm:$0xf]
    %v473 = vld [vmem:[#allocation2 + $0x528] sm:$0xff]
    %v474 = vld [vmem:[#allocation2 + $0x530] sm:$0xff]
    %v475 = vld [vmem:[#allocation2 + $0x538] sm:$0xf]
    %v476 = vld [vmem:[#allocation2 + $0x53c] sm:$0xff]
    %v477 = vld [vmem:[#allocation2 + $0x544] sm:$0xff]
    %v478 = vld [vmem:[#allocation2 + $0x54c] sm:$0xf]
    %v479 = vld [vmem:[#allocation2 + $0x550] sm:$0xff]
    %v480 = vld [vmem:[#allocation2 + $0x558] sm:$0xff]
    %v481 = vld [vmem:[#allocation2 + $0x560] sm:$0xf]
    %v482 = vld [vmem:[#allocation2 + $0x564] sm:$0xff]
    %v483 = vld [vmem:[#allocation2 + $0x56c] sm:$0xff]
    %v484 = vld [vmem:[#allocation2 + $0x574] sm:$0xf]
    %v485 = vld [vmem:[#allocation2 + $0x578] sm:$0xff]
    %v486 = vld [vmem:[#allocation2 + $0x580] sm:$0xff]
    %v487 = vld [vmem:[#allocation2 + $0x588] sm:$0xf]
    %v488 = vld [vmem:[#allocation2 + $0x58c] sm:$0xff]
    %v489 = vld [vmem:[#allocation2 + $0x594] sm:$0xff]
    %v490 = vld [vmem:[#allocation2 + $0x59c] sm:$0xf]
    %v491 = vld [vmem:[#allocation2 + $0x5a0] sm:$0xff]
    %v492 = vld [vmem:[#allocation2 + $0x5a8] sm:$0xff]
    %v493 = vld [vmem:[#allocation2 + $0x5b0] sm:$0xf]
    %v494 = vld [vmem:[#allocation2 + $0x5b4] sm:$0xff]
    %v495 = vld [vmem:[#allocation2 + $0x5bc] sm:$0xff]
    %v496 = vld [vmem:[#allocation2 + $0x5c4] sm:$0xf]
    %v497 = vld [vmem:[#allocation2 + $0x5c8] sm:$0xff]
    %v498 = vld [vmem:[#allocation2 + $0x5d0] sm:$0xff]
    %v499 = vld [vmem:[#allocation2 + $0x5d8] sm:$0xf]
    %v500 = vld [vmem:[#allocation2 + $0x5dc] sm:$0xff]
    %v501 = vld [vmem:[#allocation2 + $0x5e4] sm:$0xff]
    %v502 = vld [vmem:[#allocation2 + $0x5ec] sm:$0xf]
    %v503 = vld [vmem:[#allocation2 + $0x5f0] sm:$0xff]
    %v504 = vld [vmem:[#allocation2 + $0x5f8] sm:$0xff]
    %v505 = vld [vmem:[#allocation2 + $0x600] sm:$0xf]
    %v506 = vld [vmem:[#allocation2 + $0x604] sm:$0xff]
    %v507 = vld [vmem:[#allocation2 + $0x60c] sm:$0xff]
    %v508 = vld [vmem:[#allocation2 + $0x614] sm:$0xf]
    %v509 = vld [vmem:[#allocation2 + $0x618] sm:$0xff]
    %v510 = vld [vmem:[#allocation2 + $0x620] sm:$0xff]
    %v511 = vld [vmem:[#allocation2 + $0x628] sm:$0xf]
    %v512 = vld [vmem:[#allocation2 + $0x62c] sm:$0xff]
    %v513 = vld [vmem:[#allocation2 + $0x634] sm:$0xff]
    %v514 = vld [vmem:[#allocation2 + $0x63c] sm:$0xf]
    %v515 = vld [vmem:[#allocation2 + $0x640] sm:$0xff]
    %v516 = vld [vmem:[#allocation2 + $0x648] sm:$0xff]
    %v517 = vld [vmem:[#allocation2 + $0x650] sm:$0xf]
    %v518 = vld [vmem:[#allocation2 + $0x654] sm:$0xff]
    %v519 = vld [vmem:[#allocation2 + $0x65c] sm:$0xff]
    %v520 = vld [vmem:[#allocation2 + $0x664] sm:$0xf]
    %v521 = vld [vmem:[#allocation2 + $0x668] sm:$0xff]
    %v522 = vld [vmem:[#allocation2 + $0x670] sm:$0xff]
    %v523 = vld [vmem:[#allocation2 + $0x678] sm:$0xf]
    %v524 = vld [vmem:[#allocation2 + $0x67c] sm:$0xff]
    %v525 = vld [vmem:[#allocation2 + $0x684] sm:$0xff]
    %v526 = vld [vmem:[#allocation2 + $0x68c] sm:$0xf]
    %v527 = vld [vmem:[#allocation2 + $0x690] sm:$0xff]
    %v528 = vld [vmem:[#allocation2 + $0x698] sm:$0xff]
    %v529 = vld [vmem:[#allocation2 + $0x6a0] sm:$0xf]
    %v530 = vld [vmem:[#allocation2 + $0x6a4] sm:$0xff]
    %v531 = vld [vmem:[#allocation2 + $0x6ac] sm:$0xff]
    %v532 = vld [vmem:[#allocation2 + $0x6b4] sm:$0xf]
    %v533 = vld [vmem:[#allocation2 + $0x6b8] sm:$0xff]
    %v534 = vld [vmem:[#allocation2 + $0x6c0] sm:$0xff]
    %v535 = vld [vmem:[#allocation2 + $0x6c8] sm:$0xf]
    %v536 = vld [vmem:[#allocation2 + $0x6cc] sm:$0xff]
    %v537 = vld [vmem:[#allocation2 + $0x6d4] sm:$0xff]
    %v538 = vld [vmem:[#allocation2 + $0x6dc] sm:$0xf]
    %v539 = vld [vmem:[#allocation2 + $0x6e0] sm:$0xff]
    %v540 = vld [vmem:[#allocation2 + $0x6e8] sm:$0xff]
    %v541 = vld [vmem:[#allocation2 + $0x6f0] sm:$0xf]
    %v542 = vld [vmem:[#allocation2 + $0x6f4] sm:$0xff]
    %v543 = vld [vmem:[#allocation2 + $0x6fc] sm:$0xff]
    %v544 = vld [vmem:[#allocation2 + $0x704] sm:$0xf]
    %v545 = vld [vmem:[#allocation2 + $0x708] sm:$0xff]
    %v546 = vld [vmem:[#allocation2 + $0x710] sm:$0xff]
    %v547 = vld [vmem:[#allocation2 + $0x718] sm:$0xf]
    %v548 = vld [vmem:[#allocation2 + $0x71c] sm:$0xff]
    %v549 = vld [vmem:[#allocation2 + $0x724] sm:$0xff]
    %v550 = vld [vmem:[#allocation2 + $0x72c] sm:$0xf]
    %v551 = vld [vmem:[#allocation2 + $0x730] sm:$0xff]
    %v552 = vld [vmem:[#allocation2 + $0x738] sm:$0xff]
    %v553 = vld [vmem:[#allocation2 + $0x740] sm:$0xf]
    %v554 = vld [vmem:[#allocation2 + $0x744] sm:$0xff]
    %v555 = vld [vmem:[#allocation2 + $0x74c] sm:$0xff]
    %v556 = vld [vmem:[#allocation2 + $0x754] sm:$0xf]
    %v557 = vld [vmem:[#allocation2 + $0x758] sm:$0xff]
    %v558 = vld [vmem:[#allocation2 + $0x760] sm:$0xff]
    %v559 = vld [vmem:[#allocation2 + $0x768] sm:$0xf]
    %v560 = vld [vmem:[#allocation2 + $0x76c] sm:$0xff]
    %v561 = vld [vmem:[#allocation2 + $0x774] sm:$0xff]
    %v562 = vld [vmem:[#allocation2 + $0x77c] sm:$0xf]
    %v563 = vld [vmem:[#allocation2 + $0x780] sm:$0xff]
    %v564 = vld [vmem:[#allocation2 + $0x788] sm:$0xff]
    %v565 = vld [vmem:[#allocation2 + $0x790] sm:$0xf]
    %v566 = vld [vmem:[#allocation2 + $0x794] sm:$0xff]
    %v567 = vld [vmem:[#allocation2 + $0x79c] sm:$0xff]
    %v568 = vld [vmem:[#allocation2 + $0x7a4] sm:$0xf]
    %v569 = vld [vmem:[%s2] sm:$0x1f]
    %v571 = vlaneseq
    %v572 = vshrl.u32 %v571, 7
    %v573 = vsub.s32 0, %v572
    %v574 = vrot.slane %v569, %v573
    %v575 = vlaneseq
    %v576 = vshrl.u32 %v575, 7
    %v577 = vsub.s32 1, %v576
    %v578 = vrot.slane %v569, %v577
    %v579 = vlaneseq
    %v580 = vshrl.u32 %v579, 7
    %v581 = vsub.s32 2, %v580
    %v582 = vrot.slane %v569, %v581
    %v583 = vlaneseq
    %v584 = vshrl.u32 %v583, 7
    %v585 = vsub.s32 3, %v584
    %v586 = vrot.slane %v569, %v585
    %v587 = vlaneseq
    %v588 = vshrl.u32 %v587, 7
    %v589 = vsub.s32 4, %v588
    %v590 = vrot.slane %v569, %v589
    %v890 = vunpack.c.l.b16 %v275
    %v891 = vunpack.c.h.b16 %v275
    %v892 = vunpack.c.l.b16 %v276
    %v893 = vunpack.c.h.b16 %v276
    %v894 = vunpack.c.l.b16 %v277
    %v895 = vunpack.c.l.b16 %v278
    %v896 = vunpack.c.h.b16 %v278
    %v897 = vunpack.c.l.b16 %v279
    %v898 = vunpack.c.h.b16 %v279
    %v899 = vunpack.c.l.b16 %v280
    %v900 = vunpack.c.l.b16 %v281
    %v901 = vunpack.c.h.b16 %v281
    %v902 = vunpack.c.l.b16 %v282
    %v903 = vunpack.c.h.b16 %v282
    %v904 = vunpack.c.l.b16 %v283
    %v905 = vunpack.c.l.b16 %v284
    %v906 = vunpack.c.h.b16 %v284
    %v907 = vunpack.c.l.b16 %v285
    %v908 = vunpack.c.h.b16 %v285
    %v909 = vunpack.c.l.b16 %v286
    %v910 = vunpack.c.l.b16 %v287
    %v911 = vunpack.c.h.b16 %v287
    %v912 = vunpack.c.l.b16 %v288
    %v913 = vunpack.c.h.b16 %v288
    %v914 = vunpack.c.l.b16 %v289
    %v915 = vunpack.c.l.b16 %v290
    %v916 = vunpack.c.h.b16 %v290
    %v917 = vunpack.c.l.b16 %v291
    %v918 = vunpack.c.h.b16 %v291
    %v919 = vunpack.c.l.b16 %v292
    %v920 = vunpack.c.l.b16 %v293
    %v921 = vunpack.c.h.b16 %v293
    %v922 = vunpack.c.l.b16 %v294
    %v923 = vunpack.c.h.b16 %v294
    %v924 = vunpack.c.l.b16 %v295
    %v925 = vunpack.c.l.b16 %v296
    %v926 = vunpack.c.h.b16 %v296
    %v927 = vunpack.c.l.b16 %v297
    %v928 = vunpack.c.h.b16 %v297
    %v929 = vunpack.c.l.b16 %v298
    %v930 = vunpack.c.l.b16 %v299
    %v931 = vunpack.c.h.b16 %v299
    %v932 = vunpack.c.l.b16 %v300
    %v933 = vunpack.c.h.b16 %v300
    %v934 = vunpack.c.l.b16 %v301
    %v935 = vunpack.c.l.b16 %v302
    %v936 = vunpack.c.h.b16 %v302
    %v937 = vunpack.c.l.b16 %v303
    %v938 = vunpack.c.h.b16 %v303
    %v939 = vunpack.c.l.b16 %v304
    %v940 = vunpack.c.l.b16 %v305
    %v941 = vunpack.c.h.b16 %v305
    %v942 = vunpack.c.l.b16 %v306
    %v943 = vunpack.c.h.b16 %v306
    %v944 = vunpack.c.l.b16 %v307
    %v945 = vunpack.c.l.b16 %v308
    %v946 = vunpack.c.h.b16 %v308
    %v947 = vunpack.c.l.b16 %v309
    %v948 = vunpack.c.h.b16 %v309
    %v949 = vunpack.c.l.b16 %v310
    %v950 = vunpack.c.l.b16 %v311
    %v951 = vunpack.c.h.b16 %v311
    %v952 = vunpack.c.l.b16 %v312
    %v953 = vunpack.c.h.b16 %v312
    %v954 = vunpack.c.l.b16 %v313
    %v955 = vunpack.c.l.b16 %v314
    %v956 = vunpack.c.h.b16 %v314
    %v957 = vunpack.c.l.b16 %v315
    %v958 = vunpack.c.h.b16 %v315
    %v959 = vunpack.c.l.b16 %v316
    %v960 = vunpack.c.l.b16 %v317
    %v961 = vunpack.c.h.b16 %v317
    %v962 = vunpack.c.l.b16 %v318
    %v963 = vunpack.c.h.b16 %v318
    %v964 = vunpack.c.l.b16 %v319
    %v965 = vunpack.c.l.b16 %v320
    %v966 = vunpack.c.h.b16 %v320
    %v967 = vunpack.c.l.b16 %v321
    %v968 = vunpack.c.h.b16 %v321
    %v969 = vunpack.c.l.b16 %v322
    %v970 = vunpack.c.l.b16 %v323
    %v971 = vunpack.c.h.b16 %v323
    %v972 = vunpack.c.l.b16 %v324
    %v973 = vunpack.c.h.b16 %v324
    %v974 = vunpack.c.l.b16 %v325
    %v975 = vunpack.c.l.b16 %v326
    %v976 = vunpack.c.h.b16 %v326
    %v977 = vunpack.c.l.b16 %v327
    %v978 = vunpack.c.h.b16 %v327
    %v979 = vunpack.c.l.b16 %v328
    %v980 = vunpack.c.l.b16 %v329
    %v981 = vunpack.c.h.b16 %v329
    %v982 = vunpack.c.l.b16 %v330
    %v983 = vunpack.c.h.b16 %v330
    %v984 = vunpack.c.l.b16 %v331
    %v985 = vunpack.c.l.b16 %v332
    %v986 = vunpack.c.h.b16 %v332
    %v987 = vunpack.c.l.b16 %v333
    %v988 = vunpack.c.h.b16 %v333
    %v989 = vunpack.c.l.b16 %v334
    %v990 = vunpack.c.l.b16 %v335
    %v991 = vunpack.c.h.b16 %v335
    %v992 = vunpack.c.l.b16 %v336
    %v993 = vunpack.c.h.b16 %v336
    %v994 = vunpack.c.l.b16 %v337
    %v995 = vunpack.c.l.b16 %v338
    %v996 = vunpack.c.h.b16 %v338
    %v997 = vunpack.c.l.b16 %v339
    %v998 = vunpack.c.h.b16 %v339
    %v999 = vunpack.c.l.b16 %v340
    %v1000 = vunpack.c.l.b16 %v341
    %v1001 = vunpack.c.h.b16 %v341
    %v1002 = vunpack.c.l.b16 %v342
    %v1003 = vunpack.c.h.b16 %v342
    %v1004 = vunpack.c.l.b16 %v343
    %v1005 = vunpack.c.l.b16 %v344
    %v1006 = vunpack.c.h.b16 %v344
    %v1007 = vunpack.c.l.b16 %v345
    %v1008 = vunpack.c.h.b16 %v345
    %v1009 = vunpack.c.l.b16 %v346
    %v1010 = vunpack.c.l.b16 %v347
    %v1011 = vunpack.c.h.b16 %v347
    %v1012 = vunpack.c.l.b16 %v348
    %v1013 = vunpack.c.h.b16 %v348
    %v1014 = vunpack.c.l.b16 %v349
    %v1015 = vunpack.c.l.b16 %v350
    %v1016 = vunpack.c.h.b16 %v350
    %v1017 = vunpack.c.l.b16 %v351
    %v1018 = vunpack.c.h.b16 %v351
    %v1019 = vunpack.c.l.b16 %v352
    %v1020 = vunpack.c.l.b16 %v353
    %v1021 = vunpack.c.h.b16 %v353
    %v1022 = vunpack.c.l.b16 %v354
    %v1023 = vunpack.c.h.b16 %v354
    %v1024 = vunpack.c.l.b16 %v355
    %v1025 = vunpack.c.l.b16 %v356
    %v1026 = vunpack.c.h.b16 %v356
    %v1027 = vunpack.c.l.b16 %v357
    %v1028 = vunpack.c.h.b16 %v357
    %v1029 = vunpack.c.l.b16 %v358
    %v1030 = vunpack.c.l.b16 %v359
    %v1031 = vunpack.c.h.b16 %v359
    %v1032 = vunpack.c.l.b16 %v360
    %v1033 = vunpack.c.h.b16 %v360
    %v1034 = vunpack.c.l.b16 %v361
    %v1035 = vunpack.c.l.b16 %v362
    %v1036 = vunpack.c.h.b16 %v362
    %v1037 = vunpack.c.l.b16 %v363
    %v1038 = vunpack.c.h.b16 %v363
    %v1039 = vunpack.c.l.b16 %v364
    %v1040 = vunpack.c.l.b16 %v365
    %v1041 = vunpack.c.h.b16 %v365
    %v1042 = vunpack.c.l.b16 %v366
    %v1043 = vunpack.c.h.b16 %v366
    %v1044 = vunpack.c.l.b16 %v367
    %v1045 = vunpack.c.l.b16 %v368
    %v1046 = vunpack.c.h.b16 %v368
    %v1047 = vunpack.c.l.b16 %v369
    %v1048 = vunpack.c.h.b16 %v369
    %v1049 = vunpack.c.l.b16 %v370
    %v1050 = vunpack.c.l.b16 %v371
    %v1051 = vunpack.c.h.b16 %v371
    %v1052 = vunpack.c.l.b16 %v372
    %v1053 = vunpack.c.h.b16 %v372
    %v1054 = vunpack.c.l.b16 %v373
    %v1055 = vunpack.c.l.b16 %v374
    %v1056 = vunpack.c.h.b16 %v374
    %v1057 = vunpack.c.l.b16 %v375
    %v1058 = vunpack.c.h.b16 %v375
    %v1059 = vunpack.c.l.b16 %v376
    %v1060 = vunpack.c.l.b16 %v377
    %v1061 = vunpack.c.h.b16 %v377
    %v1062 = vunpack.c.l.b16 %v378
    %v1063 = vunpack.c.h.b16 %v378
    %v1064 = vunpack.c.l.b16 %v379
    %v1065 = vunpack.c.l.b16 %v380
    %v1066 = vunpack.c.h.b16 %v380
    %v1067 = vunpack.c.l.b16 %v381
    %v1068 = vunpack.c.h.b16 %v381
    %v1069 = vunpack.c.l.b16 %v382
    %v1070 = vunpack.c.l.b16 %v383
    %v1071 = vunpack.c.h.b16 %v383
    %v1072 = vunpack.c.l.b16 %v384
    %v1073 = vunpack.c.h.b16 %v384
    %v1074 = vunpack.c.l.b16 %v385
    %v1075 = vunpack.c.l.b16 %v386
    %v1076 = vunpack.c.h.b16 %v386
    %v1077 = vunpack.c.l.b16 %v387
    %v1078 = vunpack.c.h.b16 %v387
    %v1079 = vunpack.c.l.b16 %v388
    %v1080 = vunpack.c.l.b16 %v389
    %v1081 = vunpack.c.h.b16 %v389
    %v1082 = vunpack.c.l.b16 %v390
    %v1083 = vunpack.c.h.b16 %v390
    %v1084 = vunpack.c.l.b16 %v391
    %v1085 = vunpack.c.l.b16 %v392
    %v1086 = vunpack.c.h.b16 %v392
    %v1087 = vunpack.c.l.b16 %v393
    %v1088 = vunpack.c.h.b16 %v393
    %v1089 = vunpack.c.l.b16 %v394
    %v1090 = vunpack.c.l.b16 %v395
    %v1091 = vunpack.c.h.b16 %v395
    %v1092 = vunpack.c.l.b16 %v396
    %v1093 = vunpack.c.h.b16 %v396
    %v1094 = vunpack.c.l.b16 %v397
    %v1095 = vunpack.c.l.b16 %v398
    %v1096 = vunpack.c.h.b16 %v398
    %v1097 = vunpack.c.l.b16 %v399
    %v1098 = vunpack.c.h.b16 %v399
    %v1099 = vunpack.c.l.b16 %v400
    %v1100 = vunpack.c.l.b16 %v401
    %v1101 = vunpack.c.h.b16 %v401
    %v1102 = vunpack.c.l.b16 %v402
    %v1103 = vunpack.c.h.b16 %v402
    %v1104 = vunpack.c.l.b16 %v403
    %v1105 = vunpack.c.l.b16 %v404
    %v1106 = vunpack.c.h.b16 %v404
    %v1107 = vunpack.c.l.b16 %v405
    %v1108 = vunpack.c.h.b16 %v405
    %v1109 = vunpack.c.l.b16 %v406
    %v1110 = vunpack.c.l.b16 %v407
    %v1111 = vunpack.c.h.b16 %v407
    %v1112 = vunpack.c.l.b16 %v408
    %v1113 = vunpack.c.h.b16 %v408
    %v1114 = vunpack.c.l.b16 %v409
    %v1115 = vunpack.c.l.b16 %v410
    %v1116 = vunpack.c.h.b16 %v410
    %v1117 = vunpack.c.l.b16 %v411
    %v1118 = vunpack.c.h.b16 %v411
    %v1119 = vunpack.c.l.b16 %v412
    %v1120 = vunpack.c.l.b16 %v413
    %v1121 = vunpack.c.h.b16 %v413
    %v1122 = vunpack.c.l.b16 %v414
    %v1123 = vunpack.c.h.b16 %v414
    %v1124 = vunpack.c.l.b16 %v415
    %v1125 = vunpack.c.l.b16 %v416
    %v1126 = vunpack.c.h.b16 %v416
    %v1127 = vunpack.c.l.b16 %v417
    %v1128 = vunpack.c.h.b16 %v417
    %v1129 = vunpack.c.l.b16 %v418
    %v1130 = vunpack.c.l.b16 %v419
    %v1131 = vunpack.c.h.b16 %v419
    %v1132 = vunpack.c.l.b16 %v420
    %v1133 = vunpack.c.h.b16 %v420
    %v1134 = vunpack.c.l.b16 %v421
    %v1135 = vunpack.c.l.b16 %v422
    %v1136 = vunpack.c.h.b16 %v422
    %v1137 = vunpack.c.l.b16 %v423
    %v1138 = vunpack.c.h.b16 %v423
    %v1139 = vunpack.c.l.b16 %v424
    %v1140 = vunpack.c.l.b16 %v425
    %v1141 = vunpack.c.h.b16 %v425
    %v1142 = vunpack.c.l.b16 %v426
    %v1143 = vunpack.c.h.b16 %v426
    %v1144 = vunpack.c.l.b16 %v427
    %v1145 = vunpack.c.l.b16 %v428
    %v1146 = vunpack.c.h.b16 %v428
    %v1147 = vunpack.c.l.b16 %v429
    %v1148 = vunpack.c.h.b16 %v429
    %v1149 = vunpack.c.l.b16 %v430
    %v1150 = vunpack.c.l.b16 %v431
    %v1151 = vunpack.c.h.b16 %v431
    %v1152 = vunpack.c.l.b16 %v432
    %v1153 = vunpack.c.h.b16 %v432
    %v1154 = vunpack.c.l.b16 %v433
    %v1155 = vunpack.c.l.b16 %v434
    %v1156 = vunpack.c.h.b16 %v434
    %v1157 = vunpack.c.l.b16 %v435
    %v1158 = vunpack.c.h.b16 %v435
    %v1159 = vunpack.c.l.b16 %v436
    %v1160 = vunpack.c.l.b16 %v437
    %v1161 = vunpack.c.h.b16 %v437
    %v1162 = vunpack.c.l.b16 %v438
    %v1163 = vunpack.c.h.b16 %v438
    %v1164 = vunpack.c.l.b16 %v439
    %v1165 = vunpack.c.l.b16 %v440
    %v1166 = vunpack.c.h.b16 %v440
    %v1167 = vunpack.c.l.b16 %v441
    %v1168 = vunpack.c.h.b16 %v441
    %v1169 = vunpack.c.l.b16 %v442
    %v1170 = vunpack.c.l.b16 %v443
    %v1171 = vunpack.c.h.b16 %v443
    %v1172 = vunpack.c.l.b16 %v444
    %v1173 = vunpack.c.h.b16 %v444
    %v1174 = vunpack.c.l.b16 %v445
    %v1175 = vunpack.c.l.b16 %v446
    %v1176 = vunpack.c.h.b16 %v446
    %v1177 = vunpack.c.l.b16 %v447
    %v1178 = vunpack.c.h.b16 %v447
    %v1179 = vunpack.c.l.b16 %v448
    %v1180 = vunpack.c.l.b16 %v449
    %v1181 = vunpack.c.h.b16 %v449
    %v1182 = vunpack.c.l.b16 %v450
    %v1183 = vunpack.c.h.b16 %v450
    %v1184 = vunpack.c.l.b16 %v451
    %v1185 = vunpack.c.l.b16 %v452
    %v1186 = vunpack.c.h.b16 %v452
    %v1187 = vunpack.c.l.b16 %v453
    %v1188 = vunpack.c.h.b16 %v453
    %v1189 = vunpack.c.l.b16 %v454
    %v1190 = vunpack.c.l.b16 %v455
    %v1191 = vunpack.c.h.b16 %v455
    %v1192 = vunpack.c.l.b16 %v456
    %v1193 = vunpack.c.h.b16 %v456
    %v1194 = vunpack.c.l.b16 %v457
    %v1195 = vunpack.c.l.b16 %v458
    %v1196 = vunpack.c.h.b16 %v458
    %v1197 = vunpack.c.l.b16 %v459
    %v1198 = vunpack.c.h.b16 %v459
    %v1199 = vunpack.c.l.b16 %v460
    %v1200 = vunpack.c.l.b16 %v461
    %v1201 = vunpack.c.h.b16 %v461
    %v1202 = vunpack.c.l.b16 %v462
    %v1203 = vunpack.c.h.b16 %v462
    %v1204 = vunpack.c.l.b16 %v463
    %v1205 = vunpack.c.l.b16 %v464
    %v1206 = vunpack.c.h.b16 %v464
    %v1207 = vunpack.c.l.b16 %v465
    %v1208 = vunpack.c.h.b16 %v465
    %v1209 = vunpack.c.l.b16 %v466
    %v1210 = vunpack.c.l.b16 %v467
    %v1211 = vunpack.c.h.b16 %v467
    %v1212 = vunpack.c.l.b16 %v468
    %v1213 = vunpack.c.h.b16 %v468
    %v1214 = vunpack.c.l.b16 %v469
    %v1215 = vunpack.c.l.b16 %v470
    %v1216 = vunpack.c.h.b16 %v470
    %v1217 = vunpack.c.l.b16 %v471
    %v1218 = vunpack.c.h.b16 %v471
    %v1219 = vunpack.c.l.b16 %v472
    %v1220 = vunpack.c.l.b16 %v473
    %v1221 = vunpack.c.h.b16 %v473
    %v1222 = vunpack.c.l.b16 %v474
    %v1223 = vunpack.c.h.b16 %v474
    %v1224 = vunpack.c.l.b16 %v475
    %v1225 = vunpack.c.l.b16 %v476
    %v1226 = vunpack.c.h.b16 %v476
    %v1227 = vunpack.c.l.b16 %v477
    %v1228 = vunpack.c.h.b16 %v477
    %v1229 = vunpack.c.l.b16 %v478
    %v1230 = vunpack.c.l.b16 %v479
    %v1231 = vunpack.c.h.b16 %v479
    %v1232 = vunpack.c.l.b16 %v480
    %v1233 = vunpack.c.h.b16 %v480
    %v1234 = vunpack.c.l.b16 %v481
    %v1235 = vunpack.c.l.b16 %v482
    %v1236 = vunpack.c.h.b16 %v482
    %v1237 = vunpack.c.l.b16 %v483
    %v1238 = vunpack.c.h.b16 %v483
    %v1239 = vunpack.c.l.b16 %v484
    %v1240 = vunpack.c.l.b16 %v485
    %v1241 = vunpack.c.h.b16 %v485
    %v1242 = vunpack.c.l.b16 %v486
    %v1243 = vunpack.c.h.b16 %v486
    %v1244 = vunpack.c.l.b16 %v487
    %v1245 = vunpack.c.l.b16 %v488
    %v1246 = vunpack.c.h.b16 %v488
    %v1247 = vunpack.c.l.b16 %v489
    %v1248 = vunpack.c.h.b16 %v489
    %v1249 = vunpack.c.l.b16 %v490
    %v1250 = vunpack.c.l.b16 %v491
    %v1251 = vunpack.c.h.b16 %v491
    %v1252 = vunpack.c.l.b16 %v492
    %v1253 = vunpack.c.h.b16 %v492
    %v1254 = vunpack.c.l.b16 %v493
    %v1255 = vunpack.c.l.b16 %v494
    %v1256 = vunpack.c.h.b16 %v494
    %v1257 = vunpack.c.l.b16 %v495
    %v1258 = vunpack.c.h.b16 %v495
    %v1259 = vunpack.c.l.b16 %v496
    %v1260 = vunpack.c.l.b16 %v497
    %v1261 = vunpack.c.h.b16 %v497
    %v1262 = vunpack.c.l.b16 %v498
    %v1263 = vunpack.c.h.b16 %v498
    %v1264 = vunpack.c.l.b16 %v499
    %v1265 = vunpack.c.l.b16 %v500
    %v1266 = vunpack.c.h.b16 %v500
    %v1267 = vunpack.c.l.b16 %v501
    %v1268 = vunpack.c.h.b16 %v501
    %v1269 = vunpack.c.l.b16 %v502
    %v1270 = vunpack.c.l.b16 %v503
    %v1271 = vunpack.c.h.b16 %v503
    %v1272 = vunpack.c.l.b16 %v504
    %v1273 = vunpack.c.h.b16 %v504
    %v1274 = vunpack.c.l.b16 %v505
    %v1275 = vunpack.c.l.b16 %v506
    %v1276 = vunpack.c.h.b16 %v506
    %v1277 = vunpack.c.l.b16 %v507
    %v1278 = vunpack.c.h.b16 %v507
    %v1279 = vunpack.c.l.b16 %v508
    %v1280 = vunpack.c.l.b16 %v509
    %v1281 = vunpack.c.h.b16 %v509
    %v1282 = vunpack.c.l.b16 %v510
    %v1283 = vunpack.c.h.b16 %v510
    %v1284 = vunpack.c.l.b16 %v511
    %v1285 = vunpack.c.l.b16 %v512
    %v1286 = vunpack.c.h.b16 %v512
    %v1287 = vunpack.c.l.b16 %v513
    %v1288 = vunpack.c.h.b16 %v513
    %v1289 = vunpack.c.l.b16 %v514
    %v1290 = vunpack.c.l.b16 %v515
    %v1291 = vunpack.c.h.b16 %v515
    %v1292 = vunpack.c.l.b16 %v516
    %v1293 = vunpack.c.h.b16 %v516
    %v1294 = vunpack.c.l.b16 %v517
    %v1295 = vunpack.c.l.b16 %v518
    %v1296 = vunpack.c.h.b16 %v518
    %v1297 = vunpack.c.l.b16 %v519
    %v1298 = vunpack.c.h.b16 %v519
    %v1299 = vunpack.c.l.b16 %v520
    %v1300 = vunpack.c.l.b16 %v521
    %v1301 = vunpack.c.h.b16 %v521
    %v1302 = vunpack.c.l.b16 %v522
    %v1303 = vunpack.c.h.b16 %v522
    %v1304 = vunpack.c.l.b16 %v523
    %v1305 = vunpack.c.l.b16 %v524
    %v1306 = vunpack.c.h.b16 %v524
    %v1307 = vunpack.c.l.b16 %v525
    %v1308 = vunpack.c.h.b16 %v525
    %v1309 = vunpack.c.l.b16 %v526
    %v1310 = vunpack.c.l.b16 %v527
    %v1311 = vunpack.c.h.b16 %v527
    %v1312 = vunpack.c.l.b16 %v528
    %v1313 = vunpack.c.h.b16 %v528
    %v1314 = vunpack.c.l.b16 %v529
    %v1315 = vunpack.c.l.b16 %v530
    %v1316 = vunpack.c.h.b16 %v530
    %v1317 = vunpack.c.l.b16 %v531
    %v1318 = vunpack.c.h.b16 %v531
    %v1319 = vunpack.c.l.b16 %v532
    %v1320 = vunpack.c.l.b16 %v533
    %v1321 = vunpack.c.h.b16 %v533
    %v1322 = vunpack.c.l.b16 %v534
    %v1323 = vunpack.c.h.b16 %v534
    %v1324 = vunpack.c.l.b16 %v535
    %v1325 = vunpack.c.l.b16 %v536
    %v1326 = vunpack.c.h.b16 %v536
    %v1327 = vunpack.c.l.b16 %v537
    %v1328 = vunpack.c.h.b16 %v537
    %v1329 = vunpack.c.l.b16 %v538
    %v1330 = vunpack.c.l.b16 %v539
    %v1331 = vunpack.c.h.b16 %v539
    %v1332 = vunpack.c.l.b16 %v540
    %v1333 = vunpack.c.h.b16 %v540
    %v1334 = vunpack.c.l.b16 %v541
    %v1335 = vunpack.c.l.b16 %v542
    %v1336 = vunpack.c.h.b16 %v542
    %v1337 = vunpack.c.l.b16 %v543
    %v1338 = vunpack.c.h.b16 %v543
    %v1339 = vunpack.c.l.b16 %v544
    %v1340 = vunpack.c.l.b16 %v545
    %v1341 = vunpack.c.h.b16 %v545
    %v1342 = vunpack.c.l.b16 %v546
    %v1343 = vunpack.c.h.b16 %v546
    %v1344 = vunpack.c.l.b16 %v547
    %v1345 = vunpack.c.l.b16 %v548
    %v1346 = vunpack.c.h.b16 %v548
    %v1347 = vunpack.c.l.b16 %v549
    %v1348 = vunpack.c.h.b16 %v549
    %v1349 = vunpack.c.l.b16 %v550
    %v1350 = vunpack.c.l.b16 %v551
    %v1351 = vunpack.c.h.b16 %v551
    %v1352 = vunpack.c.l.b16 %v552
    %v1353 = vunpack.c.h.b16 %v552
    %v1354 = vunpack.c.l.b16 %v553
    %v1355 = vunpack.c.l.b16 %v554
    %v1356 = vunpack.c.h.b16 %v554
    %v1357 = vunpack.c.l.b16 %v555
    %v1358 = vunpack.c.h.b16 %v555
    %v1359 = vunpack.c.l.b16 %v556
    %v1360 = vunpack.c.l.b16 %v557
    %v1361 = vunpack.c.h.b16 %v557
    %v1362 = vunpack.c.l.b16 %v558
    %v1363 = vunpack.c.h.b16 %v558
    %v1364 = vunpack.c.l.b16 %v559
    %v1365 = vunpack.c.l.b16 %v560
    %v1366 = vunpack.c.h.b16 %v560
    %v1367 = vunpack.c.l.b16 %v561
    %v1368 = vunpack.c.h.b16 %v561
    %v1369 = vunpack.c.l.b16 %v562
    %v1370 = vunpack.c.l.b16 %v563
    %v1371 = vunpack.c.h.b16 %v563
    %v1372 = vunpack.c.l.b16 %v564
    %v1373 = vunpack.c.h.b16 %v564
    %v1374 = vunpack.c.l.b16 %v565
    %v1375 = vunpack.c.l.b16 %v566
    %v1376 = vunpack.c.h.b16 %v566
    %v1377 = vunpack.c.l.b16 %v567
    %v1378 = vunpack.c.h.b16 %v567
    %v1379 = vunpack.c.l.b16 %v568
    %v1380 = vpack.c.b16 %v895, %v890
    %v1381 = vpack.c.b16 %v896, %v891
    %v1382 = vpack.c.b16 %v897, %v892
    %v1383 = vpack.c.b16 %v898, %v893
    %v1384 = vpack.c.b16 %v899, %v894
    %v1385 = vpack.c.b16 %v905, %v900
    %v1386 = vpack.c.b16 %v906, %v901
    %v1387 = vpack.c.b16 %v907, %v902
    %v1388 = vpack.c.b16 %v908, %v903
    %v1389 = vpack.c.b16 %v909, %v904
    %v1390 = vpack.c.b16 %v915, %v910
    %v1391 = vpack.c.b16 %v916, %v911
    %v1392 = vpack.c.b16 %v917, %v912
    %v1393 = vpack.c.b16 %v918, %v913
    %v1394 = vpack.c.b16 %v919, %v914
    %v1395 = vpack.c.b16 %v925, %v920
    %v1396 = vpack.c.b16 %v926, %v921
    %v1397 = vpack.c.b16 %v927, %v922
    %v1398 = vpack.c.b16 %v928, %v923
    %v1399 = vpack.c.b16 %v929, %v924
    %v1400 = vpack.c.b16 %v935, %v930
    %v1401 = vpack.c.b16 %v936, %v931
    %v1402 = vpack.c.b16 %v937, %v932
    %v1403 = vpack.c.b16 %v938, %v933
    %v1404 = vpack.c.b16 %v939, %v934
    %v1405 = vpack.c.b16 %v945, %v940
    %v1406 = vpack.c.b16 %v946, %v941
    %v1407 = vpack.c.b16 %v947, %v942
    %v1408 = vpack.c.b16 %v948, %v943
    %v1409 = vpack.c.b16 %v949, %v944
    %v1410 = vpack.c.b16 %v955, %v950
    %v1411 = vpack.c.b16 %v956, %v951
    %v1412 = vpack.c.b16 %v957, %v952
    %v1413 = vpack.c.b16 %v958, %v953
    %v1414 = vpack.c.b16 %v959, %v954
    %v1415 = vpack.c.b16 %v965, %v960
    %v1416 = vpack.c.b16 %v966, %v961
    %v1417 = vpack.c.b16 %v967, %v962
    %v1418 = vpack.c.b16 %v968, %v963
    %v1419 = vpack.c.b16 %v969, %v964
    %v1420 = vpack.c.b16 %v975, %v970
    %v1421 = vpack.c.b16 %v976, %v971
    %v1422 = vpack.c.b16 %v977, %v972
    %v1423 = vpack.c.b16 %v978, %v973
    %v1424 = vpack.c.b16 %v979, %v974
    %v1425 = vpack.c.b16 %v985, %v980
    %v1426 = vpack.c.b16 %v986, %v981
    %v1427 = vpack.c.b16 %v987, %v982
    %v1428 = vpack.c.b16 %v988, %v983
    %v1429 = vpack.c.b16 %v989, %v984
    %v1430 = vpack.c.b16 %v995, %v990
    %v1431 = vpack.c.b16 %v996, %v991
    %v1432 = vpack.c.b16 %v997, %v992
    %v1433 = vpack.c.b16 %v998, %v993
    %v1434 = vpack.c.b16 %v999, %v994
    %v1435 = vpack.c.b16 %v1005, %v1000
    %v1436 = vpack.c.b16 %v1006, %v1001
    %v1437 = vpack.c.b16 %v1007, %v1002
    %v1438 = vpack.c.b16 %v1008, %v1003
    %v1439 = vpack.c.b16 %v1009, %v1004
    %v1440 = vpack.c.b16 %v1015, %v1010
    %v1441 = vpack.c.b16 %v1016, %v1011
    %v1442 = vpack.c.b16 %v1017, %v1012
    %v1443 = vpack.c.b16 %v1018, %v1013
    %v1444 = vpack.c.b16 %v1019, %v1014
    %v1445 = vpack.c.b16 %v1025, %v1020
    %v1446 = vpack.c.b16 %v1026, %v1021
    %v1447 = vpack.c.b16 %v1027, %v1022
    %v1448 = vpack.c.b16 %v1028, %v1023
    %v1449 = vpack.c.b16 %v1029, %v1024
    %v1450 = vpack.c.b16 %v1035, %v1030
    %v1451 = vpack.c.b16 %v1036, %v1031
    %v1452 = vpack.c.b16 %v1037, %v1032
    %v1453 = vpack.c.b16 %v1038, %v1033
    %v1454 = vpack.c.b16 %v1039, %v1034
    %v1455 = vpack.c.b16 %v1045, %v1040
    %v1456 = vpack.c.b16 %v1046, %v1041
    %v1457 = vpack.c.b16 %v1047, %v1042
    %v1458 = vpack.c.b16 %v1048, %v1043
    %v1459 = vpack.c.b16 %v1049, %v1044
    %v1460 = vpack.c.b16 %v1055, %v1050
    %v1461 = vpack.c.b16 %v1056, %v1051
    %v1462 = vpack.c.b16 %v1057, %v1052
    %v1463 = vpack.c.b16 %v1058, %v1053
    %v1464 = vpack.c.b16 %v1059, %v1054
    %v1465 = vpack.c.b16 %v1065, %v1060
    %v1466 = vpack.c.b16 %v1066, %v1061
    %v1467 = vpack.c.b16 %v1067, %v1062
    %v1468 = vpack.c.b16 %v1068, %v1063
    %v1469 = vpack.c.b16 %v1069, %v1064
    %v1470 = vpack.c.b16 %v1075, %v1070
    %v1471 = vpack.c.b16 %v1076, %v1071
    %v1472 = vpack.c.b16 %v1077, %v1072
    %v1473 = vpack.c.b16 %v1078, %v1073
    %v1474 = vpack.c.b16 %v1079, %v1074
    %v1475 = vpack.c.b16 %v1085, %v1080
    %v1476 = vpack.c.b16 %v1086, %v1081
    %v1477 = vpack.c.b16 %v1087, %v1082
    %v1478 = vpack.c.b16 %v1088, %v1083
    %v1479 = vpack.c.b16 %v1089, %v1084
    %v1480 = vpack.c.b16 %v1095, %v1090
    %v1481 = vpack.c.b16 %v1096, %v1091
    %v1482 = vpack.c.b16 %v1097, %v1092
    %v1483 = vpack.c.b16 %v1098, %v1093
    %v1484 = vpack.c.b16 %v1099, %v1094
    %v1485 = vpack.c.b16 %v1105, %v1100
    %v1486 = vpack.c.b16 %v1106, %v1101
    %v1487 = vpack.c.b16 %v1107, %v1102
    %v1488 = vpack.c.b16 %v1108, %v1103
    %v1489 = vpack.c.b16 %v1109, %v1104
    %v1490 = vpack.c.b16 %v1115, %v1110
    %v1491 = vpack.c.b16 %v1116, %v1111
    %v1492 = vpack.c.b16 %v1117, %v1112
    %v1493 = vpack.c.b16 %v1118, %v1113
    %v1494 = vpack.c.b16 %v1119, %v1114
    %v1495 = vpack.c.b16 %v1125, %v1120
    %v1496 = vpack.c.b16 %v1126, %v1121
    %v1497 = vpack.c.b16 %v1127, %v1122
    %v1498 = vpack.c.b16 %v1128, %v1123
    %v1499 = vpack.c.b16 %v1129, %v1124
    %v1500 = vpack.c.b16 %v1135, %v1130
    %v1501 = vpack.c.b16 %v1136, %v1131
    %v1502 = vpack.c.b16 %v1137, %v1132
    %v1503 = vpack.c.b16 %v1138, %v1133
    %v1504 = vpack.c.b16 %v1139, %v1134
    %v1505 = vpack.c.b16 %v1145, %v1140
    %v1506 = vpack.c.b16 %v1146, %v1141
    %v1507 = vpack.c.b16 %v1147, %v1142
    %v1508 = vpack.c.b16 %v1148, %v1143
    %v1509 = vpack.c.b16 %v1149, %v1144
    %v1510 = vpack.c.b16 %v1155, %v1150
    %v1511 = vpack.c.b16 %v1156, %v1151
    %v1512 = vpack.c.b16 %v1157, %v1152
    %v1513 = vpack.c.b16 %v1158, %v1153
    %v1514 = vpack.c.b16 %v1159, %v1154
    %v1515 = vpack.c.b16 %v1165, %v1160
    %v1516 = vpack.c.b16 %v1166, %v1161
    %v1517 = vpack.c.b16 %v1167, %v1162
    %v1518 = vpack.c.b16 %v1168, %v1163
    %v1519 = vpack.c.b16 %v1169, %v1164
    %v1520 = vpack.c.b16 %v1175, %v1170
    %v1521 = vpack.c.b16 %v1176, %v1171
    %v1522 = vpack.c.b16 %v1177, %v1172
    %v1523 = vpack.c.b16 %v1178, %v1173
    %v1524 = vpack.c.b16 %v1179, %v1174
    %v1525 = vpack.c.b16 %v1185, %v1180
    %v1526 = vpack.c.b16 %v1186, %v1181
    %v1527 = vpack.c.b16 %v1187, %v1182
    %v1528 = vpack.c.b16 %v1188, %v1183
    %v1529 = vpack.c.b16 %v1189, %v1184
    %v1530 = vpack.c.b16 %v1195, %v1190
    %v1531 = vpack.c.b16 %v1196, %v1191
    %v1532 = vpack.c.b16 %v1197, %v1192
    %v1533 = vpack.c.b16 %v1198, %v1193
    %v1534 = vpack.c.b16 %v1199, %v1194
    %v1535 = vpack.c.b16 %v1205, %v1200
    %v1536 = vpack.c.b16 %v1206, %v1201
    %v1537 = vpack.c.b16 %v1207, %v1202
    %v1538 = vpack.c.b16 %v1208, %v1203
    %v1539 = vpack.c.b16 %v1209, %v1204
    %v1540 = vpack.c.b16 %v1215, %v1210
    %v1541 = vpack.c.b16 %v1216, %v1211
    %v1542 = vpack.c.b16 %v1217, %v1212
    %v1543 = vpack.c.b16 %v1218, %v1213
    %v1544 = vpack.c.b16 %v1219, %v1214
    %v1545 = vpack.c.b16 %v1225, %v1220
    %v1546 = vpack.c.b16 %v1226, %v1221
    %v1547 = vpack.c.b16 %v1227, %v1222
    %v1548 = vpack.c.b16 %v1228, %v1223
    %v1549 = vpack.c.b16 %v1229, %v1224
    %v1550 = vpack.c.b16 %v1235, %v1230
    %v1551 = vpack.c.b16 %v1236, %v1231
    %v1552 = vpack.c.b16 %v1237, %v1232
    %v1553 = vpack.c.b16 %v1238, %v1233
    %v1554 = vpack.c.b16 %v1239, %v1234
    %v1555 = vpack.c.b16 %v1245, %v1240
    %v1556 = vpack.c.b16 %v1246, %v1241
    %v1557 = vpack.c.b16 %v1247, %v1242
    %v1558 = vpack.c.b16 %v1248, %v1243
    %v1559 = vpack.c.b16 %v1249, %v1244
    %v1560 = vpack.c.b16 %v1255, %v1250
    %v1561 = vpack.c.b16 %v1256, %v1251
    %v1562 = vpack.c.b16 %v1257, %v1252
    %v1563 = vpack.c.b16 %v1258, %v1253
    %v1564 = vpack.c.b16 %v1259, %v1254
    %v1565 = vpack.c.b16 %v1265, %v1260
    %v1566 = vpack.c.b16 %v1266, %v1261
    %v1567 = vpack.c.b16 %v1267, %v1262
    %v1568 = vpack.c.b16 %v1268, %v1263
    %v1569 = vpack.c.b16 %v1269, %v1264
    %v1570 = vpack.c.b16 %v1275, %v1270
    %v1571 = vpack.c.b16 %v1276, %v1271
    %v1572 = vpack.c.b16 %v1277, %v1272
    %v1573 = vpack.c.b16 %v1278, %v1273
    %v1574 = vpack.c.b16 %v1279, %v1274
    %v1575 = vpack.c.b16 %v1285, %v1280
    %v1576 = vpack.c.b16 %v1286, %v1281
    %v1577 = vpack.c.b16 %v1287, %v1282
    %v1578 = vpack.c.b16 %v1288, %v1283
    %v1579 = vpack.c.b16 %v1289, %v1284
    %v1580 = vpack.c.b16 %v1295, %v1290
    %v1581 = vpack.c.b16 %v1296, %v1291
    %v1582 = vpack.c.b16 %v1297, %v1292
    %v1583 = vpack.c.b16 %v1298, %v1293
    %v1584 = vpack.c.b16 %v1299, %v1294
    %v1585 = vpack.c.b16 %v1305, %v1300
    %v1586 = vpack.c.b16 %v1306, %v1301
    %v1587 = vpack.c.b16 %v1307, %v1302
    %v1588 = vpack.c.b16 %v1308, %v1303
    %v1589 = vpack.c.b16 %v1309, %v1304
    %v1590 = vpack.c.b16 %v1315, %v1310
    %v1591 = vpack.c.b16 %v1316, %v1311
    %v1592 = vpack.c.b16 %v1317, %v1312
    %v1593 = vpack.c.b16 %v1318, %v1313
    %v1594 = vpack.c.b16 %v1319, %v1314
    %v1595 = vpack.c.b16 %v1325, %v1320
    %v1596 = vpack.c.b16 %v1326, %v1321
    %v1597 = vpack.c.b16 %v1327, %v1322
    %v1598 = vpack.c.b16 %v1328, %v1323
    %v1599 = vpack.c.b16 %v1329, %v1324
    %v1600 = vpack.c.b16 %v1335, %v1330
    %v1601 = vpack.c.b16 %v1336, %v1331
    %v1602 = vpack.c.b16 %v1337, %v1332
    %v1603 = vpack.c.b16 %v1338, %v1333
    %v1604 = vpack.c.b16 %v1339, %v1334
    %v1605 = vpack.c.b16 %v1345, %v1340
    %v1606 = vpack.c.b16 %v1346, %v1341
    %v1607 = vpack.c.b16 %v1347, %v1342
    %v1608 = vpack.c.b16 %v1348, %v1343
    %v1609 = vpack.c.b16 %v1349, %v1344
    %v1610 = vpack.c.b16 %v1355, %v1350
    %v1611 = vpack.c.b16 %v1356, %v1351
    %v1612 = vpack.c.b16 %v1357, %v1352
    %v1613 = vpack.c.b16 %v1358, %v1353
    %v1614 = vpack.c.b16 %v1359, %v1354
    %v1615 = vpack.c.b16 %v1365, %v1360
    %v1616 = vpack.c.b16 %v1366, %v1361
    %v1617 = vpack.c.b16 %v1367, %v1362
    %v1618 = vpack.c.b16 %v1368, %v1363
    %v1619 = vpack.c.b16 %v1369, %v1364
    %v1620 = vpack.c.b16 %v1375, %v1370
    %v1621 = vpack.c.b16 %v1376, %v1371
    %v1622 = vpack.c.b16 %v1377, %v1372
    %v1623 = vpack.c.b16 %v1378, %v1373
    %v1624 = vpack.c.b16 %v1379, %v1374
    %vm1870 = vcmask 130048
    %v1872 = vsel %vm1870, %v274, 0
    %1874 = vmatprep.subr.bf16.mxu0 %v1381
    %1875 = vmatpush1.bf16.msra.mxu0 %v1380
    %1876 = vmatprep.subr.bf16.mxu0 %v1386
    %1877 = vmatpush1.bf16.msra.mxu0 %v1385
    %1878 = vmatprep.subr.bf16.mxu0 %v1391
    %1879 = vmatpush1.bf16.msra.mxu0 %v1390
    %1880 = vmatprep.subr.bf16.mxu0 %v1396
    %1881 = vmatpush1.bf16.msra.mxu0 %v1395
    %1882 = vmatprep.subr.bf16.mxu0 %v1401
    %1883 = vmatpush1.bf16.msra.mxu0 %v1400
    %1884 = vmatprep.subr.bf16.mxu0 %v1406
    %1885 = vmatpush1.bf16.msra.mxu0 %v1405
    %1886 = vmatprep.subr.bf16.mxu0 %v1411
    %1887 = vmatpush1.bf16.msra.mxu0 %v1410
    %1888 = vmatprep.subr.bf16.mxu0 %v1416
    %1889 = vmatpush1.bf16.msra.mxu0 %v1415
    %1890 = vmatprep.subr.bf16.mxu0 %v1421
    %1891 = vmatpush1.bf16.msra.mxu0 %v1420
    %1892 = vmatprep.subr.bf16.mxu0 %v1426
    %1893 = vmatpush1.bf16.msra.mxu0 %v1425
    %1894 = vmatprep.subr.bf16.mxu0 %v1431
    %1895 = vmatpush1.bf16.msra.mxu0 %v1430
    %1896 = vmatprep.subr.bf16.mxu0 %v1436
    %1897 = vmatpush1.bf16.msra.mxu0 %v1435
    %1898 = vmatprep.subr.bf16.mxu0 %v1441
    %1899 = vmatpush1.bf16.msra.mxu0 %v1440
    %1900 = vmatprep.subr.bf16.mxu0 %v1446
    %1901 = vmatpush1.bf16.msra.mxu0 %v1445
    %1902 = vmatprep.subr.bf16.mxu0 %v1451
    %1903 = vmatpush1.bf16.msra.mxu0 %v1450
    %1904 = vmatprep.subr.bf16.mxu0 %v1456
    %1905 = vmatpush1.bf16.msra.mxu0 %v1455
    %1906 = vmatprep.mubr.bf16.mxu0 %v269
    %1907 = vmatmul.mubr.bf16.gmra.mrb[0].mxu0 %v268
    %v1908 = vpop.f32.mrb[0].mxu0
    %v1909 = vadd.f32 %v574, %v1908
    %v1910 = vpop.f32.mrb[0].mxu0
    %v1911 = vadd.f32 %v578, %v1910
    %v1912 = vpop.f32.mrb[0].mxu0
    %v1913 = vadd.f32 %v574, %v1912
    %v1914 = vpop.f32.mrb[0].mxu0
    %v1915 = vadd.f32 %v578, %v1914
    %1916 = vdwg.mxu0
    %1917 = vmatprep.subr.bf16.mxu0 %v1461
    %1918 = vmatpush1.bf16.msra.mxu0 %v1460
    %1919 = vmatprep.subr.bf16.mxu0 %v1466
    %1920 = vmatpush1.bf16.msra.mxu0 %v1465
    %1921 = vmatprep.subr.bf16.mxu0 %v1471
    %1922 = vmatpush1.bf16.msra.mxu0 %v1470
    %1923 = vmatprep.subr.bf16.mxu0 %v1476
    %1924 = vmatpush1.bf16.msra.mxu0 %v1475
    %1925 = vmatprep.subr.bf16.mxu0 %v1481
    %1926 = vmatpush1.bf16.msra.mxu0 %v1480
    %1927 = vmatprep.subr.bf16.mxu0 %v1486
    %1928 = vmatpush1.bf16.msra.mxu0 %v1485
    %1929 = vmatprep.subr.bf16.mxu0 %v1491
    %1930 = vmatpush1.bf16.msra.mxu0 %v1490
    %1931 = vmatprep.subr.bf16.mxu0 %v1496
    %1932 = vmatpush1.bf16.msra.mxu0 %v1495
    %1933 = vmatprep.subr.bf16.mxu0 %v1501
    %1934 = vmatpush1.bf16.msra.mxu0 %v1500
    %1935 = vmatprep.subr.bf16.mxu0 %v1506
    %1936 = vmatpush1.bf16.msra.mxu0 %v1505
    %1937 = vmatprep.subr.bf16.mxu0 %v1511
    %1938 = vmatpush1.bf16.msra.mxu0 %v1510
    %1939 = vmatprep.subr.bf16.mxu0 %v1516
    %1940 = vmatpush1.bf16.msra.mxu0 %v1515
    %1941 = vmatprep.subr.bf16.mxu0 %v1521
    %1942 = vmatpush1.bf16.msra.mxu0 %v1520
    %1943 = vmatprep.subr.bf16.mxu0 %v1526
    %1944 = vmatpush1.bf16.msra.mxu0 %v1525
    %1945 = vmatprep.subr.bf16.mxu0 %v1531
    %1946 = vmatpush1.bf16.msra.mxu0 %v1530
    %1947 = vmatprep.subr.bf16.mxu0 %v1536
    %1948 = vmatpush1.bf16.msra.mxu0 %v1535
    %1949 = vmatprep.mubr.bf16.mxu0 %v271
    %1950 = vmatmul.mubr.bf16.gmra.mrb[0].mxu0 %v270
    %v1951 = vpop.f32.mrb[0].mxu0
    %v1952 = vadd.f32 %v1909, %v1951
    %v1953 = vpop.f32.mrb[0].mxu0
    %v1954 = vadd.f32 %v1911, %v1953
    %v1955 = vpop.f32.mrb[0].mxu0
    %v1956 = vadd.f32 %v1913, %v1955
    %v1957 = vpop.f32.mrb[0].mxu0
    %v1958 = vadd.f32 %v1915, %v1957
    %1959 = vdwg.mxu0
    %1960 = vmatprep.subr.bf16.mxu0 %v1541
    %1961 = vmatpush1.bf16.msra.mxu0 %v1540
    %1962 = vmatprep.subr.bf16.mxu0 %v1546
    %1963 = vmatpush1.bf16.msra.mxu0 %v1545
    %1964 = vmatprep.subr.bf16.mxu0 %v1551
    %1965 = vmatpush1.bf16.msra.mxu0 %v1550
    %1966 = vmatprep.subr.bf16.mxu0 %v1556
    %1967 = vmatpush1.bf16.msra.mxu0 %v1555
    %1968 = vmatprep.subr.bf16.mxu0 %v1561
    %1969 = vmatpush1.bf16.msra.mxu0 %v1560
    %1970 = vmatprep.subr.bf16.mxu0 %v1566
    %1971 = vmatpush1.bf16.msra.mxu0 %v1565
    %1972 = vmatprep.subr.bf16.mxu0 %v1571
    %1973 = vmatpush1.bf16.msra.mxu0 %v1570
    %1974 = vmatprep.subr.bf16.mxu0 %v1576
    %1975 = vmatpush1.bf16.msra.mxu0 %v1575
    %1976 = vmatprep.subr.bf16.mxu0 %v1581
    %1977 = vmatpush1.bf16.msra.mxu0 %v1580
    %1978 = vmatprep.subr.bf16.mxu0 %v1586
    %1979 = vmatpush1.bf16.msra.mxu0 %v1585
    %1980 = vmatprep.subr.bf16.mxu0 %v1591
    %1981 = vmatpush1.bf16.msra.mxu0 %v1590
    %1982 = vmatprep.subr.bf16.mxu0 %v1596
    %1983 = vmatpush1.bf16.msra.mxu0 %v1595
    %1984 = vmatprep.subr.bf16.mxu0 %v1601
    %1985 = vmatpush1.bf16.msra.mxu0 %v1600
    %1986 = vmatprep.subr.bf16.mxu0 %v1606
    %1987 = vmatpush1.bf16.msra.mxu0 %v1605
    %1988 = vmatprep.subr.bf16.mxu0 %v1611
    %1989 = vmatpush1.bf16.msra.mxu0 %v1610
    %1990 = vmatprep.subr.bf16.mxu0 %v1616
    %1991 = vmatpush1.bf16.msra.mxu0 %v1615
    %1992 = vmatprep.mubr.bf16.mxu0 %v273
    %1993 = vmatmul.mubr.bf16.gmra.mrb[0].mxu0 %v272
    %v1994 = vpop.f32.mrb[0].mxu0
    %v1995 = vadd.f32 %v1952, %v1994
    %v1996 = vpop.f32.mrb[0].mxu0
    %v1997 = vadd.f32 %v1954, %v1996
    %v1998 = vpop.f32.mrb[0].mxu0
    %v1999 = vadd.f32 %v1956, %v1998
    %v2000 = vpop.f32.mrb[0].mxu0
    %v2001 = vadd.f32 %v1958, %v2000
    %2002 = vdwg.mxu0
    %2003 = vmatprep.subr.bf16.mxu0 %v1621
    %2004 = vmatpush1.bf16.msra.mxu0 %v1620
    %2005 = vmatprep.subr.bf16.mxu0 0
    %2006 = vmatpush1.bf16.msra.mxu0 0
    %2007 = vmatprep.subr.bf16.mxu0 0
    %2008 = vmatpush1.bf16.msra.mxu0 0
    %2009 = vmatprep.subr.bf16.mxu0 0
    %2010 = vmatpush1.bf16.msra.mxu0 0
    %2011 = vmatprep.subr.bf16.mxu0 0
    %2012 = vmatpush1.bf16.msra.mxu0 0
    %2013 = vmatprep.subr.bf16.mxu0 0
    %2014 = vmatpush1.bf16.msra.mxu0 0
    %2015 = vmatprep.subr.bf16.mxu0 0
    %2016 = vmatpush1.bf16.msra.mxu0 0
    %2017 = vmatprep.subr.bf16.mxu0 0
    %2018 = vmatpush1.bf16.msra.mxu0 0
    %2019 = vmatprep.subr.bf16.mxu0 0
    %2020 = vmatpush1.bf16.msra.mxu0 0
    %2021 = vmatprep.subr.bf16.mxu0 0
    %2022 = vmatpush1.bf16.msra.mxu0 0
    %2023 = vmatprep.subr.bf16.mxu0 0
    %2024 = vmatpush1.bf16.msra.mxu0 0
    %2025 = vmatprep.subr.bf16.mxu0 0
    %2026 = vmatpush1.bf16.msra.mxu0 0
    %2027 = vmatprep.subr.bf16.mxu0 0
    %2028 = vmatpush1.bf16.msra.mxu0 0
    %2029 = vmatprep.subr.bf16.mxu0 0
    %2030 = vmatpush1.bf16.msra.mxu0 0
    %2031 = vmatprep.subr.bf16.mxu0 0
    %2032 = vmatpush1.bf16.msra.mxu0 0
    %2033 = vmatprep.subr.bf16.mxu0 0
    %2034 = vmatpush1.bf16.msra.mxu0 0
    %2035 = vmatprep.mubr.bf16.mxu0 0
    %2036 = vmatmul.mubr.bf16.gmra.mrb[0].mxu0 %v1872
    %v2037 = vpop.f32.mrb[0].mxu0
    %v2038 = vadd.f32 %v1995, %v2037
    %v2039 = vpop.f32.mrb[0].mxu0
    %v2040 = vadd.f32 %v1997, %v2039
    %v2041 = vpop.f32.mrb[0].mxu0
    %v2042 = vadd.f32 %v1999, %v2041
    %v2043 = vpop.f32.mrb[0].mxu0
    %v2044 = vadd.f32 %v2001, %v2043
    %2045 = vdwg.mxu0
    %2046 = vmatprep.subr.bf16.mxu0 %v1383
    %2047 = vmatpush1.bf16.msra.mxu0 %v1382
    %2048 = vmatprep.subr.bf16.mxu0 %v1388
    %2049 = vmatpush1.bf16.msra.mxu0 %v1387
    %2050 = vmatprep.subr.bf16.mxu0 %v1393
    %2051 = vmatpush1.bf16.msra.mxu0 %v1392
    %2052 = vmatprep.subr.bf16.mxu0 %v1398
    %2053 = vmatpush1.bf16.msra.mxu0 %v1397
    %2054 = vmatprep.subr.bf16.mxu0 %v1403
    %2055 = vmatpush1.bf16.msra.mxu0 %v1402
    %2056 = vmatprep.subr.bf16.mxu0 %v1408
    %2057 = vmatpush1.bf16.msra.mxu0 %v1407
    %2058 = vmatprep.subr.bf16.mxu0 %v1413
    %2059 = vmatpush1.bf16.msra.mxu0 %v1412
    %2060 = vmatprep.subr.bf16.mxu0 %v1418
    %2061 = vmatpush1.bf16.msra.mxu0 %v1417
    %2062 = vmatprep.subr.bf16.mxu0 %v1423
    %2063 = vmatpush1.bf16.msra.mxu0 %v1422
    %2064 = vmatprep.subr.bf16.mxu0 %v1428
    %2065 = vmatpush1.bf16.msra.mxu0 %v1427
    %2066 = vmatprep.subr.bf16.mxu0 %v1433
    %2067 = vmatpush1.bf16.msra.mxu0 %v1432
    %2068 = vmatprep.subr.bf16.mxu0 %v1438
    %2069 = vmatpush1.bf16.msra.mxu0 %v1437
    %2070 = vmatprep.subr.bf16.mxu0 %v1443
    %2071 = vmatpush1.bf16.msra.mxu0 %v1442
    %2072 = vmatprep.subr.bf16.mxu0 %v1448
    %2073 = vmatpush1.bf16.msra.mxu0 %v1447
    %2074 = vmatprep.subr.bf16.mxu0 %v1453
    %2075 = vmatpush1.bf16.msra.mxu0 %v1452
    %2076 = vmatprep.subr.bf16.mxu0 %v1458
    %2077 = vmatpush1.bf16.msra.mxu0 %v1457
    %2078 = vmatprep.mubr.bf16.mxu0 %v269
    %2079 = vmatmul.mubr.bf16.gmra.mrb[0].mxu0 %v268
    %v2080 = vpop.f32.mrb[0].mxu0
    %v2081 = vadd.f32 %v582, %v2080
    %v2082 = vpop.f32.mrb[0].mxu0
    %v2083 = vadd.f32 %v586, %v2082
    %v2084 = vpop.f32.mrb[0].mxu0
    %v2085 = vadd.f32 %v582, %v2084
    %v2086 = vpop.f32.mrb[0].mxu0
    %v2087 = vadd.f32 %v586, %v2086
    %2088 = vdwg.mxu0
    %2089 = vmatprep.subr.bf16.mxu0 %v1463
    %2090 = vmatpush1.bf16.msra.mxu0 %v1462
    %2091 = vmatprep.subr.bf16.mxu0 %v1468
    %2092 = vmatpush1.bf16.msra.mxu0 %v1467
    %2093 = vmatprep.subr.bf16.mxu0 %v1473
    %2094 = vmatpush1.bf16.msra.mxu0 %v1472
    %2095 = vmatprep.subr.bf16.mxu0 %v1478
    %2096 = vmatpush1.bf16.msra.mxu0 %v1477
    %2097 = vmatprep.subr.bf16.mxu0 %v1483
    %2098 = vmatpush1.bf16.msra.mxu0 %v1482
    %2099 = vmatprep.subr.bf16.mxu0 %v1488
    %2100 = vmatpush1.bf16.msra.mxu0 %v1487
    %2101 = vmatprep.subr.bf16.mxu0 %v1493
    %2102 = vmatpush1.bf16.msra.mxu0 %v1492
    %2103 = vmatprep.subr.bf16.mxu0 %v1498
    %2104 = vmatpush1.bf16.msra.mxu0 %v1497
    %2105 = vmatprep.subr.bf16.mxu0 %v1503
    %2106 = vmatpush1.bf16.msra.mxu0 %v1502
    %2107 = vmatprep.subr.bf16.mxu0 %v1508
    %2108 = vmatpush1.bf16.msra.mxu0 %v1507
    %2109 = vmatprep.subr.bf16.mxu0 %v1513
    %2110 = vmatpush1.bf16.msra.mxu0 %v1512
    %2111 = vmatprep.subr.bf16.mxu0 %v1518
    %2112 = vmatpush1.bf16.msra.mxu0 %v1517
    %2113 = vmatprep.subr.bf16.mxu0 %v1523
    %2114 = vmatpush1.bf16.msra.mxu0 %v1522
    %2115 = vmatprep.subr.bf16.mxu0 %v1528
    %2116 = vmatpush1.bf16.msra.mxu0 %v1527
    %2117 = vmatprep.subr.bf16.mxu0 %v1533
    %2118 = vmatpush1.bf16.msra.mxu0 %v1532
    %2119 = vmatprep.subr.bf16.mxu0 %v1538
    %2120 = vmatpush1.bf16.msra.mxu0 %v1537
    %2121 = vmatprep.mubr.bf16.mxu0 %v271
    %2122 = vmatmul.mubr.bf16.gmra.mrb[0].mxu0 %v270
    %v2123 = vpop.f32.mrb[0].mxu0
    %v2124 = vadd.f32 %v2081, %v2123
    %v2125 = vpop.f32.mrb[0].mxu0
    %v2126 = vadd.f32 %v2083, %v2125
    %v2127 = vpop.f32.mrb[0].mxu0
    %v2128 = vadd.f32 %v2085, %v2127
    %v2129 = vpop.f32.mrb[0].mxu0
    %v2130 = vadd.f32 %v2087, %v2129
    %2131 = vdwg.mxu0
    %2132 = vmatprep.subr.bf16.mxu0 %v1543
    %2133 = vmatpush1.bf16.msra.mxu0 %v1542
    %2134 = vmatprep.subr.bf16.mxu0 %v1548
    %2135 = vmatpush1.bf16.msra.mxu0 %v1547
    %2136 = vmatprep.subr.bf16.mxu0 %v1553
    %2137 = vmatpush1.bf16.msra.mxu0 %v1552
    %2138 = vmatprep.subr.bf16.mxu0 %v1558
    %2139 = vmatpush1.bf16.msra.mxu0 %v1557
    %2140 = vmatprep.subr.bf16.mxu0 %v1563
    %2141 = vmatpush1.bf16.msra.mxu0 %v1562
    %2142 = vmatprep.subr.bf16.mxu0 %v1568
    %2143 = vmatpush1.bf16.msra.mxu0 %v1567
    %2144 = vmatprep.subr.bf16.mxu0 %v1573
    %2145 = vmatpush1.bf16.msra.mxu0 %v1572
    %2146 = vmatprep.subr.bf16.mxu0 %v1578
    %2147 = vmatpush1.bf16.msra.mxu0 %v1577
    %2148 = vmatprep.subr.bf16.mxu0 %v1583
    %2149 = vmatpush1.bf16.msra.mxu0 %v1582
    %2150 = vmatprep.subr.bf16.mxu0 %v1588
    %2151 = vmatpush1.bf16.msra.mxu0 %v1587
    %2152 = vmatprep.subr.bf16.mxu0 %v1593
    %2153 = vmatpush1.bf16.msra.mxu0 %v1592
    %2154 = vmatprep.subr.bf16.mxu0 %v1598
    %2155 = vmatpush1.bf16.msra.mxu0 %v1597
    %2156 = vmatprep.subr.bf16.mxu0 %v1603
    %2157 = vmatpush1.bf16.msra.mxu0 %v1602
    %2158 = vmatprep.subr.bf16.mxu0 %v1608
    %2159 = vmatpush1.bf16.msra.mxu0 %v1607
    %2160 = vmatprep.subr.bf16.mxu0 %v1613
    %2161 = vmatpush1.bf16.msra.mxu0 %v1612
    %2162 = vmatprep.subr.bf16.mxu0 %v1618
    %2163 = vmatpush1.bf16.msra.mxu0 %v1617
    %2164 = vmatprep.mubr.bf16.mxu0 %v273
    %2165 = vmatmul.mubr.bf16.gmra.mrb[0].mxu0 %v272
    %v2166 = vpop.f32.mrb[0].mxu0
    %v2167 = vadd.f32 %v2124, %v2166
    %v2168 = vpop.f32.mrb[0].mxu0
    %v2169 = vadd.f32 %v2126, %v2168
    %v2170 = vpop.f32.mrb[0].mxu0
    %v2171 = vadd.f32 %v2128, %v2170
    %v2172 = vpop.f32.mrb[0].mxu0
    %v2173 = vadd.f32 %v2130, %v2172
    %2174 = vdwg.mxu0
    %2175 = vmatprep.subr.bf16.mxu0 %v1623
    %2176 = vmatpush1.bf16.msra.mxu0 %v1622
    %2177 = vmatprep.subr.bf16.mxu0 0
    %2178 = vmatpush1.bf16.msra.mxu0 0
    %2179 = vmatprep.subr.bf16.mxu0 0
    %2180 = vmatpush1.bf16.msra.mxu0 0
    %2181 = vmatprep.subr.bf16.mxu0 0
    %2182 = vmatpush1.bf16.msra.mxu0 0
    %2183 = vmatprep.subr.bf16.mxu0 0
    %2184 = vmatpush1.bf16.msra.mxu0 0
    %2185 = vmatprep.subr.bf16.mxu0 0
    %2186 = vmatpush1.bf16.msra.mxu0 0
    %2187 = vmatprep.subr.bf16.mxu0 0
    %2188 = vmatpush1.bf16.msra.mxu0 0
    %2189 = vmatprep.subr.bf16.mxu0 0
    %2190 = vmatpush1.bf16.msra.mxu0 0
    %2191 = vmatprep.subr.bf16.mxu0 0
    %2192 = vmatpush1.bf16.msra.mxu0 0
    %2193 = vmatprep.subr.bf16.mxu0 0
    %2194 = vmatpush1.bf16.msra.mxu0 0
    %2195 = vmatprep.subr.bf16.mxu0 0
    %2196 = vmatpush1.bf16.msra.mxu0 0
    %2197 = vmatprep.subr.bf16.mxu0 0
    %2198 = vmatpush1.bf16.msra.mxu0 0
    %2199 = vmatprep.subr.bf16.mxu0 0
    %2200 = vmatpush1.bf16.msra.mxu0 0
    %2201 = vmatprep.subr.bf16.mxu0 0
    %2202 = vmatpush1.bf16.msra.mxu0 0
    %2203 = vmatprep.subr.bf16.mxu0 0
    %2204 = vmatpush1.bf16.msra.mxu0 0
    %2205 = vmatprep.subr.bf16.mxu0 0
    %2206 = vmatpush1.bf16.msra.mxu0 0
    %2207 = vmatprep.mubr.bf16.mxu0 0
    %2208 = vmatmul.mubr.bf16.gmra.mrb[0].mxu0 %v1872
    %v2209 = vpop.f32.mrb[0].mxu0
    %v2210 = vadd.f32 %v2167, %v2209
    %v2211 = vpop.f32.mrb[0].mxu0
    %v2212 = vadd.f32 %v2169, %v2211
    %v2213 = vpop.f32.mrb[0].mxu0
    %v2214 = vadd.f32 %v2171, %v2213
    %v2215 = vpop.f32.mrb[0].mxu0
    %v2216 = vadd.f32 %v2173, %v2215
    %2217 = vdwg.mxu0
    %2218 = vmatprep.subr.bf16.mxu0 0
    %2219 = vmatpush1.bf16.msra.mxu0 %v1384
    %2220 = vmatprep.subr.bf16.mxu0 0
    %2221 = vmatpush1.bf16.msra.mxu0 %v1389
    %2222 = vmatprep.subr.bf16.mxu0 0
    %2223 = vmatpush1.bf16.msra.mxu0 %v1394
    %2224 = vmatprep.subr.bf16.mxu0 0
    %2225 = vmatpush1.bf16.msra.mxu0 %v1399
    %2226 = vmatprep.subr.bf16.mxu0 0
    %2227 = vmatpush1.bf16.msra.mxu0 %v1404
    %2228 = vmatprep.subr.bf16.mxu0 0
    %2229 = vmatpush1.bf16.msra.mxu0 %v1409
    %2230 = vmatprep.subr.bf16.mxu0 0
    %2231 = vmatpush1.bf16.msra.mxu0 %v1414
    %2232 = vmatprep.subr.bf16.mxu0 0
    %2233 = vmatpush1.bf16.msra.mxu0 %v1419
    %2234 = vmatprep.subr.bf16.mxu0 0
    %2235 = vmatpush1.bf16.msra.mxu0 %v1424
    %2236 = vmatprep.subr.bf16.mxu0 0
    %2237 = vmatpush1.bf16.msra.mxu0 %v1429
    %2238 = vmatprep.subr.bf16.mxu0 0
    %2239 = vmatpush1.bf16.msra.mxu0 %v1434
    %2240 = vmatprep.subr.bf16.mxu0 0
    %2241 = vmatpush1.bf16.msra.mxu0 %v1439
    %2242 = vmatprep.subr.bf16.mxu0 0
    %2243 = vmatpush1.bf16.msra.mxu0 %v1444
    %2244 = vmatprep.subr.bf16.mxu0 0
    %2245 = vmatpush1.bf16.msra.mxu0 %v1449
    %2246 = vmatprep.subr.bf16.mxu0 0
    %2247 = vmatpush1.bf16.msra.mxu0 %v1454
    %2248 = vmatprep.subr.bf16.mxu0 0
    %2249 = vmatpush1.bf16.msra.mxu0 %v1459
    %2250 = vmatprep.mubr.bf16.mxu0 %v269
    %2251 = vmatmul.mubr.bf16.gmra.mrb[0].mxu0 %v268
    %v2252 = vpop.f32.mrb[0].mxu0
    %v2253 = vadd.f32 %v590, %v2252
    %v2254 = vpop.f32.mrb[0].mxu0
    %v2255 = vpop.f32.mrb[0].mxu0
    %v2256 = vadd.f32 %v590, %v2255
    %v2257 = vpop.f32.mrb[0].mxu0
    %2258 = vdwg.mxu0
    %2259 = vmatprep.subr.bf16.mxu0 0
    %2260 = vmatpush1.bf16.msra.mxu0 %v1464
    %2261 = vmatprep.subr.bf16.mxu0 0
    %2262 = vmatpush1.bf16.msra.mxu0 %v1469
    %2263 = vmatprep.subr.bf16.mxu0 0
    %2264 = vmatpush1.bf16.msra.mxu0 %v1474
    %2265 = vmatprep.subr.bf16.mxu0 0
    %2266 = vmatpush1.bf16.msra.mxu0 %v1479
    %2267 = vmatprep.subr.bf16.mxu0 0
    %2268 = vmatpush1.bf16.msra.mxu0 %v1484
    %2269 = vmatprep.subr.bf16.mxu0 0
    %2270 = vmatpush1.bf16.msra.mxu0 %v1489
    %2271 = vmatprep.subr.bf16.mxu0 0
    %2272 = vmatpush1.bf16.msra.mxu0 %v1494
    %2273 = vmatprep.subr.bf16.mxu0 0
    %2274 = vmatpush1.bf16.msra.mxu0 %v1499
    %2275 = vmatprep.subr.bf16.mxu0 0
    %2276 = vmatpush1.bf16.msra.mxu0 %v1504
    %2277 = vmatprep.subr.bf16.mxu0 0
    %2278 = vmatpush1.bf16.msra.mxu0 %v1509
    %2279 = vmatprep.subr.bf16.mxu0 0
    %2280 = vmatpush1.bf16.msra.mxu0 %v1514
    %2281 = vmatprep.subr.bf16.mxu0 0
    %2282 = vmatpush1.bf16.msra.mxu0 %v1519
    %2283 = vmatprep.subr.bf16.mxu0 0
    %2284 = vmatpush1.bf16.msra.mxu0 %v1524
    %2285 = vmatprep.subr.bf16.mxu0 0
    %2286 = vmatpush1.bf16.msra.mxu0 %v1529
    %2287 = vmatprep.subr.bf16.mxu0 0
    %2288 = vmatpush1.bf16.msra.mxu0 %v1534
    %2289 = vmatprep.subr.bf16.mxu0 0
    %2290 = vmatpush1.bf16.msra.mxu0 %v1539
    %2291 = vmatprep.mubr.bf16.mxu0 %v271
    %2292 = vmatmul.mubr.bf16.gmra.mrb[0].mxu0 %v270
    %v2293 = vpop.f32.mrb[0].mxu0
    %v2294 = vadd.f32 %v2253, %v2293
    %v2295 = vpop.f32.mrb[0].mxu0
    %v2296 = vpop.f32.mrb[0].mxu0
    %v2297 = vadd.f32 %v2256, %v2296
    %v2298 = vpop.f32.mrb[0].mxu0
    %2299 = vdwg.mxu0
    %2300 = vmatprep.subr.bf16.mxu0 0
    %2301 = vmatpush1.bf16.msra.mxu0 %v1544
    %2302 = vmatprep.subr.bf16.mxu0 0
    %2303 = vmatpush1.bf16.msra.mxu0 %v1549
    %2304 = vmatprep.subr.bf16.mxu0 0
    %2305 = vmatpush1.bf16.msra.mxu0 %v1554
    %2306 = vmatprep.subr.bf16.mxu0 0
    %2307 = vmatpush1.bf16.msra.mxu0 %v1559
    %2308 = vmatprep.subr.bf16.mxu0 0
    %2309 = vmatpush1.bf16.msra.mxu0 %v1564
    %2310 = vmatprep.subr.bf16.mxu0 0
    %2311 = vmatpush1.bf16.msra.mxu0 %v1569
    %2312 = vmatprep.subr.bf16.mxu0 0
    %2313 = vmatpush1.bf16.msra.mxu0 %v1574
    %2314 = vmatprep.subr.bf16.mxu0 0
    %2315 = vmatpush1.bf16.msra.mxu0 %v1579
    %2316 = vmatprep.subr.bf16.mxu0 0
    %2317 = vmatpush1.bf16.msra.mxu0 %v1584
    %2318 = vmatprep.subr.bf16.mxu0 0
    %2319 = vmatpush1.bf16.msra.mxu0 %v1589
    %2320 = vmatprep.subr.bf16.mxu0 0
    %2321 = vmatpush1.bf16.msra.mxu0 %v1594
    %2322 = vmatprep.subr.bf16.mxu0 0
    %2323 = vmatpush1.bf16.msra.mxu0 %v1599
    %2324 = vmatprep.subr.bf16.mxu0 0
    %2325 = vmatpush1.bf16.msra.mxu0 %v1604
    %2326 = vmatprep.subr.bf16.mxu0 0
    %2327 = vmatpush1.bf16.msra.mxu0 %v1609
    %2328 = vmatprep.subr.bf16.mxu0 0
    %2329 = vmatpush1.bf16.msra.mxu0 %v1614
    %2330 = vmatprep.subr.bf16.mxu0 0
    %2331 = vmatpush1.bf16.msra.mxu0 %v1619
    %2332 = vmatprep.mubr.bf16.mxu0 %v273
    %2333 = vmatmul.mubr.bf16.gmra.mrb[0].mxu0 %v272
    %v2334 = vpop.f32.mrb[0].mxu0
    %v2335 = vadd.f32 %v2294, %v2334
    %v2336 = vpop.f32.mrb[0].mxu0
    %v2337 = vpop.f32.mrb[0].mxu0
    %v2338 = vadd.f32 %v2297, %v2337
    %v2339 = vpop.f32.mrb[0].mxu0
    %2340 = vdwg.mxu0
    %2341 = vmatprep.subr.bf16.mxu0 0
    %2342 = vmatpush1.bf16.msra.mxu0 %v1624
    %2343 = vmatprep.subr.bf16.mxu0 0
    %2344 = vmatpush1.bf16.msra.mxu0 0
    %2345 = vmatprep.subr.bf16.mxu0 0
    %2346 = vmatpush1.bf16.msra.mxu0 0
    %2347 = vmatprep.subr.bf16.mxu0 0
    %2348 = vmatpush1.bf16.msra.mxu0 0
    %2349 = vmatprep.subr.bf16.mxu0 0
    %2350 = vmatpush1.bf16.msra.mxu0 0
    %2351 = vmatprep.subr.bf16.mxu0 0
    %2352 = vmatpush1.bf16.msra.mxu0 0
    %2353 = vmatprep.subr.bf16.mxu0 0
    %2354 = vmatpush1.bf16.msra.mxu0 0
    %2355 = vmatprep.subr.bf16.mxu0 0
    %2356 = vmatpush1.bf16.msra.mxu0 0
    %2357 = vmatprep.subr.bf16.mxu0 0
    %2358 = vmatpush1.bf16.msra.mxu0 0
    %2359 = vmatprep.subr.bf16.mxu0 0
    %2360 = vmatpush1.bf16.msra.mxu0 0
    %2361 = vmatprep.subr.bf16.mxu0 0
    %2362 = vmatpush1.bf16.msra.mxu0 0
    %2363 = vmatprep.subr.bf16.mxu0 0
    %2364 = vmatpush1.bf16.msra.mxu0 0
    %2365 = vmatprep.subr.bf16.mxu0 0
    %2366 = vmatpush1.bf16.msra.mxu0 0
    %2367 = vmatprep.subr.bf16.mxu0 0
    %2368 = vmatpush1.bf16.msra.mxu0 0
    %2369 = vmatprep.subr.bf16.mxu0 0
    %2370 = vmatpush1.bf16.msra.mxu0 0
    %2371 = vmatprep.subr.bf16.mxu0 0
    %2372 = vmatpush1.bf16.msra.mxu0 0
    %2373 = vmatprep.mubr.bf16.mxu0 0
    %2374 = vmatmul.mubr.bf16.gmra.mrb[0].mxu0 %v1872
    %v2375 = vpop.f32.mrb[0].mxu0
    %v2376 = vadd.f32 %v2335, %v2375
    %v2377 = vpop.f32.mrb[0].mxu0
    %v2378 = vpop.f32.mrb[0].mxu0
    %v2379 = vadd.f32 %v2338, %v2378
    %v2380 = vpop.f32.mrb[0].mxu0
    %2381 = vdwg.mxu0
    %v2382 = vmax.f32 %v2038, 0.0
    %v2383 = vmax.f32 %v2040, 0.0
    %v2384 = vmax.f32 %v2210, 0.0
    %v2385 = vmax.f32 %v2212, 0.0
    %v2386 = vmax.f32 %v2376, 0.0
    %v2387 = vmax.f32 %v2042, 0.0
    %v2388 = vmax.f32 %v2044, 0.0
    %v2389 = vmax.f32 %v2214, 0.0
    %v2390 = vmax.f32 %v2216, 0.0
    %v2391 = vmax.f32 %v2379, 0.0
    %v2392 = vpack.c.bf16 %v2387, %v2382
    %v2393 = vpack.c.bf16 %v2388, %v2383
    %v2394 = vpack.c.bf16 %v2389, %v2384
    %v2395 = vpack.c.bf16 %v2390, %v2385
    %v2396 = vpack.c.bf16 %v2391, %v2386
    %v2397 = vld [vmem:[#allocation4] sm:$0xff]
    %v2398 = vld [vmem:[#allocation4 + $0x8] sm:$0xf]
    %v2399 = vld [vmem:[#allocation4 + $0xc] sm:$0xff]
    %v2400 = vld [vmem:[#allocation4 + $0x14] sm:$0xf]
    %v2401 = vld [vmem:[#allocation4 + $0x18] sm:$0xff]
    %v2402 = vld [vmem:[#allocation4 + $0x20] sm:$0xf]
    %v2403 = vld [vmem:[#allocation4 + $0x24] sm:$0xff]
    %v2404 = vld [vmem:[#allocation4 + $0x2c] sm:$0xf]
    %v2405 = vld [vmem:[#allocation4 + $0x30] sm:$0xff]
    %v2406 = vld [vmem:[#allocation4 + $0x38] sm:$0xf]
    %v2407 = vld [vmem:[#allocation4 + $0x3c] sm:$0xff]
    %v2408 = vld [vmem:[#allocation4 + $0x44] sm:$0xf]
    %v2409 = vld [vmem:[#allocation4 + $0x48] sm:$0xff]
    %v2410 = vld [vmem:[#allocation4 + $0x50] sm:$0xf]
    %v2411 = vld [vmem:[#allocation4 + $0x54] sm:$0xff]
    %v2412 = vld [vmem:[#allocation4 + $0x5c] sm:$0xf]
    %v2413 = vld [vmem:[#allocation4 + $0x60] sm:$0xff]
    %v2414 = vld [vmem:[#allocation4 + $0x68] sm:$0xf]
    %v2415 = vld [vmem:[#allocation4 + $0x6c] sm:$0xff]
    %v2416 = vld [vmem:[#allocation4 + $0x74] sm:$0xf]
    %v2417 = vld [vmem:[#allocation4 + $0x78] sm:$0xff]
    %v2418 = vld [vmem:[#allocation4 + $0x80] sm:$0xf]
    %v2419 = vld [vmem:[#allocation4 + $0x84] sm:$0xff]
    %v2420 = vld [vmem:[#allocation4 + $0x8c] sm:$0xf]
    %v2421 = vld [vmem:[#allocation4 + $0x90] sm:$0xff]
    %v2422 = vld [vmem:[#allocation4 + $0x98] sm:$0xf]
    %v2423 = vld [vmem:[#allocation4 + $0x9c] sm:$0xff]
    %v2424 = vld [vmem:[#allocation4 + $0xa4] sm:$0xf]
    %v2425 = vld [vmem:[#allocation4 + $0xa8] sm:$0xff]
    %v2426 = vld [vmem:[#allocation4 + $0xb0] sm:$0xf]
    %v2427 = vld [vmem:[#allocation4 + $0xb4] sm:$0xff]
    %v2428 = vld [vmem:[#allocation4 + $0xbc] sm:$0xf]
    %v2429 = vld [vmem:[#allocation4 + $0xc0] sm:$0xff]
    %v2430 = vld [vmem:[#allocation4 + $0xc8] sm:$0xf]
    %v2431 = vld [vmem:[#allocation4 + $0xcc] sm:$0xff]
    %v2432 = vld [vmem:[#allocation4 + $0xd4] sm:$0xf]
    %v2433 = vld [vmem:[#allocation4 + $0xd8] sm:$0xff]
    %v2434 = vld [vmem:[#allocation4 + $0xe0] sm:$0xf]
    %v2435 = vld [vmem:[#allocation4 + $0xe4] sm:$0xff]
    %v2436 = vld [vmem:[#allocation4 + $0xec] sm:$0xf]
    %v2437 = vld [vmem:[#allocation4 + $0xf0] sm:$0xff]
    %v2438 = vld [vmem:[#allocation4 + $0xf8] sm:$0xf]
    %v2439 = vld [vmem:[#allocation4 + $0xfc] sm:$0xff]
    %v2440 = vld [vmem:[#allocation4 + $0x104] sm:$0xf]
    %v2441 = vld [vmem:[#allocation4 + $0x108] sm:$0xff]
    %v2442 = vld [vmem:[#allocation4 + $0x110] sm:$0xf]
    %v2443 = vld [vmem:[#allocation4 + $0x114] sm:$0xff]
    %v2444 = vld [vmem:[#allocation4 + $0x11c] sm:$0xf]
    %v2445 = vld [vmem:[#allocation4 + $0x120] sm:$0xff]
    %v2446 = vld [vmem:[#allocation4 + $0x128] sm:$0xf]
    %v2447 = vld [vmem:[#allocation4 + $0x12c] sm:$0xff]
    %v2448 = vld [vmem:[#allocation4 + $0x134] sm:$0xf]
    %v2449 = vld [vmem:[#allocation4 + $0x138] sm:$0xff]
    %v2450 = vld [vmem:[#allocation4 + $0x140] sm:$0xf]
    %v2451 = vld [vmem:[#allocation4 + $0x144] sm:$0xff]
    %v2452 = vld [vmem:[#allocation4 + $0x14c] sm:$0xf]
    %v2453 = vld [vmem:[#allocation4 + $0x150] sm:$0xff]
    %v2454 = vld [vmem:[#allocation4 + $0x158] sm:$0xf]
    %v2455 = vld [vmem:[#allocation4 + $0x15c] sm:$0xff]
    %v2456 = vld [vmem:[#allocation4 + $0x164] sm:$0xf]
    %v2457 = vld [vmem:[#allocation4 + $0x168] sm:$0xff]
    %v2458 = vld [vmem:[#allocation4 + $0x170] sm:$0xf]
    %v2459 = vld [vmem:[#allocation4 + $0x174] sm:$0xff]
    %v2460 = vld [vmem:[#allocation4 + $0x17c] sm:$0xf]
    %v2461 = vld [vmem:[#allocation4 + $0x180] sm:$0xff]
    %v2462 = vld [vmem:[#allocation4 + $0x188] sm:$0xf]
    %v2463 = vld [vmem:[#allocation4 + $0x18c] sm:$0xff]
    %v2464 = vld [vmem:[#allocation4 + $0x194] sm:$0xf]
    %v2465 = vld [vmem:[#allocation4 + $0x198] sm:$0xff]
    %v2466 = vld [vmem:[#allocation4 + $0x1a0] sm:$0xf]
    %v2467 = vld [vmem:[#allocation4 + $0x1a4] sm:$0xff]
    %v2468 = vld [vmem:[#allocation4 + $0x1ac] sm:$0xf]
    %v2469 = vld [vmem:[#allocation4 + $0x1b0] sm:$0xff]
    %v2470 = vld [vmem:[#allocation4 + $0x1b8] sm:$0xf]
    %v2471 = vld [vmem:[#allocation4 + $0x1bc] sm:$0xff]
    %v2472 = vld [vmem:[#allocation4 + $0x1c4] sm:$0xf]
    %v2473 = vld [vmem:[#allocation4 + $0x1c8] sm:$0xff]
    %v2474 = vld [vmem:[#allocation4 + $0x1d0] sm:$0xf]
    %v2475 = vld [vmem:[#allocation4 + $0x1d4] sm:$0xff]
    %v2476 = vld [vmem:[#allocation4 + $0x1dc] sm:$0xf]
    %v2477 = vld [vmem:[#allocation4 + $0x1e0] sm:$0xff]
    %v2478 = vld [vmem:[#allocation4 + $0x1e8] sm:$0xf]
    %v2479 = vld [vmem:[#allocation4 + $0x1ec] sm:$0xff]
    %v2480 = vld [vmem:[#allocation4 + $0x1f4] sm:$0xf]
    %v2481 = vld [vmem:[#allocation4 + $0x1f8] sm:$0xff]
    %v2482 = vld [vmem:[#allocation4 + $0x200] sm:$0xf]
    %v2483 = vld [vmem:[#allocation4 + $0x204] sm:$0xff]
    %v2484 = vld [vmem:[#allocation4 + $0x20c] sm:$0xf]
    %v2485 = vld [vmem:[#allocation4 + $0x210] sm:$0xff]
    %v2486 = vld [vmem:[#allocation4 + $0x218] sm:$0xf]
    %v2487 = vld [vmem:[#allocation4 + $0x21c] sm:$0xff]
    %v2488 = vld [vmem:[#allocation4 + $0x224] sm:$0xf]
    %v2489 = vld [vmem:[#allocation4 + $0x228] sm:$0xff]
    %v2490 = vld [vmem:[#allocation4 + $0x230] sm:$0xf]
    %v2491 = vld [vmem:[#allocation4 + $0x234] sm:$0xff]
    %v2492 = vld [vmem:[#allocation4 + $0x23c] sm:$0xf]
    %v2493 = vld [vmem:[#allocation4 + $0x240] sm:$0xff]
    %v2494 = vld [vmem:[#allocation4 + $0x248] sm:$0xf]
    %v2495 = vld [vmem:[#allocation4 + $0x24c] sm:$0xff]
    %v2496 = vld [vmem:[#allocation4 + $0x254] sm:$0xf]
    %v2497 = vld [vmem:[#allocation4 + $0x258] sm:$0xff]
    %v2498 = vld [vmem:[#allocation4 + $0x260] sm:$0xf]
    %v2499 = vld [vmem:[#allocation4 + $0x264] sm:$0xff]
    %v2500 = vld [vmem:[#allocation4 + $0x26c] sm:$0xf]
    %v2501 = vld [vmem:[#allocation4 + $0x270] sm:$0xff]
    %v2502 = vld [vmem:[#allocation4 + $0x278] sm:$0xf]
    %v2503 = vld [vmem:[#allocation4 + $0x27c] sm:$0xff]
    %v2504 = vld [vmem:[#allocation4 + $0x284] sm:$0xf]
    %v2505 = vld [vmem:[#allocation4 + $0x288] sm:$0xff]
    %v2506 = vld [vmem:[#allocation4 + $0x290] sm:$0xf]
    %v2507 = vld [vmem:[#allocation4 + $0x294] sm:$0xff]
    %v2508 = vld [vmem:[#allocation4 + $0x29c] sm:$0xf]
    %v2509 = vld [vmem:[#allocation4 + $0x2a0] sm:$0xff]
    %v2510 = vld [vmem:[#allocation4 + $0x2a8] sm:$0xf]
    %v2511 = vld [vmem:[#allocation4 + $0x2ac] sm:$0xff]
    %v2512 = vld [vmem:[#allocation4 + $0x2b4] sm:$0xf]
    %v2513 = vld [vmem:[#allocation4 + $0x2b8] sm:$0xff]
    %v2514 = vld [vmem:[#allocation4 + $0x2c0] sm:$0xf]
    %v2515 = vld [vmem:[#allocation4 + $0x2c4] sm:$0xff]
    %v2516 = vld [vmem:[#allocation4 + $0x2cc] sm:$0xf]
    %v2517 = vld [vmem:[#allocation4 + $0x2d0] sm:$0xff]
    %v2518 = vld [vmem:[#allocation4 + $0x2d8] sm:$0xf]
    %v2519 = vld [vmem:[#allocation4 + $0x2dc] sm:$0xff]
    %v2520 = vld [vmem:[#allocation4 + $0x2e4] sm:$0xf]
    %v2521 = vld [vmem:[#allocation4 + $0x2e8] sm:$0xff]
    %v2522 = vld [vmem:[#allocation4 + $0x2f0] sm:$0xf]
    %v2523 = vld [vmem:[#allocation4 + $0x2f4] sm:$0xff]
    %v2524 = vld [vmem:[#allocation4 + $0x2fc] sm:$0xf]
    %v2525 = vld [vmem:[#allocation4 + $0x300] sm:$0xff]
    %v2526 = vld [vmem:[#allocation4 + $0x308] sm:$0xf]
    %v2527 = vld [vmem:[#allocation4 + $0x30c] sm:$0xff]
    %v2528 = vld [vmem:[#allocation4 + $0x314] sm:$0xf]
    %v2529 = vld [vmem:[#allocation4 + $0x318] sm:$0xff]
    %v2530 = vld [vmem:[#allocation4 + $0x320] sm:$0xf]
    %v2531 = vld [vmem:[#allocation4 + $0x324] sm:$0xff]
    %v2532 = vld [vmem:[#allocation4 + $0x32c] sm:$0xf]
    %v2533 = vld [vmem:[#allocation4 + $0x330] sm:$0xff]
    %v2534 = vld [vmem:[#allocation4 + $0x338] sm:$0xf]
    %v2535 = vld [vmem:[#allocation4 + $0x33c] sm:$0xff]
    %v2536 = vld [vmem:[#allocation4 + $0x344] sm:$0xf]
    %v2537 = vld [vmem:[#allocation4 + $0x348] sm:$0xff]
    %v2538 = vld [vmem:[#allocation4 + $0x350] sm:$0xf]
    %v2539 = vld [vmem:[#allocation4 + $0x354] sm:$0xff]
    %v2540 = vld [vmem:[#allocation4 + $0x35c] sm:$0xf]
    %v2541 = vld [vmem:[#allocation4 + $0x360] sm:$0xff]
    %v2542 = vld [vmem:[#allocation4 + $0x368] sm:$0xf]
    %v2543 = vld [vmem:[#allocation4 + $0x36c] sm:$0xff]
    %v2544 = vld [vmem:[#allocation4 + $0x374] sm:$0xf]
    %v2545 = vld [vmem:[#allocation4 + $0x378] sm:$0xff]
    %v2546 = vld [vmem:[#allocation4 + $0x380] sm:$0xf]
    %v2547 = vld [vmem:[#allocation4 + $0x384] sm:$0xff]
    %v2548 = vld [vmem:[#allocation4 + $0x38c] sm:$0xf]
    %v2549 = vld [vmem:[#allocation4 + $0x390] sm:$0xff]
    %v2550 = vld [vmem:[#allocation4 + $0x398] sm:$0xf]
    %v2551 = vld [vmem:[#allocation4 + $0x39c] sm:$0xff]
    %v2552 = vld [vmem:[#allocation4 + $0x3a4] sm:$0xf]
    %v2553 = vld [vmem:[#allocation4 + $0x3a8] sm:$0xff]
    %v2554 = vld [vmem:[#allocation4 + $0x3b0] sm:$0xf]
    %v2555 = vld [vmem:[#allocation4 + $0x3b4] sm:$0xff]
    %v2556 = vld [vmem:[#allocation4 + $0x3bc] sm:$0xf]
    %v2557 = vld [vmem:[%s4] sm:$0x7]
    %v2559 = vlaneseq
    %v2560 = vshrl.u32 %v2559, 7
    %v2561 = vsub.s32 0, %v2560
    %v2562 = vrot.slane %v2557, %v2561
    %v2563 = vlaneseq
    %v2564 = vshrl.u32 %v2563, 7
    %v2565 = vsub.s32 1, %v2564
    %v2566 = vrot.slane %v2557, %v2565
    %v2567 = vlaneseq
    %v2568 = vshrl.u32 %v2567, 7
    %v2569 = vsub.s32 2, %v2568
    %v2570 = vrot.slane %v2557, %v2569
    %v2734 = vunpack.c.l.b16 %v2397
    %v2735 = vunpack.c.h.b16 %v2397
    %v2736 = vunpack.c.l.b16 %v2398
    %v2737 = vunpack.c.l.b16 %v2399
    %v2738 = vunpack.c.h.b16 %v2399
    %v2739 = vunpack.c.l.b16 %v2400
    %v2740 = vunpack.c.l.b16 %v2401
    %v2741 = vunpack.c.h.b16 %v2401
    %v2742 = vunpack.c.l.b16 %v2402
    %v2743 = vunpack.c.l.b16 %v2403
    %v2744 = vunpack.c.h.b16 %v2403
    %v2745 = vunpack.c.l.b16 %v2404
    %v2746 = vunpack.c.l.b16 %v2405
    %v2747 = vunpack.c.h.b16 %v2405
    %v2748 = vunpack.c.l.b16 %v2406
    %v2749 = vunpack.c.l.b16 %v2407
    %v2750 = vunpack.c.h.b16 %v2407
    %v2751 = vunpack.c.l.b16 %v2408
    %v2752 = vunpack.c.l.b16 %v2409
    %v2753 = vunpack.c.h.b16 %v2409
    %v2754 = vunpack.c.l.b16 %v2410
    %v2755 = vunpack.c.l.b16 %v2411
    %v2756 = vunpack.c.h.b16 %v2411
    %v2757 = vunpack.c.l.b16 %v2412
    %v2758 = vunpack.c.l.b16 %v2413
    %v2759 = vunpack.c.h.b16 %v2413
    %v2760 = vunpack.c.l.b16 %v2414
    %v2761 = vunpack.c.l.b16 %v2415
    %v2762 = vunpack.c.h.b16 %v2415
    %v2763 = vunpack.c.l.b16 %v2416
    %v2764 = vunpack.c.l.b16 %v2417
    %v2765 = vunpack.c.h.b16 %v2417
    %v2766 = vunpack.c.l.b16 %v2418
    %v2767 = vunpack.c.l.b16 %v2419
    %v2768 = vunpack.c.h.b16 %v2419
    %v2769 = vunpack.c.l.b16 %v2420
    %v2770 = vunpack.c.l.b16 %v2421
    %v2771 = vunpack.c.h.b16 %v2421
    %v2772 = vunpack.c.l.b16 %v2422
    %v2773 = vunpack.c.l.b16 %v2423
    %v2774 = vunpack.c.h.b16 %v2423
    %v2775 = vunpack.c.l.b16 %v2424
    %v2776 = vunpack.c.l.b16 %v2425
    %v2777 = vunpack.c.h.b16 %v2425
    %v2778 = vunpack.c.l.b16 %v2426
    %v2779 = vunpack.c.l.b16 %v2427
    %v2780 = vunpack.c.h.b16 %v2427
    %v2781 = vunpack.c.l.b16 %v2428
    %v2782 = vunpack.c.l.b16 %v2429
    %v2783 = vunpack.c.h.b16 %v2429
    %v2784 = vunpack.c.l.b16 %v2430
    %v2785 = vunpack.c.l.b16 %v2431
    %v2786 = vunpack.c.h.b16 %v2431
    %v2787 = vunpack.c.l.b16 %v2432
    %v2788 = vunpack.c.l.b16 %v2433
    %v2789 = vunpack.c.h.b16 %v2433
    %v2790 = vunpack.c.l.b16 %v2434
    %v2791 = vunpack.c.l.b16 %v2435
    %v2792 = vunpack.c.h.b16 %v2435
    %v2793 = vunpack.c.l.b16 %v2436
    %v2794 = vunpack.c.l.b16 %v2437
    %v2795 = vunpack.c.h.b16 %v2437
    %v2796 = vunpack.c.l.b16 %v2438
    %v2797 = vunpack.c.l.b16 %v2439
    %v2798 = vunpack.c.h.b16 %v2439
    %v2799 = vunpack.c.l.b16 %v2440
    %v2800 = vunpack.c.l.b16 %v2441
    %v2801 = vunpack.c.h.b16 %v2441
    %v2802 = vunpack.c.l.b16 %v2442
    %v2803 = vunpack.c.l.b16 %v2443
    %v2804 = vunpack.c.h.b16 %v2443
    %v2805 = vunpack.c.l.b16 %v2444
    %v2806 = vunpack.c.l.b16 %v2445
    %v2807 = vunpack.c.h.b16 %v2445
    %v2808 = vunpack.c.l.b16 %v2446
    %v2809 = vunpack.c.l.b16 %v2447
    %v2810 = vunpack.c.h.b16 %v2447
    %v2811 = vunpack.c.l.b16 %v2448
    %v2812 = vunpack.c.l.b16 %v2449
    %v2813 = vunpack.c.h.b16 %v2449
    %v2814 = vunpack.c.l.b16 %v2450
    %v2815 = vunpack.c.l.b16 %v2451
    %v2816 = vunpack.c.h.b16 %v2451
    %v2817 = vunpack.c.l.b16 %v2452
    %v2818 = vunpack.c.l.b16 %v2453
    %v2819 = vunpack.c.h.b16 %v2453
    %v2820 = vunpack.c.l.b16 %v2454
    %v2821 = vunpack.c.l.b16 %v2455
    %v2822 = vunpack.c.h.b16 %v2455
    %v2823 = vunpack.c.l.b16 %v2456
    %v2824 = vunpack.c.l.b16 %v2457
    %v2825 = vunpack.c.h.b16 %v2457
    %v2826 = vunpack.c.l.b16 %v2458
    %v2827 = vunpack.c.l.b16 %v2459
    %v2828 = vunpack.c.h.b16 %v2459
    %v2829 = vunpack.c.l.b16 %v2460
    %v2830 = vunpack.c.l.b16 %v2461
    %v2831 = vunpack.c.h.b16 %v2461
    %v2832 = vunpack.c.l.b16 %v2462
    %v2833 = vunpack.c.l.b16 %v2463
    %v2834 = vunpack.c.h.b16 %v2463
    %v2835 = vunpack.c.l.b16 %v2464
    %v2836 = vunpack.c.l.b16 %v2465
    %v2837 = vunpack.c.h.b16 %v2465
    %v2838 = vunpack.c.l.b16 %v2466
    %v2839 = vunpack.c.l.b16 %v2467
    %v2840 = vunpack.c.h.b16 %v2467
    %v2841 = vunpack.c.l.b16 %v2468
    %v2842 = vunpack.c.l.b16 %v2469
    %v2843 = vunpack.c.h.b16 %v2469
    %v2844 = vunpack.c.l.b16 %v2470
    %v2845 = vunpack.c.l.b16 %v2471
    %v2846 = vunpack.c.h.b16 %v2471
    %v2847 = vunpack.c.l.b16 %v2472
    %v2848 = vunpack.c.l.b16 %v2473
    %v2849 = vunpack.c.h.b16 %v2473
    %v2850 = vunpack.c.l.b16 %v2474
    %v2851 = vunpack.c.l.b16 %v2475
    %v2852 = vunpack.c.h.b16 %v2475
    %v2853 = vunpack.c.l.b16 %v2476
    %v2854 = vunpack.c.l.b16 %v2477
    %v2855 = vunpack.c.h.b16 %v2477
    %v2856 = vunpack.c.l.b16 %v2478
    %v2857 = vunpack.c.l.b16 %v2479
    %v2858 = vunpack.c.h.b16 %v2479
    %v2859 = vunpack.c.l.b16 %v2480
    %v2860 = vunpack.c.l.b16 %v2481
    %v2861 = vunpack.c.h.b16 %v2481
    %v2862 = vunpack.c.l.b16 %v2482
    %v2863 = vunpack.c.l.b16 %v2483
    %v2864 = vunpack.c.h.b16 %v2483
    %v2865 = vunpack.c.l.b16 %v2484
    %v2866 = vunpack.c.l.b16 %v2485
    %v2867 = vunpack.c.h.b16 %v2485
    %v2868 = vunpack.c.l.b16 %v2486
    %v2869 = vunpack.c.l.b16 %v2487
    %v2870 = vunpack.c.h.b16 %v2487
    %v2871 = vunpack.c.l.b16 %v2488
    %v2872 = vunpack.c.l.b16 %v2489
    %v2873 = vunpack.c.h.b16 %v2489
    %v2874 = vunpack.c.l.b16 %v2490
    %v2875 = vunpack.c.l.b16 %v2491
    %v2876 = vunpack.c.h.b16 %v2491
    %v2877 = vunpack.c.l.b16 %v2492
    %v2878 = vunpack.c.l.b16 %v2493
    %v2879 = vunpack.c.h.b16 %v2493
    %v2880 = vunpack.c.l.b16 %v2494
    %v2881 = vunpack.c.l.b16 %v2495
    %v2882 = vunpack.c.h.b16 %v2495
    %v2883 = vunpack.c.l.b16 %v2496
    %v2884 = vunpack.c.l.b16 %v2497
    %v2885 = vunpack.c.h.b16 %v2497
    %v2886 = vunpack.c.l.b16 %v2498
    %v2887 = vunpack.c.l.b16 %v2499
    %v2888 = vunpack.c.h.b16 %v2499
    %v2889 = vunpack.c.l.b16 %v2500
    %v2890 = vunpack.c.l.b16 %v2501
    %v2891 = vunpack.c.h.b16 %v2501
    %v2892 = vunpack.c.l.b16 %v2502
    %v2893 = vunpack.c.l.b16 %v2503
    %v2894 = vunpack.c.h.b16 %v2503
    %v2895 = vunpack.c.l.b16 %v2504
    %v2896 = vunpack.c.l.b16 %v2505
    %v2897 = vunpack.c.h.b16 %v2505
    %v2898 = vunpack.c.l.b16 %v2506
    %v2899 = vunpack.c.l.b16 %v2507
    %v2900 = vunpack.c.h.b16 %v2507
    %v2901 = vunpack.c.l.b16 %v2508
    %v2902 = vunpack.c.l.b16 %v2509
    %v2903 = vunpack.c.h.b16 %v2509
    %v2904 = vunpack.c.l.b16 %v2510
    %v2905 = vunpack.c.l.b16 %v2511
    %v2906 = vunpack.c.h.b16 %v2511
    %v2907 = vunpack.c.l.b16 %v2512
    %v2908 = vunpack.c.l.b16 %v2513
    %v2909 = vunpack.c.h.b16 %v2513
    %v2910 = vunpack.c.l.b16 %v2514
    %v2911 = vunpack.c.l.b16 %v2515
    %v2912 = vunpack.c.h.b16 %v2515
    %v2913 = vunpack.c.l.b16 %v2516
    %v2914 = vunpack.c.l.b16 %v2517
    %v2915 = vunpack.c.h.b16 %v2517
    %v2916 = vunpack.c.l.b16 %v2518
    %v2917 = vunpack.c.l.b16 %v2519
    %v2918 = vunpack.c.h.b16 %v2519
    %v2919 = vunpack.c.l.b16 %v2520
    %v2920 = vunpack.c.l.b16 %v2521
    %v2921 = vunpack.c.h.b16 %v2521
    %v2922 = vunpack.c.l.b16 %v2522
    %v2923 = vunpack.c.l.b16 %v2523
    %v2924 = vunpack.c.h.b16 %v2523
    %v2925 = vunpack.c.l.b16 %v2524
    %v2926 = vunpack.c.l.b16 %v2525
    %v2927 = vunpack.c.h.b16 %v2525
    %v2928 = vunpack.c.l.b16 %v2526
    %v2929 = vunpack.c.l.b16 %v2527
    %v2930 = vunpack.c.h.b16 %v2527
    %v2931 = vunpack.c.l.b16 %v2528
    %v2932 = vunpack.c.l.b16 %v2529
    %v2933 = vunpack.c.h.b16 %v2529
    %v2934 = vunpack.c.l.b16 %v2530
    %v2935 = vunpack.c.l.b16 %v2531
    %v2936 = vunpack.c.h.b16 %v2531
    %v2937 = vunpack.c.l.b16 %v2532
    %v2938 = vunpack.c.l.b16 %v2533
    %v2939 = vunpack.c.h.b16 %v2533
    %v2940 = vunpack.c.l.b16 %v2534
    %v2941 = vunpack.c.l.b16 %v2535
    %v2942 = vunpack.c.h.b16 %v2535
    %v2943 = vunpack.c.l.b16 %v2536
    %v2944 = vunpack.c.l.b16 %v2537
    %v2945 = vunpack.c.h.b16 %v2537
    %v2946 = vunpack.c.l.b16 %v2538
    %v2947 = vunpack.c.l.b16 %v2539
    %v2948 = vunpack.c.h.b16 %v2539
    %v2949 = vunpack.c.l.b16 %v2540
    %v2950 = vunpack.c.l.b16 %v2541
    %v2951 = vunpack.c.h.b16 %v2541
    %v2952 = vunpack.c.l.b16 %v2542
    %v2953 = vunpack.c.l.b16 %v2543
    %v2954 = vunpack.c.h.b16 %v2543
    %v2955 = vunpack.c.l.b16 %v2544
    %v2956 = vunpack.c.l.b16 %v2545
    %v2957 = vunpack.c.h.b16 %v2545
    %v2958 = vunpack.c.l.b16 %v2546
    %v2959 = vunpack.c.l.b16 %v2547
    %v2960 = vunpack.c.h.b16 %v2547
    %v2961 = vunpack.c.l.b16 %v2548
    %v2962 = vunpack.c.l.b16 %v2549
    %v2963 = vunpack.c.h.b16 %v2549
    %v2964 = vunpack.c.l.b16 %v2550
    %v2965 = vunpack.c.l.b16 %v2551
    %v2966 = vunpack.c.h.b16 %v2551
    %v2967 = vunpack.c.l.b16 %v2552
    %v2968 = vunpack.c.l.b16 %v2553
    %v2969 = vunpack.c.h.b16 %v2553
    %v2970 = vunpack.c.l.b16 %v2554
    %v2971 = vunpack.c.l.b16 %v2555
    %v2972 = vunpack.c.h.b16 %v2555
    %v2973 = vunpack.c.l.b16 %v2556
    %v2974 = vpack.c.b16 %v2737, %v2734
    %v2975 = vpack.c.b16 %v2738, %v2735
    %v2976 = vpack.c.b16 %v2739, %v2736
    %v2977 = vpack.c.b16 %v2743, %v2740
    %v2978 = vpack.c.b16 %v2744, %v2741
    %v2979 = vpack.c.b16 %v2745, %v2742
    %v2980 = vpack.c.b16 %v2749, %v2746
    %v2981 = vpack.c.b16 %v2750, %v2747
    %v2982 = vpack.c.b16 %v2751, %v2748
    %v2983 = vpack.c.b16 %v2755, %v2752
    %v2984 = vpack.c.b16 %v2756, %v2753
    %v2985 = vpack.c.b16 %v2757, %v2754
    %v2986 = vpack.c.b16 %v2761, %v2758
    %v2987 = vpack.c.b16 %v2762, %v2759
    %v2988 = vpack.c.b16 %v2763, %v2760
    %v2989 = vpack.c.b16 %v2767, %v2764
    %v2990 = vpack.c.b16 %v2768, %v2765
    %v2991 = vpack.c.b16 %v2769, %v2766
    %v2992 = vpack.c.b16 %v2773, %v2770
    %v2993 = vpack.c.b16 %v2774, %v2771
    %v2994 = vpack.c.b16 %v2775, %v2772
    %v2995 = vpack.c.b16 %v2779, %v2776
    %v2996 = vpack.c.b16 %v2780, %v2777
    %v2997 = vpack.c.b16 %v2781, %v2778
    %v2998 = vpack.c.b16 %v2785, %v2782
    %v2999 = vpack.c.b16 %v2786, %v2783
    %v3000 = vpack.c.b16 %v2787, %v2784
    %v3001 = vpack.c.b16 %v2791, %v2788
    %v3002 = vpack.c.b16 %v2792, %v2789
    %v3003 = vpack.c.b16 %v2793, %v2790
    %v3004 = vpack.c.b16 %v2797, %v2794
    %v3005 = vpack.c.b16 %v2798, %v2795
    %v3006 = vpack.c.b16 %v2799, %v2796
    %v3007 = vpack.c.b16 %v2803, %v2800
    %v3008 = vpack.c.b16 %v2804, %v2801
    %v3009 = vpack.c.b16 %v2805, %v2802
    %v3010 = vpack.c.b16 %v2809, %v2806
    %v3011 = vpack.c.b16 %v2810, %v2807
    %v3012 = vpack.c.b16 %v2811, %v2808
    %v3013 = vpack.c.b16 %v2815, %v2812
    %v3014 = vpack.c.b16 %v2816, %v2813
    %v3015 = vpack.c.b16 %v2817, %v2814
    %v3016 = vpack.c.b16 %v2821, %v2818
    %v3017 = vpack.c.b16 %v2822, %v2819
    %v3018 = vpack.c.b16 %v2823, %v2820
    %v3019 = vpack.c.b16 %v2827, %v2824
    %v3020 = vpack.c.b16 %v2828, %v2825
    %v3021 = vpack.c.b16 %v2829, %v2826
    %v3022 = vpack.c.b16 %v2833, %v2830
    %v3023 = vpack.c.b16 %v2834, %v2831
    %v3024 = vpack.c.b16 %v2835, %v2832
    %v3025 = vpack.c.b16 %v2839, %v2836
    %v3026 = vpack.c.b16 %v2840, %v2837
    %v3027 = vpack.c.b16 %v2841, %v2838
    %v3028 = vpack.c.b16 %v2845, %v2842
    %v3029 = vpack.c.b16 %v2846, %v2843
    %v3030 = vpack.c.b16 %v2847, %v2844
    %v3031 = vpack.c.b16 %v2851, %v2848
    %v3032 = vpack.c.b16 %v2852, %v2849
    %v3033 = vpack.c.b16 %v2853, %v2850
    %v3034 = vpack.c.b16 %v2857, %v2854
    %v3035 = vpack.c.b16 %v2858, %v2855
    %v3036 = vpack.c.b16 %v2859, %v2856
    %v3037 = vpack.c.b16 %v2863, %v2860
    %v3038 = vpack.c.b16 %v2864, %v2861
    %v3039 = vpack.c.b16 %v2865, %v2862
    %v3040 = vpack.c.b16 %v2869, %v2866
    %v3041 = vpack.c.b16 %v2870, %v2867
    %v3042 = vpack.c.b16 %v2871, %v2868
    %v3043 = vpack.c.b16 %v2875, %v2872
    %v3044 = vpack.c.b16 %v2876, %v2873
    %v3045 = vpack.c.b16 %v2877, %v2874
    %v3046 = vpack.c.b16 %v2881, %v2878
    %v3047 = vpack.c.b16 %v2882, %v2879
    %v3048 = vpack.c.b16 %v2883, %v2880
    %v3049 = vpack.c.b16 %v2887, %v2884
    %v3050 = vpack.c.b16 %v2888, %v2885
    %v3051 = vpack.c.b16 %v2889, %v2886
    %v3052 = vpack.c.b16 %v2893, %v2890
    %v3053 = vpack.c.b16 %v2894, %v2891
    %v3054 = vpack.c.b16 %v2895, %v2892
    %v3055 = vpack.c.b16 %v2899, %v2896
    %v3056 = vpack.c.b16 %v2900, %v2897
    %v3057 = vpack.c.b16 %v2901, %v2898
    %v3058 = vpack.c.b16 %v2905, %v2902
    %v3059 = vpack.c.b16 %v2906, %v2903
    %v3060 = vpack.c.b16 %v2907, %v2904
    %v3061 = vpack.c.b16 %v2911, %v2908
    %v3062 = vpack.c.b16 %v2912, %v2909
    %v3063 = vpack.c.b16 %v2913, %v2910
    %v3064 = vpack.c.b16 %v2917, %v2914
    %v3065 = vpack.c.b16 %v2918, %v2915
    %v3066 = vpack.c.b16 %v2919, %v2916
    %v3067 = vpack.c.b16 %v2923, %v2920
    %v3068 = vpack.c.b16 %v2924, %v2921
    %v3069 = vpack.c.b16 %v2925, %v2922
    %v3070 = vpack.c.b16 %v2929, %v2926
    %v3071 = vpack.c.b16 %v2930, %v2927
    %v3072 = vpack.c.b16 %v2931, %v2928
    %v3073 = vpack.c.b16 %v2935, %v2932
    %v3074 = vpack.c.b16 %v2936, %v2933
    %v3075 = vpack.c.b16 %v2937, %v2934
    %v3076 = vpack.c.b16 %v2941, %v2938
    %v3077 = vpack.c.b16 %v2942, %v2939
    %v3078 = vpack.c.b16 %v2943, %v2940
    %v3079 = vpack.c.b16 %v2947, %v2944
    %v3080 = vpack.c.b16 %v2948, %v2945
    %v3081 = vpack.c.b16 %v2949, %v2946
    %v3082 = vpack.c.b16 %v2953, %v2950
    %v3083 = vpack.c.b16 %v2954, %v2951
    %v3084 = vpack.c.b16 %v2955, %v2952
    %v3085 = vpack.c.b16 %v2959, %v2956
    %v3086 = vpack.c.b16 %v2960, %v2957
    %v3087 = vpack.c.b16 %v2961, %v2958
    %v3088 = vpack.c.b16 %v2965, %v2962
    %v3089 = vpack.c.b16 %v2966, %v2963
    %v3090 = vpack.c.b16 %v2967, %v2964
    %v3091 = vpack.c.b16 %v2971, %v2968
    %v3092 = vpack.c.b16 %v2972, %v2969
    %v3093 = vpack.c.b16 %v2973, %v2970
    %3214 = vmatprep.subr.bf16.mxu0 %v2975
    %3215 = vmatpush1.bf16.msra.mxu0 %v2974
    %3216 = vmatprep.subr.bf16.mxu0 %v2978
    %3217 = vmatpush1.bf16.msra.mxu0 %v2977
    %3218 = vmatprep.subr.bf16.mxu0 %v2981
    %3219 = vmatpush1.bf16.msra.mxu0 %v2980
    %3220 = vmatprep.subr.bf16.mxu0 %v2984
    %3221 = vmatpush1.bf16.msra.mxu0 %v2983
    %3222 = vmatprep.subr.bf16.mxu0 %v2987
    %3223 = vmatpush1.bf16.msra.mxu0 %v2986
    %3224 = vmatprep.subr.bf16.mxu0 %v2990
    %3225 = vmatpush1.bf16.msra.mxu0 %v2989
    %3226 = vmatprep.subr.bf16.mxu0 %v2993
    %3227 = vmatpush1.bf16.msra.mxu0 %v2992
    %3228 = vmatprep.subr.bf16.mxu0 %v2996
    %3229 = vmatpush1.bf16.msra.mxu0 %v2995
    %3230 = vmatprep.subr.bf16.mxu0 %v2999
    %3231 = vmatpush1.bf16.msra.mxu0 %v2998
    %3232 = vmatprep.subr.bf16.mxu0 %v3002
    %3233 = vmatpush1.bf16.msra.mxu0 %v3001
    %3234 = vmatprep.subr.bf16.mxu0 %v3005
    %3235 = vmatpush1.bf16.msra.mxu0 %v3004
    %3236 = vmatprep.subr.bf16.mxu0 %v3008
    %3237 = vmatpush1.bf16.msra.mxu0 %v3007
    %3238 = vmatprep.subr.bf16.mxu0 %v3011
    %3239 = vmatpush1.bf16.msra.mxu0 %v3010
    %3240 = vmatprep.subr.bf16.mxu0 %v3014
    %3241 = vmatpush1.bf16.msra.mxu0 %v3013
    %3242 = vmatprep.subr.bf16.mxu0 %v3017
    %3243 = vmatpush1.bf16.msra.mxu0 %v3016
    %3244 = vmatprep.subr.bf16.mxu0 %v3020
    %3245 = vmatpush1.bf16.msra.mxu0 %v3019
    %3246 = vmatprep.mubr.bf16.mxu0 %v2393
    %3247 = vmatmul.mubr.bf16.gmra.mrb[0].mxu0 %v2392
    %v3248 = vpop.f32.mrb[0].mxu0
    %v3249 = vadd.f32 %v2562, %v3248
    %v3250 = vpop.f32.mrb[0].mxu0
    %v3251 = vadd.f32 %v2566, %v3250
    %v3252 = vpop.f32.mrb[0].mxu0
    %v3253 = vadd.f32 %v2562, %v3252
    %v3254 = vpop.f32.mrb[0].mxu0
    %v3255 = vadd.f32 %v2566, %v3254
    %3256 = vdwg.mxu0
    %3257 = vmatprep.subr.bf16.mxu0 %v3023
    %3258 = vmatpush1.bf16.msra.mxu0 %v3022
    %3259 = vmatprep.subr.bf16.mxu0 %v3026
    %3260 = vmatpush1.bf16.msra.mxu0 %v3025
    %3261 = vmatprep.subr.bf16.mxu0 %v3029
    %3262 = vmatpush1.bf16.msra.mxu0 %v3028
    %3263 = vmatprep.subr.bf16.mxu0 %v3032
    %3264 = vmatpush1.bf16.msra.mxu0 %v3031
    %3265 = vmatprep.subr.bf16.mxu0 %v3035
    %3266 = vmatpush1.bf16.msra.mxu0 %v3034
    %3267 = vmatprep.subr.bf16.mxu0 %v3038
    %3268 = vmatpush1.bf16.msra.mxu0 %v3037
    %3269 = vmatprep.subr.bf16.mxu0 %v3041
    %3270 = vmatpush1.bf16.msra.mxu0 %v3040
    %3271 = vmatprep.subr.bf16.mxu0 %v3044
    %3272 = vmatpush1.bf16.msra.mxu0 %v3043
    %3273 = vmatprep.subr.bf16.mxu0 %v3047
    %3274 = vmatpush1.bf16.msra.mxu0 %v3046
    %3275 = vmatprep.subr.bf16.mxu0 %v3050
    %3276 = vmatpush1.bf16.msra.mxu0 %v3049
    %3277 = vmatprep.subr.bf16.mxu0 %v3053
    %3278 = vmatpush1.bf16.msra.mxu0 %v3052
    %3279 = vmatprep.subr.bf16.mxu0 %v3056
    %3280 = vmatpush1.bf16.msra.mxu0 %v3055
    %3281 = vmatprep.subr.bf16.mxu0 %v3059
    %3282 = vmatpush1.bf16.msra.mxu0 %v3058
    %3283 = vmatprep.subr.bf16.mxu0 %v3062
    %3284 = vmatpush1.bf16.msra.mxu0 %v3061
    %3285 = vmatprep.subr.bf16.mxu0 %v3065
    %3286 = vmatpush1.bf16.msra.mxu0 %v3064
    %3287 = vmatprep.subr.bf16.mxu0 %v3068
    %3288 = vmatpush1.bf16.msra.mxu0 %v3067
    %3289 = vmatprep.mubr.bf16.mxu0 %v2395
    %3290 = vmatmul.mubr.bf16.gmra.mrb[0].mxu0 %v2394
    %v3291 = vpop.f32.mrb[0].mxu0
    %v3292 = vadd.f32 %v3249, %v3291
    %v3293 = vpop.f32.mrb[0].mxu0
    %v3294 = vadd.f32 %v3251, %v3293
    %v3295 = vpop.f32.mrb[0].mxu0
    %v3296 = vadd.f32 %v3253, %v3295
    %v3297 = vpop.f32.mrb[0].mxu0
    %v3298 = vadd.f32 %v3255, %v3297
    %3299 = vdwg.mxu0
    %3300 = vmatprep.subr.bf16.mxu0 %v3071
    %3301 = vmatpush1.bf16.msra.mxu0 %v3070
    %3302 = vmatprep.subr.bf16.mxu0 %v3074
    %3303 = vmatpush1.bf16.msra.mxu0 %v3073
    %3304 = vmatprep.subr.bf16.mxu0 %v3077
    %3305 = vmatpush1.bf16.msra.mxu0 %v3076
    %3306 = vmatprep.subr.bf16.mxu0 %v3080
    %3307 = vmatpush1.bf16.msra.mxu0 %v3079
    %3308 = vmatprep.subr.bf16.mxu0 %v3083
    %3309 = vmatpush1.bf16.msra.mxu0 %v3082
    %3310 = vmatprep.subr.bf16.mxu0 %v3086
    %3311 = vmatpush1.bf16.msra.mxu0 %v3085
    %3312 = vmatprep.subr.bf16.mxu0 %v3089
    %3313 = vmatpush1.bf16.msra.mxu0 %v3088
    %3314 = vmatprep.subr.bf16.mxu0 %v3092
    %3315 = vmatpush1.bf16.msra.mxu0 %v3091
    %3316 = vmatprep.subr.bf16.mxu0 0
    %3317 = vmatpush1.bf16.msra.mxu0 0
    %3318 = vmatprep.subr.bf16.mxu0 0
    %3319 = vmatpush1.bf16.msra.mxu0 0
    %3320 = vmatprep.subr.bf16.mxu0 0
    %3321 = vmatpush1.bf16.msra.mxu0 0
    %3322 = vmatprep.subr.bf16.mxu0 0
    %3323 = vmatpush1.bf16.msra.mxu0 0
    %3324 = vmatprep.subr.bf16.mxu0 0
    %3325 = vmatpush1.bf16.msra.mxu0 0
    %3326 = vmatprep.subr.bf16.mxu0 0
    %3327 = vmatpush1.bf16.msra.mxu0 0
    %3328 = vmatprep.subr.bf16.mxu0 0
    %3329 = vmatpush1.bf16.msra.mxu0 0
    %3330 = vmatprep.subr.bf16.mxu0 0
    %3331 = vmatpush1.bf16.msra.mxu0 0
    %3332 = vmatprep.mubr.bf16.mxu0 0
    %3333 = vmatmul.mubr.bf16.gmra.mrb[0].mxu0 %v2396
    %v3334 = vpop.f32.mrb[0].mxu0
    %v3335 = vadd.f32 %v3292, %v3334
    %v3336 = vpop.f32.mrb[0].mxu0
    %v3337 = vadd.f32 %v3294, %v3336
    %v3338 = vpop.f32.mrb[0].mxu0
    %v3339 = vadd.f32 %v3296, %v3338
    %v3340 = vpop.f32.mrb[0].mxu0
    %v3341 = vadd.f32 %v3298, %v3340
    %3342 = vdwg.mxu0
    %3343 = vmatprep.subr.bf16.mxu0 0
    %3344 = vmatpush1.bf16.msra.mxu0 %v2976
    %3345 = vmatprep.subr.bf16.mxu0 0
    %3346 = vmatpush1.bf16.msra.mxu0 %v2979
    %3347 = vmatprep.subr.bf16.mxu0 0
    %3348 = vmatpush1.bf16.msra.mxu0 %v2982
    %3349 = vmatprep.subr.bf16.mxu0 0
    %3350 = vmatpush1.bf16.msra.mxu0 %v2985
    %3351 = vmatprep.subr.bf16.mxu0 0
    %3352 = vmatpush1.bf16.msra.mxu0 %v2988
    %3353 = vmatprep.subr.bf16.mxu0 0
    %3354 = vmatpush1.bf16.msra.mxu0 %v2991
    %3355 = vmatprep.subr.bf16.mxu0 0
    %3356 = vmatpush1.bf16.msra.mxu0 %v2994
    %3357 = vmatprep.subr.bf16.mxu0 0
    %3358 = vmatpush1.bf16.msra.mxu0 %v2997
    %3359 = vmatprep.subr.bf16.mxu0 0
    %3360 = vmatpush1.bf16.msra.mxu0 %v3000
    %3361 = vmatprep.subr.bf16.mxu0 0
    %3362 = vmatpush1.bf16.msra.mxu0 %v3003
    %3363 = vmatprep.subr.bf16.mxu0 0
    %3364 = vmatpush1.bf16.msra.mxu0 %v3006
    %3365 = vmatprep.subr.bf16.mxu0 0
    %3366 = vmatpush1.bf16.msra.mxu0 %v3009
    %3367 = vmatprep.subr.bf16.mxu0 0
    %3368 = vmatpush1.bf16.msra.mxu0 %v3012
    %3369 = vmatprep.subr.bf16.mxu0 0
    %3370 = vmatpush1.bf16.msra.mxu0 %v3015
    %3371 = vmatprep.subr.bf16.mxu0 0
    %3372 = vmatpush1.bf16.msra.mxu0 %v3018
    %3373 = vmatprep.subr.bf16.mxu0 0
    %3374 = vmatpush1.bf16.msra.mxu0 %v3021
    %3375 = vmatprep.mubr.bf16.mxu0 %v2393
    %3376 = vmatmul.mubr.bf16.gmra.mrb[0].mxu0 %v2392
    %v3377 = vpop.f32.mrb[0].mxu0
    %v3378 = vadd.f32 %v2570, %v3377
    %v3379 = vpop.f32.mrb[0].mxu0
    %v3380 = vpop.f32.mrb[0].mxu0
    %v3381 = vadd.f32 %v2570, %v3380
    %v3382 = vpop.f32.mrb[0].mxu0
    %3383 = vdwg.mxu0
    %3384 = vmatprep.subr.bf16.mxu0 0
    %3385 = vmatpush1.bf16.msra.mxu0 %v3024
    %3386 = vmatprep.subr.bf16.mxu0 0
    %3387 = vmatpush1.bf16.msra.mxu0 %v3027
    %3388 = vmatprep.subr.bf16.mxu0 0
    %3389 = vmatpush1.bf16.msra.mxu0 %v3030
    %3390 = vmatprep.subr.bf16.mxu0 0
    %3391 = vmatpush1.bf16.msra.mxu0 %v3033
    %3392 = vmatprep.subr.bf16.mxu0 0
    %3393 = vmatpush1.bf16.msra.mxu0 %v3036
    %3394 = vmatprep.subr.bf16.mxu0 0
    %3395 = vmatpush1.bf16.msra.mxu0 %v3039
    %3396 = vmatprep.subr.bf16.mxu0 0
    %3397 = vmatpush1.bf16.msra.mxu0 %v3042
    %3398 = vmatprep.subr.bf16.mxu0 0
    %3399 = vmatpush1.bf16.msra.mxu0 %v3045
    %3400 = vmatprep.subr.bf16.mxu0 0
    %3401 = vmatpush1.bf16.msra.mxu0 %v3048
    %3402 = vmatprep.subr.bf16.mxu0 0
    %3403 = vmatpush1.bf16.msra.mxu0 %v3051
    %3404 = vmatprep.subr.bf16.mxu0 0
    %3405 = vmatpush1.bf16.msra.mxu0 %v3054
    %3406 = vmatprep.subr.bf16.mxu0 0
    %3407 = vmatpush1.bf16.msra.mxu0 %v3057
    %3408 = vmatprep.subr.bf16.mxu0 0
    %3409 = vmatpush1.bf16.msra.mxu0 %v3060
    %3410 = vmatprep.subr.bf16.mxu0 0
    %3411 = vmatpush1.bf16.msra.mxu0 %v3063
    %3412 = vmatprep.subr.bf16.mxu0 0
    %3413 = vmatpush1.bf16.msra.mxu0 %v3066
    %3414 = vmatprep.subr.bf16.mxu0 0
    %3415 = vmatpush1.bf16.msra.mxu0 %v3069
    %3416 = vmatprep.mubr.bf16.mxu0 %v2395
    %3417 = vmatmul.mubr.bf16.gmra.mrb[0].mxu0 %v2394
    %v3418 = vpop.f32.mrb[0].mxu0
    %v3419 = vadd.f32 %v3378, %v3418
    %v3420 = vpop.f32.mrb[0].mxu0
    %v3421 = vpop.f32.mrb[0].mxu0
    %v3422 = vadd.f32 %v3381, %v3421
    %v3423 = vpop.f32.mrb[0].mxu0
    %3424 = vdwg.mxu0
    %3425 = vmatprep.subr.bf16.mxu0 0
    %3426 = vmatpush1.bf16.msra.mxu0 %v3072
    %3427 = vmatprep.subr.bf16.mxu0 0
    %3428 = vmatpush1.bf16.msra.mxu0 %v3075
    %3429 = vmatprep.subr.bf16.mxu0 0
    %3430 = vmatpush1.bf16.msra.mxu0 %v3078
    %3431 = vmatprep.subr.bf16.mxu0 0
    %3432 = vmatpush1.bf16.msra.mxu0 %v3081
    %3433 = vmatprep.subr.bf16.mxu0 0
    %3434 = vmatpush1.bf16.msra.mxu0 %v3084
    %3435 = vmatprep.subr.bf16.mxu0 0
    %3436 = vmatpush1.bf16.msra.mxu0 %v3087
    %3437 = vmatprep.subr.bf16.mxu0 0
    %3438 = vmatpush1.bf16.msra.mxu0 %v3090
    %3439 = vmatprep.subr.bf16.mxu0 0
    %3440 = vmatpush1.bf16.msra.mxu0 %v3093
    %3441 = vmatprep.subr.bf16.mxu0 0
    %3442 = vmatpush1.bf16.msra.mxu0 0
    %3443 = vmatprep.subr.bf16.mxu0 0
    %3444 = vmatpush1.bf16.msra.mxu0 0
    %3445 = vmatprep.subr.bf16.mxu0 0
    %3446 = vmatpush1.bf16.msra.mxu0 0
    %3447 = vmatprep.subr.bf16.mxu0 0
    %3448 = vmatpush1.bf16.msra.mxu0 0
    %3449 = vmatprep.subr.bf16.mxu0 0
    %3450 = vmatpush1.bf16.msra.mxu0 0
    %3451 = vmatprep.subr.bf16.mxu0 0
    %3452 = vmatpush1.bf16.msra.mxu0 0
    %3453 = vmatprep.subr.bf16.mxu0 0
    %3454 = vmatpush1.bf16.msra.mxu0 0
    %3455 = vmatprep.subr.bf16.mxu0 0
    %3456 = vmatpush1.bf16.msra.mxu0 0
    %3457 = vmatprep.mubr.bf16.mxu0 0
    %3458 = vmatmul.mubr.bf16.gmra.mrb[0].mxu0 %v2396
    %v3459 = vpop.f32.mrb[0].mxu0
    %v3460 = vadd.f32 %v3419, %v3459
    %v3461 = vpop.f32.mrb[0].mxu0
    %v3462 = vpop.f32.mrb[0].mxu0
    %v3463 = vadd.f32 %v3422, %v3462
    %v3464 = vpop.f32.mrb[0].mxu0
    %3465 = vdwg.mxu0
    %v3466 = vmax.f32 %v3335, 0.0
    %v3467 = vmax.f32 %v3337, 0.0
    %v3468 = vmax.f32 %v3460, 0.0
    %v3469 = vmax.f32 %v3339, 0.0
    %v3470 = vmax.f32 %v3341, 0.0
    %v3471 = vmax.f32 %v3463, 0.0
    %v3472 = vpack.c.bf16 %v3469, %v3466
    %v3473 = vpack.c.bf16 %v3470, %v3467
    %v3474 = vpack.c.bf16 %v3471, %v3468
    %v3475 = vld [vmem:[#allocation6] sm:$0xff]
    %v3476 = vld [vmem:[#allocation6 + $0x8] sm:$0xff]
    %v3477 = vld [vmem:[#allocation6 + $0x10] sm:$0xff]
    %v3478 = vld [vmem:[#allocation6 + $0x18] sm:$0xff]
    %v3479 = vld [vmem:[#allocation6 + $0x20] sm:$0xff]
    %v3480 = vld [vmem:[#allocation6 + $0x28] sm:$0xff]
    %v3481 = vld [vmem:[#allocation6 + $0x30] sm:$0xff]
    %v3482 = vld [vmem:[#allocation6 + $0x38] sm:$0xff]
    %v3483 = vld [vmem:[#allocation6 + $0x40] sm:$0xff]
    %v3484 = vld [vmem:[#allocation6 + $0x48] sm:$0xff]
    %v3485 = vld [vmem:[#allocation6 + $0x50] sm:$0xff]
    %v3486 = vld [vmem:[#allocation6 + $0x58] sm:$0xff]
    %v3487 = vld [vmem:[#allocation6 + $0x60] sm:$0xff]
    %v3488 = vld [vmem:[#allocation6 + $0x68] sm:$0xff]
    %v3489 = vld [vmem:[#allocation6 + $0x70] sm:$0xff]
    %v3490 = vld [vmem:[#allocation6 + $0x78] sm:$0xff]
    %v3491 = vld [vmem:[#allocation6 + $0x80] sm:$0xff]
    %v3492 = vld [vmem:[#allocation6 + $0x88] sm:$0xff]
    %v3493 = vld [vmem:[#allocation6 + $0x90] sm:$0xff]
    %v3494 = vld [vmem:[#allocation6 + $0x98] sm:$0xff]
    %v3495 = vld [vmem:[#allocation6 + $0xa0] sm:$0xff]
    %v3496 = vld [vmem:[#allocation6 + $0xa8] sm:$0xff]
    %v3497 = vld [vmem:[#allocation6 + $0xb0] sm:$0xff]
    %v3498 = vld [vmem:[#allocation6 + $0xb8] sm:$0xff]
    %v3499 = vld [vmem:[#allocation6 + $0xc0] sm:$0xff]
    %v3500 = vld [vmem:[#allocation6 + $0xc8] sm:$0xff]
    %v3501 = vld [vmem:[#allocation6 + $0xd0] sm:$0xff]
    %v3502 = vld [vmem:[#allocation6 + $0xd8] sm:$0xff]
    %v3503 = vld [vmem:[#allocation6 + $0xe0] sm:$0xff]
    %v3504 = vld [vmem:[#allocation6 + $0xe8] sm:$0xff]
    %v3505 = vld [vmem:[#allocation6 + $0xf0] sm:$0xff]
    %v3506 = vld [vmem:[#allocation6 + $0xf8] sm:$0xff]
    %v3507 = vld [vmem:[#allocation6 + $0x100] sm:$0xff]
    %v3508 = vld [vmem:[#allocation6 + $0x108] sm:$0xff]
    %v3509 = vld [vmem:[#allocation6 + $0x110] sm:$0xff]
    %v3510 = vld [vmem:[#allocation6 + $0x118] sm:$0xff]
    %v3511 = vld [vmem:[#allocation6 + $0x120] sm:$0xff]
    %v3512 = vld [vmem:[#allocation6 + $0x128] sm:$0xff]
    %v3513 = vld [vmem:[#allocation6 + $0x130] sm:$0xff]
    %v3514 = vld [vmem:[#allocation6 + $0x138] sm:$0xff]
    %v3515 = vld [vmem:[#allocation6 + $0x140] sm:$0xff]
    %v3516 = vld [vmem:[#allocation6 + $0x148] sm:$0xff]
    %v3517 = vld [vmem:[#allocation6 + $0x150] sm:$0xff]
    %v3518 = vld [vmem:[#allocation6 + $0x158] sm:$0xff]
    %v3519 = vld [vmem:[#allocation6 + $0x160] sm:$0xff]
    %v3520 = vld [vmem:[#allocation6 + $0x168] sm:$0xff]
    %v3521 = vld [vmem:[#allocation6 + $0x170] sm:$0xff]
    %v3522 = vld [vmem:[#allocation6 + $0x178] sm:$0xff]
    %v3523 = vld [vmem:[%s6] sm:$0x3]
    %v3525 = vlaneseq
    %v3526 = vshrl.u32 %v3525, 7
    %v3527 = vsub.s32 0, %v3526
    %v3528 = vrot.slane %v3523, %v3527
    %v3529 = vlaneseq
    %v3530 = vshrl.u32 %v3529, 7
    %v3531 = vsub.s32 1, %v3530
    %v3532 = vrot.slane %v3523, %v3531
    %v3583 = vunpack.c.l.b16 %v3475
    %v3584 = vunpack.c.h.b16 %v3475
    %v3585 = vunpack.c.l.b16 %v3476
    %v3586 = vunpack.c.h.b16 %v3476
    %v3587 = vunpack.c.l.b16 %v3477
    %v3588 = vunpack.c.h.b16 %v3477
    %v3589 = vunpack.c.l.b16 %v3478
    %v3590 = vunpack.c.h.b16 %v3478
    %v3591 = vunpack.c.l.b16 %v3479
    %v3592 = vunpack.c.h.b16 %v3479
    %v3593 = vunpack.c.l.b16 %v3480
    %v3594 = vunpack.c.h.b16 %v3480
    %v3595 = vunpack.c.l.b16 %v3481
    %v3596 = vunpack.c.h.b16 %v3481
    %v3597 = vunpack.c.l.b16 %v3482
    %v3598 = vunpack.c.h.b16 %v3482
    %v3599 = vunpack.c.l.b16 %v3483
    %v3600 = vunpack.c.h.b16 %v3483
    %v3601 = vunpack.c.l.b16 %v3484
    %v3602 = vunpack.c.h.b16 %v3484
    %v3603 = vunpack.c.l.b16 %v3485
    %v3604 = vunpack.c.h.b16 %v3485
    %v3605 = vunpack.c.l.b16 %v3486
    %v3606 = vunpack.c.h.b16 %v3486
    %v3607 = vunpack.c.l.b16 %v3487
    %v3608 = vunpack.c.h.b16 %v3487
    %v3609 = vunpack.c.l.b16 %v3488
    %v3610 = vunpack.c.h.b16 %v3488
    %v3611 = vunpack.c.l.b16 %v3489
    %v3612 = vunpack.c.h.b16 %v3489
    %v3613 = vunpack.c.l.b16 %v3490
    %v3614 = vunpack.c.h.b16 %v3490
    %v3615 = vunpack.c.l.b16 %v3491
    %v3616 = vunpack.c.h.b16 %v3491
    %v3617 = vunpack.c.l.b16 %v3492
    %v3618 = vunpack.c.h.b16 %v3492
    %v3619 = vunpack.c.l.b16 %v3493
    %v3620 = vunpack.c.h.b16 %v3493
    %v3621 = vunpack.c.l.b16 %v3494
    %v3622 = vunpack.c.h.b16 %v3494
    %v3623 = vunpack.c.l.b16 %v3495
    %v3624 = vunpack.c.h.b16 %v3495
    %v3625 = vunpack.c.l.b16 %v3496
    %v3626 = vunpack.c.h.b16 %v3496
    %v3627 = vunpack.c.l.b16 %v3497
    %v3628 = vunpack.c.h.b16 %v3497
    %v3629 = vunpack.c.l.b16 %v3498
    %v3630 = vunpack.c.h.b16 %v3498
    %v3631 = vunpack.c.l.b16 %v3499
    %v3632 = vunpack.c.h.b16 %v3499
    %v3633 = vunpack.c.l.b16 %v3500
    %v3634 = vunpack.c.h.b16 %v3500
    %v3635 = vunpack.c.l.b16 %v3501
    %v3636 = vunpack.c.h.b16 %v3501
    %v3637 = vunpack.c.l.b16 %v3502
    %v3638 = vunpack.c.h.b16 %v3502
    %v3639 = vunpack.c.l.b16 %v3503
    %v3640 = vunpack.c.h.b16 %v3503
    %v3641 = vunpack.c.l.b16 %v3504
    %v3642 = vunpack.c.h.b16 %v3504
    %v3643 = vunpack.c.l.b16 %v3505
    %v3644 = vunpack.c.h.b16 %v3505
    %v3645 = vunpack.c.l.b16 %v3506
    %v3646 = vunpack.c.h.b16 %v3506
    %v3647 = vunpack.c.l.b16 %v3507
    %v3648 = vunpack.c.h.b16 %v3507
    %v3649 = vunpack.c.l.b16 %v3508
    %v3650 = vunpack.c.h.b16 %v3508
    %v3651 = vunpack.c.l.b16 %v3509
    %v3652 = vunpack.c.h.b16 %v3509
    %v3653 = vunpack.c.l.b16 %v3510
    %v3654 = vunpack.c.h.b16 %v3510
    %v3655 = vunpack.c.l.b16 %v3511
    %v3656 = vunpack.c.h.b16 %v3511
    %v3657 = vunpack.c.l.b16 %v3512
    %v3658 = vunpack.c.h.b16 %v3512
    %v3659 = vunpack.c.l.b16 %v3513
    %v3660 = vunpack.c.h.b16 %v3513
    %v3661 = vunpack.c.l.b16 %v3514
    %v3662 = vunpack.c.h.b16 %v3514
    %v3663 = vunpack.c.l.b16 %v3515
    %v3664 = vunpack.c.h.b16 %v3515
    %v3665 = vunpack.c.l.b16 %v3516
    %v3666 = vunpack.c.h.b16 %v3516
    %v3667 = vunpack.c.l.b16 %v3517
    %v3668 = vunpack.c.h.b16 %v3517
    %v3669 = vunpack.c.l.b16 %v3518
    %v3670 = vunpack.c.h.b16 %v3518
    %v3671 = vunpack.c.l.b16 %v3519
    %v3672 = vunpack.c.h.b16 %v3519
    %v3673 = vunpack.c.l.b16 %v3520
    %v3674 = vunpack.c.h.b16 %v3520
    %v3675 = vunpack.c.l.b16 %v3521
    %v3676 = vunpack.c.h.b16 %v3521
    %v3677 = vunpack.c.l.b16 %v3522
    %v3678 = vunpack.c.h.b16 %v3522
    %v3679 = vpack.c.b16 %v3585, %v3583
    %v3680 = vpack.c.b16 %v3586, %v3584
    %v3681 = vpack.c.b16 %v3589, %v3587
    %v3682 = vpack.c.b16 %v3590, %v3588
    %v3683 = vpack.c.b16 %v3593, %v3591
    %v3684 = vpack.c.b16 %v3594, %v3592
    %v3685 = vpack.c.b16 %v3597, %v3595
    %v3686 = vpack.c.b16 %v3598, %v3596
    %v3687 = vpack.c.b16 %v3601, %v3599
    %v3688 = vpack.c.b16 %v3602, %v3600
    %v3689 = vpack.c.b16 %v3605, %v3603
    %v3690 = vpack.c.b16 %v3606, %v3604
    %v3691 = vpack.c.b16 %v3609, %v3607
    %v3692 = vpack.c.b16 %v3610, %v3608
    %v3693 = vpack.c.b16 %v3613, %v3611
    %v3694 = vpack.c.b16 %v3614, %v3612
    %v3695 = vpack.c.b16 %v3617, %v3615
    %v3696 = vpack.c.b16 %v3618, %v3616
    %v3697 = vpack.c.b16 %v3621, %v3619
    %v3698 = vpack.c.b16 %v3622, %v3620
    %v3699 = vpack.c.b16 %v3625, %v3623
    %v3700 = vpack.c.b16 %v3626, %v3624
    %v3701 = vpack.c.b16 %v3629, %v3627
    %v3702 = vpack.c.b16 %v3630, %v3628
    %v3703 = vpack.c.b16 %v3633, %v3631
    %v3704 = vpack.c.b16 %v3634, %v3632
    %v3705 = vpack.c.b16 %v3637, %v3635
    %v3706 = vpack.c.b16 %v3638, %v3636
    %v3707 = vpack.c.b16 %v3641, %v3639
    %v3708 = vpack.c.b16 %v3642, %v3640
    %v3709 = vpack.c.b16 %v3645, %v3643
    %v3710 = vpack.c.b16 %v3646, %v3644
    %v3711 = vpack.c.b16 %v3649, %v3647
    %v3712 = vpack.c.b16 %v3650, %v3648
    %v3713 = vpack.c.b16 %v3653, %v3651
    %v3714 = vpack.c.b16 %v3654, %v3652
    %v3715 = vpack.c.b16 %v3657, %v3655
    %v3716 = vpack.c.b16 %v3658, %v3656
    %v3717 = vpack.c.b16 %v3661, %v3659
    %v3718 = vpack.c.b16 %v3662, %v3660
    %v3719 = vpack.c.b16 %v3665, %v3663
    %v3720 = vpack.c.b16 %v3666, %v3664
    %v3721 = vpack.c.b16 %v3669, %v3667
    %v3722 = vpack.c.b16 %v3670, %v3668
    %v3723 = vpack.c.b16 %v3673, %v3671
    %v3724 = vpack.c.b16 %v3674, %v3672
    %v3725 = vpack.c.b16 %v3677, %v3675
    %v3726 = vpack.c.b16 %v3678, %v3676
    %3775 = vmatprep.subr.bf16.mxu0 %v3680
    %3776 = vmatpush1.bf16.msra.mxu0 %v3679
    %3777 = vmatprep.subr.bf16.mxu0 %v3682
    %3778 = vmatpush1.bf16.msra.mxu0 %v3681
    %3779 = vmatprep.subr.bf16.mxu0 %v3684
    %3780 = vmatpush1.bf16.msra.mxu0 %v3683
    %3781 = vmatprep.subr.bf16.mxu0 %v3686
    %3782 = vmatpush1.bf16.msra.mxu0 %v3685
    %3783 = vmatprep.subr.bf16.mxu0 %v3688
    %3784 = vmatpush1.bf16.msra.mxu0 %v3687
    %3785 = vmatprep.subr.bf16.mxu0 %v3690
    %3786 = vmatpush1.bf16.msra.mxu0 %v3689
    %3787 = vmatprep.subr.bf16.mxu0 %v3692
    %3788 = vmatpush1.bf16.msra.mxu0 %v3691
    %3789 = vmatprep.subr.bf16.mxu0 %v3694
    %3790 = vmatpush1.bf16.msra.mxu0 %v3693
    %3791 = vmatprep.subr.bf16.mxu0 %v3696
    %3792 = vmatpush1.bf16.msra.mxu0 %v3695
    %3793 = vmatprep.subr.bf16.mxu0 %v3698
    %3794 = vmatpush1.bf16.msra.mxu0 %v3697
    %3795 = vmatprep.subr.bf16.mxu0 %v3700
    %3796 = vmatpush1.bf16.msra.mxu0 %v3699
    %3797 = vmatprep.subr.bf16.mxu0 %v3702
    %3798 = vmatpush1.bf16.msra.mxu0 %v3701
    %3799 = vmatprep.subr.bf16.mxu0 %v3704
    %3800 = vmatpush1.bf16.msra.mxu0 %v3703
    %3801 = vmatprep.subr.bf16.mxu0 %v3706
    %3802 = vmatpush1.bf16.msra.mxu0 %v3705
    %3803 = vmatprep.subr.bf16.mxu0 %v3708
    %3804 = vmatpush1.bf16.msra.mxu0 %v3707
    %3805 = vmatprep.subr.bf16.mxu0 %v3710
    %3806 = vmatpush1.bf16.msra.mxu0 %v3709
    %3807 = vmatprep.mubr.bf16.mxu0 %v3473
    %3808 = vmatmul.mubr.bf16.gmra.mrb[0].mxu0 %v3472
    %v3809 = vpop.f32.mrb[0].mxu0
    %v3810 = vadd.f32 %v3528, %v3809
    %v3811 = vpop.f32.mrb[0].mxu0
    %v3812 = vadd.f32 %v3532, %v3811
    %v3813 = vpop.f32.mrb[0].mxu0
    %v3814 = vadd.f32 %v3528, %v3813
    %v3815 = vpop.f32.mrb[0].mxu0
    %v3816 = vadd.f32 %v3532, %v3815
    %3817 = vdwg.mxu0
    %3818 = vmatprep.subr.bf16.mxu0 %v3712
    %3819 = vmatpush1.bf16.msra.mxu0 %v3711
    %3820 = vmatprep.subr.bf16.mxu0 %v3714
    %3821 = vmatpush1.bf16.msra.mxu0 %v3713
    %3822 = vmatprep.subr.bf16.mxu0 %v3716
    %3823 = vmatpush1.bf16.msra.mxu0 %v3715
    %3824 = vmatprep.subr.bf16.mxu0 %v3718
    %3825 = vmatpush1.bf16.msra.mxu0 %v3717
    %3826 = vmatprep.subr.bf16.mxu0 %v3720
    %3827 = vmatpush1.bf16.msra.mxu0 %v3719
    %3828 = vmatprep.subr.bf16.mxu0 %v3722
    %3829 = vmatpush1.bf16.msra.mxu0 %v3721
    %3830 = vmatprep.subr.bf16.mxu0 %v3724
    %3831 = vmatpush1.bf16.msra.mxu0 %v3723
    %3832 = vmatprep.subr.bf16.mxu0 %v3726
    %3833 = vmatpush1.bf16.msra.mxu0 %v3725
    %3834 = vmatprep.subr.bf16.mxu0 0
    %3835 = vmatpush1.bf16.msra.mxu0 0
    %3836 = vmatprep.subr.bf16.mxu0 0
    %3837 = vmatpush1.bf16.msra.mxu0 0
    %3838 = vmatprep.subr.bf16.mxu0 0
    %3839 = vmatpush1.bf16.msra.mxu0 0
    %3840 = vmatprep.subr.bf16.mxu0 0
    %3841 = vmatpush1.bf16.msra.mxu0 0
    %3842 = vmatprep.subr.bf16.mxu0 0
    %3843 = vmatpush1.bf16.msra.mxu0 0
    %3844 = vmatprep.subr.bf16.mxu0 0
    %3845 = vmatpush1.bf16.msra.mxu0 0
    %3846 = vmatprep.subr.bf16.mxu0 0
    %3847 = vmatpush1.bf16.msra.mxu0 0
    %3848 = vmatprep.subr.bf16.mxu0 0
    %3849 = vmatpush1.bf16.msra.mxu0 0
    %3850 = vmatprep.mubr.bf16.mxu0 0
    %3851 = vmatmul.mubr.bf16.gmra.mrb[0].mxu0 %v3474
    %v3852 = vpop.f32.mrb[0].mxu0
    %v3853 = vadd.f32 %v3810, %v3852
    %v3854 = vpop.f32.mrb[0].mxu0
    %v3855 = vadd.f32 %v3812, %v3854
    %v3856 = vpop.f32.mrb[0].mxu0
    %v3857 = vadd.f32 %v3814, %v3856
    %v3858 = vpop.f32.mrb[0].mxu0
    %v3859 = vadd.f32 %v3816, %v3858
    %3860 = vdwg.mxu0
    %v3861 = vmax.f32 %v3853, 0.0
    %v3862 = vmax.f32 %v3855, 0.0
    %v3863 = vmax.f32 %v3857, 0.0
    %v3864 = vmax.f32 %v3859, 0.0
    %v3865 = vpack.c.bf16 %v3863, %v3861
    %v3866 = vpack.c.bf16 %v3864, %v3862
    %v3867 = vld [vmem:[%s7] sm:$0xf]
    %v3868 = vld [vmem:[%s7 + $0x4] sm:$0xf]
    %v3869 = vld [vmem:[%s7 + $0x8] sm:$0xf]
    %v3870 = vld [vmem:[%s7 + $0xc] sm:$0xf]
    %v3871 = vld [vmem:[%s7 + $0x10] sm:$0xf]
    %v3872 = vld [vmem:[%s7 + $0x14] sm:$0xf]
    %v3873 = vld [vmem:[%s7 + $0x18] sm:$0xf]
    %v3874 = vld [vmem:[%s7 + $0x1c] sm:$0xf]
    %v3875 = vld [vmem:[%s7 + $0x20] sm:$0xf]
    %v3876 = vld [vmem:[%s7 + $0x24] sm:$0xf]
    %v3877 = vld [vmem:[%s7 + $0x28] sm:$0xf]
    %v3878 = vld [vmem:[%s7 + $0x2c] sm:$0xf]
    %v3879 = vld [vmem:[%s7 + $0x30] sm:$0xf]
    %v3880 = vld [vmem:[%s7 + $0x34] sm:$0xf]
    %v3881 = vld [vmem:[%s7 + $0x38] sm:$0xf]
    %v3882 = vld [vmem:[%s7 + $0x3c] sm:$0xf]
    %v3883 = vld [vmem:[%s7 + $0x40] sm:$0xf]
    %v3884 = vld [vmem:[%s7 + $0x44] sm:$0xf]
    %v3885 = vld [vmem:[%s7 + $0x48] sm:$0xf]
    %v3886 = vld [vmem:[%s7 + $0x4c] sm:$0xf]
    %v3887 = vld [vmem:[%s7 + $0x50] sm:$0xf]
    %v3888 = vld [vmem:[%s7 + $0x54] sm:$0xf]
    %v3889 = vld [vmem:[%s7 + $0x58] sm:$0xf]
    %v3890 = vld [vmem:[%s7 + $0x5c] sm:$0xf]
    %v3891 = vld [vmem:[%s7 + $0x60] sm:$0xf]
    %v3892 = vld [vmem:[%s7 + $0x64] sm:$0xf]
    %v3893 = vld [vmem:[%s7 + $0x68] sm:$0xf]
    %v3894 = vld [vmem:[%s7 + $0x6c] sm:$0xf]
    %v3895 = vld [vmem:[%s7 + $0x70] sm:$0xf]
    %v3896 = vld [vmem:[%s7 + $0x74] sm:$0xf]
    %v3897 = vld [vmem:[%s7 + $0x78] sm:$0xf]
    %v3898 = vld [vmem:[%s7 + $0x7c] sm:$0xf]
    %v3899 = vld [vmem:[%s8] sm:$0x1]
    %v3901 = vlaneseq
    %v3902 = vshrl.u32 %v3901, 7
    %v3903 = vsub.s32 0, %v3902
    %v3904 = vrot.slane %v3899, %v3903
    %v3938 = vunpack.c.l.b16 %v3867
    %v3939 = vunpack.c.l.b16 %v3868
    %v3940 = vunpack.c.l.b16 %v3869
    %v3941 = vunpack.c.l.b16 %v3870
    %v3942 = vunpack.c.l.b16 %v3871
    %v3943 = vunpack.c.l.b16 %v3872
    %v3944 = vunpack.c.l.b16 %v3873
    %v3945 = vunpack.c.l.b16 %v3874
    %v3946 = vunpack.c.l.b16 %v3875
    %v3947 = vunpack.c.l.b16 %v3876
    %v3948 = vunpack.c.l.b16 %v3877
    %v3949 = vunpack.c.l.b16 %v3878
    %v3950 = vunpack.c.l.b16 %v3879
    %v3951 = vunpack.c.l.b16 %v3880
    %v3952 = vunpack.c.l.b16 %v3881
    %v3953 = vunpack.c.l.b16 %v3882
    %v3954 = vunpack.c.l.b16 %v3883
    %v3955 = vunpack.c.l.b16 %v3884
    %v3956 = vunpack.c.l.b16 %v3885
    %v3957 = vunpack.c.l.b16 %v3886
    %v3958 = vunpack.c.l.b16 %v3887
    %v3959 = vunpack.c.l.b16 %v3888
    %v3960 = vunpack.c.l.b16 %v3889
    %v3961 = vunpack.c.l.b16 %v3890
    %v3962 = vunpack.c.l.b16 %v3891
    %v3963 = vunpack.c.l.b16 %v3892
    %v3964 = vunpack.c.l.b16 %v3893
    %v3965 = vunpack.c.l.b16 %v3894
    %v3966 = vunpack.c.l.b16 %v3895
    %v3967 = vunpack.c.l.b16 %v3896
    %v3968 = vunpack.c.l.b16 %v3897
    %v3969 = vunpack.c.l.b16 %v3898
    %v3970 = vpack.c.b16 %v3939, %v3938
    %v3971 = vpack.c.b16 %v3941, %v3940
    %v3972 = vpack.c.b16 %v3943, %v3942
    %v3973 = vpack.c.b16 %v3945, %v3944
    %v3974 = vpack.c.b16 %v3947, %v3946
    %v3975 = vpack.c.b16 %v3949, %v3948
    %v3976 = vpack.c.b16 %v3951, %v3950
    %v3977 = vpack.c.b16 %v3953, %v3952
    %v3978 = vpack.c.b16 %v3955, %v3954
    %v3979 = vpack.c.b16 %v3957, %v3956
    %v3980 = vpack.c.b16 %v3959, %v3958
    %v3981 = vpack.c.b16 %v3961, %v3960
    %v3982 = vpack.c.b16 %v3963, %v3962
    %v3983 = vpack.c.b16 %v3965, %v3964
    %v3984 = vpack.c.b16 %v3967, %v3966
    %v3985 = vpack.c.b16 %v3969, %v3968
    %4002 = vmatprep.subr.bf16.mxu0 0
    %4003 = vmatpush1.bf16.msra.mxu0 %v3970
    %4004 = vmatprep.subr.bf16.mxu0 0
    %4005 = vmatpush1.bf16.msra.mxu0 %v3971
    %4006 = vmatprep.subr.bf16.mxu0 0
    %4007 = vmatpush1.bf16.msra.mxu0 %v3972
    %4008 = vmatprep.subr.bf16.mxu0 0
    %4009 = vmatpush1.bf16.msra.mxu0 %v3973
    %4010 = vmatprep.subr.bf16.mxu0 0
    %4011 = vmatpush1.bf16.msra.mxu0 %v3974
    %4012 = vmatprep.subr.bf16.mxu0 0
    %4013 = vmatpush1.bf16.msra.mxu0 %v3975
    %4014 = vmatprep.subr.bf16.mxu0 0
    %4015 = vmatpush1.bf16.msra.mxu0 %v3976
    %4016 = vmatprep.subr.bf16.mxu0 0
    %4017 = vmatpush1.bf16.msra.mxu0 %v3977
    %4018 = vmatprep.subr.bf16.mxu0 0
    %4019 = vmatpush1.bf16.msra.mxu0 %v3978
    %4020 = vmatprep.subr.bf16.mxu0 0
    %4021 = vmatpush1.bf16.msra.mxu0 %v3979
    %4022 = vmatprep.subr.bf16.mxu0 0
    %4023 = vmatpush1.bf16.msra.mxu0 %v3980
    %4024 = vmatprep.subr.bf16.mxu0 0
    %4025 = vmatpush1.bf16.msra.mxu0 %v3981
    %4026 = vmatprep.subr.bf16.mxu0 0
    %4027 = vmatpush1.bf16.msra.mxu0 %v3982
    %4028 = vmatprep.subr.bf16.mxu0 0
    %4029 = vmatpush1.bf16.msra.mxu0 %v3983
    %4030 = vmatprep.subr.bf16.mxu0 0
    %4031 = vmatpush1.bf16.msra.mxu0 %v3984
    %4032 = vmatprep.subr.bf16.mxu0 0
    %4033 = vmatpush1.bf16.msra.mxu0 %v3985
    %4034 = vmatprep.mubr.bf16.mxu0 %v3866
    %4035 = vmatmul.mubr.bf16.gmra.mrb[0].mxu0 %v3865
    %v4036 = vpop.f32.mrb[0].mxu0
    %v4037 = vadd.f32 %v3904, %v4036
    %v4038 = vpop.f32.mrb[0].mxu0
    %v4039 = vpop.f32.mrb[0].mxu0
    %v4040 = vadd.f32 %v3904, %v4039
    %v4041 = vpop.f32.mrb[0].mxu0
    %4042 = vdwg.mxu0
    %v4043 = vmax.f32 %v4037, 0.0
    %v4044 = vmax.f32 %v4040, 0.0
    %v4045 = vpack.c.bf16 %v4044, %v4043
    %v4046 = vld [vmem:[%s9] sm:$0xf]
    %v4047 = vld [vmem:[%s9 + $0x4] sm:$0xf]
    %v4048 = vld [vmem:[%s9 + $0x8] sm:$0xf]
    %v4049 = vld [vmem:[%s9 + $0xc] sm:$0xf]
    %v4050 = vld [vmem:[%s9 + $0x10] sm:$0xf]
    %v4051 = vld [vmem:[%s9 + $0x14] sm:$0xf]
    %v4052 = vld [vmem:[%s9 + $0x18] sm:$0xf]
    %v4053 = vld [vmem:[%s9 + $0x1c] sm:$0xf]
    %v4054 = vld [vmem:[%s9 + $0x20] sm:$0xf]
    %v4055 = vld [vmem:[%s9 + $0x24] sm:$0xf]
    %v4056 = vld [vmem:[%s9 + $0x28] sm:$0xf]
    %v4057 = vld [vmem:[%s9 + $0x2c] sm:$0xf]
    %v4058 = vld [vmem:[%s9 + $0x30] sm:$0xf]
    %v4059 = vld [vmem:[%s9 + $0x34] sm:$0xf]
    %v4060 = vld [vmem:[%s9 + $0x38] sm:$0xf]
    %v4061 = vld [vmem:[%s9 + $0x3c] sm:$0xf]
    %v4062 = vld [vmem:[%s10] sm:$0x1]
    %v4064 = vlaneseq
    %v4065 = vshrl.u32 %v4064, 7
    %v4066 = vsub.s32 0, %v4065
    %v4067 = vrot.slane %v4062, %v4066
    %v4085 = vunpack.c.l.b16 %v4046
    %v4086 = vunpack.c.l.b16 %v4047
    %v4087 = vunpack.c.l.b16 %v4048
    %v4088 = vunpack.c.l.b16 %v4049
    %v4089 = vunpack.c.l.b16 %v4050
    %v4090 = vunpack.c.l.b16 %v4051
    %v4091 = vunpack.c.l.b16 %v4052
    %v4092 = vunpack.c.l.b16 %v4053
    %v4093 = vunpack.c.l.b16 %v4054
    %v4094 = vunpack.c.l.b16 %v4055
    %v4095 = vunpack.c.l.b16 %v4056
    %v4096 = vunpack.c.l.b16 %v4057
    %v4097 = vunpack.c.l.b16 %v4058
    %v4098 = vunpack.c.l.b16 %v4059
    %v4099 = vunpack.c.l.b16 %v4060
    %v4100 = vunpack.c.l.b16 %v4061
    %v4101 = vpack.c.b16 %v4086, %v4085
    %v4102 = vpack.c.b16 %v4088, %v4087
    %v4103 = vpack.c.b16 %v4090, %v4089
    %v4104 = vpack.c.b16 %v4092, %v4091
    %v4105 = vpack.c.b16 %v4094, %v4093
    %v4106 = vpack.c.b16 %v4096, %v4095
    %v4107 = vpack.c.b16 %v4098, %v4097
    %v4108 = vpack.c.b16 %v4100, %v4099
    %4117 = vmatprep.subr.bf16.mxu0 0
    %4118 = vmatpush1.bf16.msra.mxu0 %v4101
    %4119 = vmatprep.subr.bf16.mxu0 0
    %4120 = vmatpush1.bf16.msra.mxu0 %v4102
    %4121 = vmatprep.subr.bf16.mxu0 0
    %4122 = vmatpush1.bf16.msra.mxu0 %v4103
    %4123 = vmatprep.subr.bf16.mxu0 0
    %4124 = vmatpush1.bf16.msra.mxu0 %v4104
    %4125 = vmatprep.subr.bf16.mxu0 0
    %4126 = vmatpush1.bf16.msra.mxu0 %v4105
    %4127 = vmatprep.subr.bf16.mxu0 0
    %4128 = vmatpush1.bf16.msra.mxu0 %v4106
    %4129 = vmatprep.subr.bf16.mxu0 0
    %4130 = vmatpush1.bf16.msra.mxu0 %v4107
    %4131 = vmatprep.subr.bf16.mxu0 0
    %4132 = vmatpush1.bf16.msra.mxu0 %v4108
    %4133 = vmatprep.subr.bf16.mxu0 0
    %4134 = vmatpush1.bf16.msra.mxu0 0
    %4135 = vmatprep.subr.bf16.mxu0 0
    %4136 = vmatpush1.bf16.msra.mxu0 0
    %4137 = vmatprep.subr.bf16.mxu0 0
    %4138 = vmatpush1.bf16.msra.mxu0 0
    %4139 = vmatprep.subr.bf16.mxu0 0
    %4140 = vmatpush1.bf16.msra.mxu0 0
    %4141 = vmatprep.subr.bf16.mxu0 0
    %4142 = vmatpush1.bf16.msra.mxu0 0
    %4143 = vmatprep.subr.bf16.mxu0 0
    %4144 = vmatpush1.bf16.msra.mxu0 0
    %4145 = vmatprep.subr.bf16.mxu0 0
    %4146 = vmatpush1.bf16.msra.mxu0 0
    %4147 = vmatprep.subr.bf16.mxu0 0
    %4148 = vmatpush1.bf16.msra.mxu0 0
    %4149 = vmatprep.mubr.bf16.mxu0 0
    %4150 = vmatmul.mubr.bf16.gmra.mrb[0].mxu0 %v4045
    %v4151 = vpop.f32.mrb[0].mxu0
    %v4152 = vadd.f32 %v4067, %v4151
    %v4153 = vpop.f32.mrb[0].mxu0
    %v4154 = vpop.f32.mrb[0].mxu0
    %v4155 = vadd.f32 %v4067, %v4154
    %v4156 = vpop.f32.mrb[0].mxu0
    %4157 = vdwg.mxu0
    %v4158 = vpack.c.bf16 %v4155, %v4152
    %v4160 = vcombine.high %v4158, %v4158
    %v4162 = vunpack.c.l.s4 1966171168
    %v4163 = vunpack.c.0.s8 %v4162
    %v4164 = vlaneseq
    %v4165 = vshrl.u32 %v4164, 7
    %v4166 = vsub.s32 %v4163, %v4165
    %v4167 = vrot.slane %v4158, %v4166
    %v4169 = vunpack.c.l.s4 1966171168
    %v4170 = vunpack.c.0.s8 %v4169
    %v4171 = vlaneseq
    %v4172 = vshrl.u32 %v4171, 7
    %v4173 = vsub.s32 %v4170, %v4172
    %v4174 = vrot.slane %v4160, %v4173
    %v4175 = vcombine.high %v4167, %v4167
    %v4176 = vcombine.high %v4174, %v4174
    %v4178 = vunpack.c.l.s4 1966171168
    %v4179 = vunpack.c.0.s8 %v4178
    %v4180 = vlaneseq
    %v4181 = vshrl.u32 %v4180, 7
    %v4182 = vsub.s32 %v4179, %v4181
    %v4183 = vrot.slane %v4167, %v4182
    %v4185 = vunpack.c.l.s4 1966171168
    %v4186 = vunpack.c.0.s8 %v4185
    %v4187 = vlaneseq
    %v4188 = vshrl.u32 %v4187, 7
    %v4189 = vsub.s32 %v4186, %v4188
    %v4190 = vrot.slane %v4174, %v4189
    %v4192 = vunpack.c.l.s4 1966171168
    %v4193 = vunpack.c.0.s8 %v4192
    %v4194 = vlaneseq
    %v4195 = vshrl.u32 %v4194, 7
    %v4196 = vsub.s32 %v4193, %v4195
    %v4197 = vrot.slane %v4175, %v4196
    %v4199 = vunpack.c.l.s4 1966171168
    %v4200 = vunpack.c.0.s8 %v4199
    %v4201 = vlaneseq
    %v4202 = vshrl.u32 %v4201, 7
    %v4203 = vsub.s32 %v4200, %v4202
    %v4204 = vrot.slane %v4176, %v4203
    %v4205 = vcombine.high %v4183, %v4183
    %v4206 = vcombine.high %v4190, %v4190
    %v4207 = vcombine.high %v4197, %v4197
    %v4208 = vcombine.high %v4204, %v4204
    %4217 = vst [vmem:[#allocation7] sm:$0x1] %v4183
    %4218 = vst [vmem:[#allocation7 + $0x1] sm:$0x1] %v4197
    %4219 = vst [vmem:[#allocation7 + $0x2] sm:$0x1] %v4205
    %4220 = vst [vmem:[#allocation7 + $0x3] sm:$0x1] %v4207
    %4221 = vst [vmem:[#allocation7 + $0x4] sm:$0x1] %v4190
    %4222 = vst [vmem:[#allocation7 + $0x5] sm:$0x1] %v4204
    %4223 = vst [vmem:[#allocation7 + $0x6] sm:$0x1] %v4206
    %4224 = vst [vmem:[#allocation7 + $0x7] sm:$0x1] %v4208
    // Predicated region
    $region58: #{mlp_forward.1} parent=1 // pred_check
      _
    $region59: #{mlp_forward.1} parent=1 // pred_check_branch
      %4226 = sbr.rel (0) target = $region61
    $region60: #{mlp_forward.1} parent=1 // pred_region
      // Predicated region
      $region62: #{mlp_forward.1} parent=60 // pred_check
        _
      $region63: #{mlp_forward.1} parent=60 // pred_check_branch
        %4228 = sbr.rel (0) target = $region65
      $region64: #{mlp_forward.1} parent=60 // pred_region
        // Predicated region
        $region66: #{mlp_forward.1} parent=64 // pred_check
          _
        $region67: #{mlp_forward.1} parent=64 // pred_check_branch
          %4230 = sbr.rel target = $region69
        $region68: #{mlp_forward.1} parent=64 // pred_region
          // Predicated region
          $region81: #{mlp_forward.1} parent=68 // pred_check
            _
          $region82: #{mlp_forward.1} parent=68 // pred_check_branch
            %4245 = sbr.rel (0) target = $region84
          $region83: #{mlp_forward.1} parent=68 // pred_region
            loop: start=0, step=1, limit=1
            $region85: #{mlp_forward.1} parent=83 // loop_pre_header
              _
            $region86: #{mlp_forward.1} parent=83 // loop_header
              %s4248 = sphi 0, %s4252
              %p4249 = scmp.ge.s32.totalorder %s4248, 1
              %s4253 = sphi [#allocation7], [#allocation7]
              %s4254 = sphi %s11, %s11
            $region87: #{mlp_forward.1} parent=83 // loop_header_branch
              %4251 = sbr.rel (%p4249) target = $region91
            $region88: #{mlp_forward.1} parent=83 // loop_body
              %v4255 = vld [vmem:[%s4253] sm:$0x1]
              %4256 = vst [vmem:[%s4254] sm:$0x1] %v4255
            $region89: #{mlp_forward.1} parent=83 // loop_footer
              %s4252 = sadd.s32 1, %s4248
            $region90: #{mlp_forward.1} parent=83 // loop_footer_branch
              %4247 = sbr.rel target = $region86
            $region91: #{mlp_forward.1} parent=83 // loop_exit
              _
          $region84: #{mlp_forward.1} parent=68 // pred_fallthru
            _
        $region69: #{mlp_forward.1} parent=64 // pred_fallthru
          _
        // Predicated region
        $region70: #{mlp_forward.1} parent=64 // pred_check
          _
        $region71: #{mlp_forward.1} parent=64 // pred_check_branch
          %4232 = sbr.rel (0) target = $region73
        $region72: #{mlp_forward.1} parent=64 // pred_region
          loop: start=0, step=1, limit=1
          $region74: #{mlp_forward.1} parent=72 // loop_pre_header
            _
          $region75: #{mlp_forward.1} parent=72 // loop_header
            %s4235 = sphi 0, %s4239
            %p4236 = scmp.ge.s32.totalorder %s4235, 1
            %s4240 = sphi [#allocation7], [#allocation7]
            %s4241 = sphi %s11, %s11
          $region76: #{mlp_forward.1} parent=72 // loop_header_branch
            %4238 = sbr.rel (%p4236) target = $region80
          $region77: #{mlp_forward.1} parent=72 // loop_body
            %v4242 = vld [vmem:[%s4240] sm:$0x1]
            %4243 = vst [vmem:[%s4241] sm:$0x1] %v4242
          $region78: #{mlp_forward.1} parent=72 // loop_footer
            %s4239 = sadd.s32 1, %s4235
          $region79: #{mlp_forward.1} parent=72 // loop_footer_branch
            %4234 = sbr.rel target = $region75
          $region80: #{mlp_forward.1} parent=72 // loop_exit
            _
        $region73: #{mlp_forward.1} parent=64 // pred_fallthru
          _
      $region65: #{mlp_forward.1} parent=60 // pred_fallthru
        _
      %4257 = vnop
    $region61: #{mlp_forward.1} parent=1 // pred_fallthru
      _
    // Predicated region
    $region92: #{mlp_forward.1} parent=1 // pred_check
      _
    $region93: #{mlp_forward.1} parent=1 // pred_check_branch
      %4259 = sbr.rel (0) target = $region95
    $region94: #{mlp_forward.1} parent=1 // pred_region
      _
    $region95: #{mlp_forward.1} parent=1 // pred_fallthru
      _
    %4260 = vsyncpa [#allocation3], 1
    %4261 = vsyncpa [#allocation5], 1

</llo_original>
